<compile_context>
chip_gen: v6e
topology: v6e:2x2x1
jax: 0.10.0
libtpu: 0.0.40
codegen_flags: <defaults>
</compile_context>

<pallas_src>
import jax
import jax.numpy as jnp
from jax import lax
from jax.experimental import pallas as pl
from jax.experimental.pallas import tpu as pltpu

EPS = 1e-5
LANE = 128
KW_FOLD_MAX_CIN = 32            # fold the 3 kw taps into K when Cin is small
ACC_BYTES_BUDGET = 128 * 1024   # keep the f32 accumulator ~<= half the vreg file
VMEM_SOFT_LIMIT = 48 * 1024 * 1024


def _round_up(x, m):
    return (x + m - 1) // m * m


def _fold_bn(gamma, beta, mean, var):
    scale = gamma / jnp.sqrt(var + EPS)
    shift = beta - mean * scale
    return scale, shift


# ------------------------------ Pallas kernel -------------------------------

def _make_conv_kernel(stride, tap_kd, tap_off, row_stride, h_out, h_tile,
                      coutp, res_mode):
    """Fused 3x3x3 conv (flat-GEMM form) + BN shift (+ residual) + ReLU.

    One grid step (n, d_out) computes the whole flattened output slab
    (M_out = h_out*row_stride rows x coutp lanes).  Each tap is one MXU dot of
    a contiguous (m, K) row slab of the flattened input plane against its
    (K, coutp) weight matrix; no im2col, no in-kernel reshapes.
    """
    n_taps = len(tap_off)

    def kernel(x_ref, w_ref, shift_ref, *rest):
        # x_ref:     (1, Dp, P, K)      bf16   flattened, halo/phase-packed
        # w_ref:     (n_taps, K, Coutp) bf16   BN scale pre-folded
        # shift_ref: (1, Coutp)         f32    conv-BN (+ shortcut-BN) shift
        # residual (optional):
        #   identity: r_ref (1, 1, M_out, Coutp) f32
        #   proj:     r_ref (1, 1, M_out, Cres) bf16, rw_ref (Cres, Coutp) bf16
        # o_ref:     (1, 1, M_out, Coutp)
        if res_mode == "none":
            (o_ref,) = rest
        elif res_mode == "identity":
            r_ref, o_ref = rest
        else:  # "proj"
            r_ref, rw_ref, o_ref = rest

        d0 = pl.program_id(1) * stride

        # Row-tile loop (usually a single tile) bounds the accumulator size so
        # it stays in vregs instead of spilling to VMEM.
        t0 = 0
        while t0 < h_out:
            ht = min(h_tile, h_out - t0)
            m = ht * row_stride
            r0 = t0 * row_stride
            # BN shift seeds the accumulator -> no separate broadcast-adds.
            acc = jnp.broadcast_to(shift_ref[...], (m, coutp))
            for t in range(n_taps):
                a = x_ref[0, d0 + tap_kd[t], pl.ds(tap_off[t] + r0, m), :]
                acc = acc + jnp.dot(a, w_ref[t],
                                    preferred_element_type=jnp.float32)
            if res_mode == "identity":
                acc = acc + r_ref[0, 0, pl.ds(r0, m), :]
            elif res_mode == "proj":
                acc = acc + jnp.dot(r_ref[0, 0, pl.ds(r0, m), :], rw_ref[...],
                                    preferred_element_type=jnp.float32)
            o_ref[0, 0, pl.ds(r0, m), :] = (
                jnp.maximum(acc, 0.0).astype(o_ref.dtype))
            t0 += h_tile

    return kernel


# ------------------------------ fused conv op -------------------------------

def conv3x3x3_bn_relu(x, w, scale, shift, stride, residual=None,
                      out_dtype=jnp.float32):
    """relu( conv3x3x3(x; stride, pad=1) * scale + shift  [+ shortcut] ).

    x:  (N, D, H, W, Cin)    activations (cast to bf16 inside)
    w:  (Cout, Cin, 3, 3, 3) PyTorch-layout conv weight (bias-free)
    scale, shift: (Cout,)    folded BatchNorm (shift may already include the
                             shortcut-BN shift)
    residual: None
              | ("identity", rx)   rx: (N,Do,Ho,Wo,Cout) added directly (f32)
              | ("proj", rx, rw)   rx: (N,Do,Ho,Wo,Cres), rw: (Cres, Cout)
    Returns (N, Do, Ho, Wo, Coutp), Coutp = round_up(Cout, 128); channels
    >= Cout are exactly zero.
    """
    n, d, h, wdim, cin = x.shape
    cout = w.shape[0]
    assert w.shape[1] == cin and w.shape[2:] == (3, 3, 3)
    coutp = _round_up(cout, LANE)
    s = stride
    d_out = (d - 1) // s + 1
    h_out = (h - 1) // s + 1
    w_out = (wdim - 1) // s + 1

    fold_kw = (cin <= KW_FOLD_MAX_CIN) or (s > 1)

    # ---- weights: fold BN scale into columns, pad out-channels, bf16 -------
    wt = jnp.transpose(w, (2, 3, 4, 1, 0)).astype(jnp.float32)  # (3,3,3,Cin,Cout)
    wt = wt * scale[None, None, None, None, :]
    wt = jnp.pad(wt, ((0, 0),) * 4 + ((0, coutp - cout),))
    sh = jnp.pad(shift.astype(jnp.float32), (0, coutp - cout)).reshape(1, coutp)

    # ---- input: halo pad (pad=1), bf16, relayout to a flat-GEMM layout -----
    xb = jnp.pad(x.astype(jnp.bfloat16),
                 ((0, 0), (1, 1), (1, 1), (1, 1), (0, 0)))
    dp, hp, wp = d + 2, h + 2, wdim + 2

    if fold_kw:
        # Enlarge K: fold the 3 kw taps into the contraction axis (K = 3*Cin,
        # 9 taps) and phase-pack H so strided taps become contiguous rows.
        hq = pl.cdiv(hp, s)
        for kh in range(3):
            assert kh // s + h_out <= hq        # phase-pack bound (k=3, pad=1)
        if s > 1:
            xb = jnp.pad(xb, ((0, 0), (0, 0), (0, s * hq - hp), (0, 0), (0, 0)))
            xb = xb.reshape(n, dp, hq, s, wp, cin).transpose(0, 1, 3, 2, 4, 5)
            xb = xb.reshape(n, dp, s * hq, wp, cin)
        hpk = s * hq
        assert (w_out - 1) * s + 2 <= wp - 1    # kw-unfold bound
        xb = jnp.concatenate(
            [xb[:, :, :, kw:kw + (w_out - 1) * s + 1:s, :] for kw in range(3)],
            axis=-1)                            # (N, Dp, Hpk, Wo, 3*Cin)
        kdim = 3 * cin
        row_stride = w_out
        p_rows = hpk * w_out
        x_in = xb.reshape(n, dp, p_rows, kdim)
        wm = wt.reshape(9, kdim, coutp).astype(jnp.bfloat16)
        tap_kd = [t // 3 for t in range(9)]
        tap_off = [(((t % 3) % s) * hq + (t % 3) // s) * w_out
                   for t in range(9)]
    else:
        # Large Cin, stride 1: flatten (H, W) of the halo-padded plane; every
        # tap is a contiguous (M, Cin) row slab offset by kh*wp + kw.  The two
        # wrap-around "junk" columns per H row are computed and sliced away.
        assert s == 1
        xb = jnp.pad(xb, ((0, 0), (0, 0), (0, 1), (0, 0), (0, 0)))  # overrun row
        kdim = cin
        row_stride = wp
        p_rows = (hp + 1) * wp
        x_in = xb.reshape(n, dp, p_rows, kdim)
        wm = wt.reshape(27, kdim, coutp).astype(jnp.bfloat16)
        tap_kd = [t // 9 for t in range(27)]
        tap_off = [((t // 3) % 3) * wp + (t % 3) for t in range(27)]
        assert max(tap_off) + h_out * row_stride <= p_rows

    m_out = h_out * row_stride

    in_specs = [
        pl.BlockSpec((1, dp, p_rows, kdim), lambda i, j: (i, 0, 0, 0)),
        pl.BlockSpec(wm.shape, lambda i, j: (0, 0, 0)),
        pl.BlockSpec((1, coutp), lambda i, j: (0, 0)),
    ]
    args = [x_in, wm, sh]

    res_mode = "none" if residual is None else residual[0]
    cres = 0
    # Cost estimate with the TRUE cout (no padded/junk/identity-eye FLOPs).
    flops = 2 * n * d_out * h_out * w_out * 27 * cin * cout
    bytes_accessed = (x_in.size * 2 + wm.size * 2 + sh.size * 4 +
                      n * d_out * m_out * coutp * jnp.dtype(out_dtype).itemsize)

    if res_mode != "none":
        rx = residual[1]
        assert rx.shape[:4] == (n, d_out, h_out, w_out)
        cres = rx.shape[-1]
        if row_stride != w_out:     # lay rx out in the kernel's row space
            rx = jnp.pad(rx, ((0, 0),) * 3 + ((0, row_stride - w_out), (0, 0)))
        if res_mode == "identity":
            # Direct f32 add: no eye-GEMM, no extra rounding on the skip path.
            assert cres == cout
            rxf = jnp.pad(rx.astype(jnp.float32),
                          ((0, 0),) * 4 + ((0, coutp - cres),))
            rxf = rxf.reshape(n, d_out, m_out, coutp)
            in_specs.append(pl.BlockSpec((1, 1, m_out, coutp),
                                         lambda i, j: (i, j, 0, 0)))
            args.append(rxf)
            flops += n * d_out * h_out * w_out * cout
            bytes_accessed += rxf.size * 4
        else:  # "proj": fused 1x1-conv shortcut (BN scale already in rw)
            rw = residual[2]
            rxb = rx.astype(jnp.bfloat16).reshape(n, d_out, m_out, cres)
            rwp = jnp.pad(rw.astype(jnp.float32),
                          ((0, 0), (0, coutp - cout))).astype(jnp.bfloat16)
            in_specs += [pl.BlockSpec((1, 1, m_out, cres),
                                      lambda i, j: (i, j, 0, 0)),
                         pl.BlockSpec((cres, coutp), lambda i, j: (0, 0))]
            args += [rxb, rwp]
            flops += 2 * n * d_out * h_out * w_out * cres * cout
            bytes_accessed += rxb.size * 2 + rwp.size * 2

    # Row tile so the f32 accumulator stays comfortably inside the vreg file.
    acc_rows = max(1, ACC_BYTES_BUDGET // (4 * coutp))
    h_tile = max(1, min(h_out, acc_rows // row_stride))

    # Static VMEM budget check (all operands double-buffered by the pipeline).
    blk_bytes = (dp * p_rows * kdim * 2 + wm.size * 2 + coutp * 4 +
                 m_out * coutp * jnp.dtype(out_dtype).itemsize)
    if res_mode == "identity":
        blk_bytes += m_out * coutp * 4
    elif res_mode == "proj":
        blk_bytes += m_out * cres * 2 + cres * coutp * 2
    vmem_need = 2 * blk_bytes
    assert vmem_need <= VMEM_SOFT_LIMIT, (
        f"per-step VMEM {vmem_need / 2**20:.1f} MiB exceeds budget; "
        "depth-tile the input block (see TODO)")
    vmem_limit = int(min(64 * 1024 * 1024,
                         max(32 * 1024 * 1024, 2 * vmem_need)))

    kernel = _make_conv_kernel(s, tap_kd, tap_off, row_stride, h_out, h_tile,
                               coutp, res_mode)

    out = pl.pallas_call(
        kernel,
        out_shape=jax.ShapeDtypeStruct((n, d_out, m_out, coutp), out_dtype),
        grid=(n, d_out),
        in_specs=in_specs,
        out_specs=pl.BlockSpec((1, 1, m_out, coutp), lambda i, j: (i, j, 0, 0)),
        compiler_params=pltpu.CompilerParams(
            dimension_semantics=("parallel", "parallel"),
            vmem_limit_bytes=vmem_limit),
        cost_estimate=pl.CostEstimate(flops=int(flops), transcendentals=0,
                                      bytes_accessed=int(bytes_accessed)),
    )(*args)

    out = out.reshape(n, d_out, h_out, row_stride, coutp)
    if row_stride != w_out:
        out = out[:, :, :, :w_out, :]           # drop flat-path junk columns
    return out


# --------------------------- Basic3DBlock forward ----------------------------

def basic3d_block_forward(x_ncdhw, params, stride):
    n, cin, d, h, w = x_ncdhw.shape
    cout = params["w1"].shape[0]
    # Single relayout to channels-last; the bf16 cast happens inside the conv
    # wrapper (no extra f32 NDHWC materialization of the activation).
    x = jnp.transpose(x_ncdhw, (0, 2, 3, 4, 1))              # NDHWC

    s1, b1 = _fold_bn(*params["bn1"])
    s2, b2 = _fold_bn(*params["bn2"])

    # conv1 + bn1 + relu (fused); lane padding (coutp) kept for conv2.
    h1 = conv3x3x3_bn_relu(x, params["w1"], s1, b1, stride,
                           out_dtype=jnp.bfloat16)           # (N,Do,Ho,Wo,Coutp)
    coutp = h1.shape[-1]

    # Shortcut, fused into conv2's epilogue.
    if stride != 1 or cin != cout:
        ssc, bsc = _fold_bn(*params["bnsc"])
        rx = x[:, ::stride, ::stride, ::stride, :]           # (N,Do,Ho,Wo,Cin)
        rw = params["wsc"].reshape(cout, cin).T * ssc[None, :]
        residual = ("proj", rx, rw)
        shift2 = b2 + bsc        # fold shortcut-BN shift into conv2's shift
    else:
        residual = ("identity", x)                           # f32 direct add
        shift2 = b2

    # conv2 sees coutp input channels (h1's padded channels are exactly zero
    # and w2's padded input rows are zero, so the result is unchanged).
    w2p = jnp.pad(params["w2"],
                  ((0, 0), (0, coutp - cout), (0, 0), (0, 0), (0, 0)))
    out = conv3x3x3_bn_relu(h1, w2p, s2, shift2, 1, residual=residual,
                            out_dtype=jnp.float32)
    out = out[..., :cout]                                    # drop lane padding
    return jnp.transpose(out, (0, 4, 1, 2, 3))               # back to NCDHW


# ---------------------------- pure-JAX reference -----------------------------

def ref_forward(x, params, stride):
    dn = ("NCDHW", "OIDHW", "NCDHW")

    def conv(z, wt, s, pad):
        return lax.conv_general_dilated(
            z, wt, window_strides=(s, s, s), padding=[(pad, pad)] * 3,
            dimension_numbers=dn, precision=lax.Precision.HIGHEST)

    def bn(z, p):
        g, b, m, v = p
        scale = g / jnp.sqrt(v + EPS)
        shift = b - m * scale
        return (z * scale[None, :, None, None, None]
                + shift[None, :, None, None, None])

    out = jax.nn.relu(bn(conv(x, params["w1"], stride, 1), params["bn1"]))
    out = bn(conv(out, params["w2"], 1, 1), params["bn2"])
    cin = x.shape[1]
    cout = params["w1"].shape[0]
    if stride != 1 or cin != cout:
        sc = bn(conv(x, params["wsc"], stride, 0), params["bnsc"])
    else:
        sc = x
    return jax.nn.relu(out + sc)


# ----------------------------------- main ------------------------------------

if __name__ == "__main__":
    key = jax.random.PRNGKey(0)

    def bn_params(k, c):
        k0, k1, k2, k3 = jax.random.split(k, 4)
        gamma = 1.0 + 0.1 * jax.random.normal(k0, (c,), jnp.float32)
        beta = 0.1 * jax.random.normal(k1, (c,), jnp.float32)
        mean = 0.1 * jax.random.normal(k2, (c,), jnp.float32)
        var = jax.random.uniform(k3, (c,), jnp.float32, 0.5, 1.5)
        return (gamma, beta, mean, var)

    def make_params(k, cin, cout):
        ks = jax.random.split(k, 6)
        return {
            "w1": 0.1 * jax.random.normal(ks[0], (cout, cin, 3, 3, 3), jnp.float32),
            "w2": 0.1 * jax.random.normal(ks[1], (cout, cout, 3, 3, 3), jnp.float32),
            "wsc": 0.1 * jax.random.normal(ks[2], (cout, cin, 1, 1, 1), jnp.float32),
            "bn1": bn_params(ks[3], cout),
            "bn2": bn_params(ks[4], cout),
            "bnsc": bn_params(ks[5], cout),
        }

    fwd = jax.jit(basic3d_block_forward, static_argnums=2)

    cases = [
        # (N, Cin, Cout, D, H, W, stride): projection shortcut, strided
        (2, 4, 8, 8, 8, 8, 2),
        # identity shortcut (stride == 1 and Cin == Cout)
        (1, 8, 8, 6, 6, 6, 1),
    ]
    case_keys = jax.random.split(key, len(cases))
    for (nb, cin, cout, dd, hh, ww, stride), kc in zip(cases, case_keys):
        kp, kx = jax.random.split(kc)
        params = make_params(kp, cin, cout)
        x = jax.random.normal(kx, (nb, cin, dd, hh, ww), jnp.float32)

        out = jax.block_until_ready(fwd(x, params, stride))
        ref = jax.block_until_ready(ref_forward(x, params, stride))

        assert out.shape == ref.shape, (out.shape, ref.shape)
        max_err = float(jnp.max(jnp.abs(out - ref)))
        # bf16 GEMM operands (f32 accumulation) -> bf16-level tolerance.
        assert max_err < 5e-2, f"max abs error {max_err}"

    print("KERNEL_OK")
</pallas_src>

<mosaic_0001>
module attributes {stable_mosaic.version = 11 : i64} {
  func.func @kernel(%arg0: i32, %arg1: i32, %arg2: memref<1x10x40x12xbf16, #tpu.memory_space<vmem>>, %arg3: memref<9x12x128xbf16, #tpu.memory_space<vmem>>, %arg4: memref<1x128xf32, #tpu.memory_space<vmem>>, %arg5: memref<1x1x16x128xbf16, #tpu.memory_space<vmem>>) attributes {dimension_semantics = [#tpu.dimension_semantics<parallel>, #tpu.dimension_semantics<parallel>], iteration_bounds = array<i64: 2, 4>, scalar_prefetch = 0 : i64, scratch_operands = 0 : i64, tpu.core_type = #tpu.core_type<tc>, window_params = [{transform_indices = @transform_0, window_bounds = array<i64: 1, 10, 40, 12>}, {pipeline_mode = #tpu.pipeline_mode<synchronous>, transform_indices = @transform_1, window_bounds = array<i64: 9, 12, 128>}, {pipeline_mode = #tpu.pipeline_mode<synchronous>, transform_indices = @transform_2, window_bounds = array<i64: 1, 128>}, {transform_indices = @transform_3, window_bounds = array<i64: 1, 1, 16, 128>}]} {
    %c2_i32 = arith.constant 2 : i32
    %0 = arith.muli %arg1, %c2_i32 : i32
    %c0 = arith.constant 0 : index
    %c0_0 = arith.constant 0 : index
    %1 = vector.load %arg4[%c0, %c0_0] : memref<1x128xf32, #tpu.memory_space<vmem>>, vector<1x128xf32>
    %2 = vector.shape_cast %1 : vector<1x128xf32> to vector<1x128xf32>
    %3 = vector.broadcast %2 : vector<1x128xf32> to vector<16x128xf32>
    %c0_i32 = arith.constant 0 : i32
    %4 = arith.addi %0, %c0_i32 : i32
    %c0_1 = arith.constant 0 : index
    %5 = arith.index_cast %4 : i32 to index
    %c0_2 = arith.constant 0 : index
    %c0_3 = arith.constant 0 : index
    %6 = vector.load %arg2[%c0_1, %5, %c0_2, %c0_3] : memref<1x10x40x12xbf16, #tpu.memory_space<vmem>>, vector<1x1x16x12xbf16>
    %7 = vector.shape_cast %6 : vector<1x1x16x12xbf16> to vector<16x12xbf16>
    %c0_4 = arith.constant 0 : index
    %c0_5 = arith.constant 0 : index
    %c0_6 = arith.constant 0 : index
    %8 = vector.load %arg3[%c0_4, %c0_5, %c0_6] : memref<9x12x128xbf16, #tpu.memory_space<vmem>>, vector<1x12x128xbf16>
    %9 = vector.shape_cast %8 : vector<1x12x128xbf16> to vector<12x128xbf16>
    %cst = arith.constant dense<0.000000e+00> : vector<16x128xf32>
    %10 = tpu.matmul %7, %9, %cst {dimension_numbers = #tpu.dot_dimension_numbers<[1], [0], [0], [1], [0, 0, 1, 1], [], []>} : vector<16x12xbf16>, vector<12x128xbf16>, vector<16x128xf32> -> vector<16x128xf32>
    %11 = arith.addf %3, %10 : vector<16x128xf32>
    %c0_i32_7 = arith.constant 0 : i32
    %12 = arith.addi %0, %c0_i32_7 : i32
    %c0_8 = arith.constant 0 : index
    %13 = arith.index_cast %12 : i32 to index
    %c20 = arith.constant 20 : index
    %c0_9 = arith.constant 0 : index
    %14 = vector.load %arg2[%c0_8, %13, %c20, %c0_9] : memref<1x10x40x12xbf16, #tpu.memory_space<vmem>>, vector<1x1x16x12xbf16>
    %15 = vector.shape_cast %14 : vector<1x1x16x12xbf16> to vector<16x12xbf16>
    %c1 = arith.constant 1 : index
    %c0_10 = arith.constant 0 : index
    %c0_11 = arith.constant 0 : index
    %16 = vector.load %arg3[%c1, %c0_10, %c0_11] : memref<9x12x128xbf16, #tpu.memory_space<vmem>>, vector<1x12x128xbf16>
    %17 = vector.shape_cast %16 : vector<1x12x128xbf16> to vector<12x128xbf16>
    %cst_12 = arith.constant dense<0.000000e+00> : vector<16x128xf32>
    %18 = tpu.matmul %15, %17, %cst_12 {dimension_numbers = #tpu.dot_dimension_numbers<[1], [0], [0], [1], [0, 0, 1, 1], [], []>} : vector<16x12xbf16>, vector<12x128xbf16>, vector<16x128xf32> -> vector<16x128xf32>
    %19 = arith.addf %11, %18 : vector<16x128xf32>
    %c0_i32_13 = arith.constant 0 : i32
    %20 = arith.addi %0, %c0_i32_13 : i32
    %c0_14 = arith.constant 0 : index
    %21 = arith.index_cast %20 : i32 to index
    %c4 = arith.constant 4 : index
    %c0_15 = arith.constant 0 : index
    %22 = vector.load %arg2[%c0_14, %21, %c4, %c0_15] : memref<1x10x40x12xbf16, #tpu.memory_space<vmem>>, vector<1x1x16x12xbf16>
    %23 = vector.shape_cast %22 : vector<1x1x16x12xbf16> to vector<16x12xbf16>
    %c2 = arith.constant 2 : index
    %c0_16 = arith.constant 0 : index
    %c0_17 = arith.constant 0 : index
    %24 = vector.load %arg3[%c2, %c0_16, %c0_17] : memref<9x12x128xbf16, #tpu.memory_space<vmem>>, vector<1x12x128xbf16>
    %25 = vector.shape_cast %24 : vector<1x12x128xbf16> to vector<12x128xbf16>
    %cst_18 = arith.constant dense<0.000000e+00> : vector<16x128xf32>
    %26 = tpu.matmul %23, %25, %cst_18 {dimension_numbers = #tpu.dot_dimension_numbers<[1], [0], [0], [1], [0, 0, 1, 1], [], []>} : vector<16x12xbf16>, vector<12x128xbf16>, vector<16x128xf32> -> vector<16x128xf32>
    %27 = arith.addf %19, %26 : vector<16x128xf32>
    %c1_i32 = arith.constant 1 : i32
    %28 = arith.addi %0, %c1_i32 : i32
    %c0_19 = arith.constant 0 : index
    %29 = arith.index_cast %28 : i32 to index
    %c0_20 = arith.constant 0 : index
    %c0_21 = arith.constant 0 : index
    %30 = vector.load %arg2[%c0_19, %29, %c0_20, %c0_21] : memref<1x10x40x12xbf16, #tpu.memory_space<vmem>>, vector<1x1x16x12xbf16>
    %31 = vector.shape_cast %30 : vector<1x1x16x12xbf16> to vector<16x12xbf16>
    %c3 = arith.constant 3 : index
    %c0_22 = arith.constant 0 : index
    %c0_23 = arith.constant 0 : index
    %32 = vector.load %arg3[%c3, %c0_22, %c0_23] : memref<9x12x128xbf16, #tpu.memory_space<vmem>>, vector<1x12x128xbf16>
    %33 = vector.shape_cast %32 : vector<1x12x128xbf16> to vector<12x128xbf16>
    %cst_24 = arith.constant dense<0.000000e+00> : vector<16x128xf32>
    %34 = tpu.matmul %31, %33, %cst_24 {dimension_numbers = #tpu.dot_dimension_numbers<[1], [0], [0], [1], [0, 0, 1, 1], [], []>} : vector<16x12xbf16>, vector<12x128xbf16>, vector<16x128xf32> -> vector<16x128xf32>
    %35 = arith.addf %27, %34 : vector<16x128xf32>
    %c1_i32_25 = arith.constant 1 : i32
    %36 = arith.addi %0, %c1_i32_25 : i32
    %c0_26 = arith.constant 0 : index
    %37 = arith.index_cast %36 : i32 to index
    %c20_27 = arith.constant 20 : index
    %c0_28 = arith.constant 0 : index
    %38 = vector.load %arg2[%c0_26, %37, %c20_27, %c0_28] : memref<1x10x40x12xbf16, #tpu.memory_space<vmem>>, vector<1x1x16x12xbf16>
    %39 = vector.shape_cast %38 : vector<1x1x16x12xbf16> to vector<16x12xbf16>
    %c4_29 = arith.constant 4 : index
    %c0_30 = arith.constant 0 : index
    %c0_31 = arith.constant 0 : index
    %40 = vector.load %arg3[%c4_29, %c0_30, %c0_31] : memref<9x12x128xbf16, #tpu.memory_space<vmem>>, vector<1x12x128xbf16>
    %41 = vector.shape_cast %40 : vector<1x12x128xbf16> to vector<12x128xbf16>
    %cst_32 = arith.constant dense<0.000000e+00> : vector<16x128xf32>
    %42 = tpu.matmul %39, %41, %cst_32 {dimension_numbers = #tpu.dot_dimension_numbers<[1], [0], [0], [1], [0, 0, 1, 1], [], []>} : vector<16x12xbf16>, vector<12x128xbf16>, vector<16x128xf32> -> vector<16x128xf32>
    %43 = arith.addf %35, %42 : vector<16x128xf32>
    %c1_i32_33 = arith.constant 1 : i32
    %44 = arith.addi %0, %c1_i32_33 : i32
    %c0_34 = arith.constant 0 : index
    %45 = arith.index_cast %44 : i32 to index
    %c4_35 = arith.constant 4 : index
    %c0_36 = arith.constant 0 : index
    %46 = vector.load %arg2[%c0_34, %45, %c4_35, %c0_36] : memref<1x10x40x12xbf16, #tpu.memory_space<vmem>>, vector<1x1x16x12xbf16>
    %47 = vector.shape_cast %46 : vector<1x1x16x12xbf16> to vector<16x12xbf16>
    %c5 = arith.constant 5 : index
    %c0_37 = arith.constant 0 : index
    %c0_38 = arith.constant 0 : index
    %48 = vector.load %arg3[%c5, %c0_37, %c0_38] : memref<9x12x128xbf16, #tpu.memory_space<vmem>>, vector<1x12x128xbf16>
    %49 = vector.shape_cast %48 : vector<1x12x128xbf16> to vector<12x128xbf16>
    %cst_39 = arith.constant dense<0.000000e+00> : vector<16x128xf32>
    %50 = tpu.matmul %47, %49, %cst_39 {dimension_numbers = #tpu.dot_dimension_numbers<[1], [0], [0], [1], [0, 0, 1, 1], [], []>} : vector<16x12xbf16>, vector<12x128xbf16>, vector<16x128xf32> -> vector<16x128xf32>
    %51 = arith.addf %43, %50 : vector<16x128xf32>
    %c2_i32_40 = arith.constant 2 : i32
    %52 = arith.addi %0, %c2_i32_40 : i32
    %c0_41 = arith.constant 0 : index
    %53 = arith.index_cast %52 : i32 to index
    %c0_42 = arith.constant 0 : index
    %c0_43 = arith.constant 0 : index
    %54 = vector.load %arg2[%c0_41, %53, %c0_42, %c0_43] : memref<1x10x40x12xbf16, #tpu.memory_space<vmem>>, vector<1x1x16x12xbf16>
    %55 = vector.shape_cast %54 : vector<1x1x16x12xbf16> to vector<16x12xbf16>
    %c6 = arith.constant 6 : index
    %c0_44 = arith.constant 0 : index
    %c0_45 = arith.constant 0 : index
    %56 = vector.load %arg3[%c6, %c0_44, %c0_45] : memref<9x12x128xbf16, #tpu.memory_space<vmem>>, vector<1x12x128xbf16>
    %57 = vector.shape_cast %56 : vector<1x12x128xbf16> to vector<12x128xbf16>
    %cst_46 = arith.constant dense<0.000000e+00> : vector<16x128xf32>
    %58 = tpu.matmul %55, %57, %cst_46 {dimension_numbers = #tpu.dot_dimension_numbers<[1], [0], [0], [1], [0, 0, 1, 1], [], []>} : vector<16x12xbf16>, vector<12x128xbf16>, vector<16x128xf32> -> vector<16x128xf32>
    %59 = arith.addf %51, %58 : vector<16x128xf32>
    %c2_i32_47 = arith.constant 2 : i32
    %60 = arith.addi %0, %c2_i32_47 : i32
    %c0_48 = arith.constant 0 : index
    %61 = arith.index_cast %60 : i32 to index
    %c20_49 = arith.constant 20 : index
    %c0_50 = arith.constant 0 : index
    %62 = vector.load %arg2[%c0_48, %61, %c20_49, %c0_50] : memref<1x10x40x12xbf16, #tpu.memory_space<vmem>>, vector<1x1x16x12xbf16>
    %63 = vector.shape_cast %62 : vector<1x1x16x12xbf16> to vector<16x12xbf16>
    %c7 = arith.constant 7 : index
    %c0_51 = arith.constant 0 : index
    %c0_52 = arith.constant 0 : index
    %64 = vector.load %arg3[%c7, %c0_51, %c0_52] : memref<9x12x128xbf16, #tpu.memory_space<vmem>>, vector<1x12x128xbf16>
    %65 = vector.shape_cast %64 : vector<1x12x128xbf16> to vector<12x128xbf16>
    %cst_53 = arith.constant dense<0.000000e+00> : vector<16x128xf32>
    %66 = tpu.matmul %63, %65, %cst_53 {dimension_numbers = #tpu.dot_dimension_numbers<[1], [0], [0], [1], [0, 0, 1, 1], [], []>} : vector<16x12xbf16>, vector<12x128xbf16>, vector<16x128xf32> -> vector<16x128xf32>
    %67 = arith.addf %59, %66 : vector<16x128xf32>
    %c2_i32_54 = arith.constant 2 : i32
    %68 = arith.addi %0, %c2_i32_54 : i32
    %c0_55 = arith.constant 0 : index
    %69 = arith.index_cast %68 : i32 to index
    %c4_56 = arith.constant 4 : index
    %c0_57 = arith.constant 0 : index
    %70 = vector.load %arg2[%c0_55, %69, %c4_56, %c0_57] : memref<1x10x40x12xbf16, #tpu.memory_space<vmem>>, vector<1x1x16x12xbf16>
    %71 = vector.shape_cast %70 : vector<1x1x16x12xbf16> to vector<16x12xbf16>
    %c8 = arith.constant 8 : index
    %c0_58 = arith.constant 0 : index
    %c0_59 = arith.constant 0 : index
    %72 = vector.load %arg3[%c8, %c0_58, %c0_59] : memref<9x12x128xbf16, #tpu.memory_space<vmem>>, vector<1x12x128xbf16>
    %73 = vector.shape_cast %72 : vector<1x12x128xbf16> to vector<12x128xbf16>
    %cst_60 = arith.constant dense<0.000000e+00> : vector<16x128xf32>
    %74 = tpu.matmul %71, %73, %cst_60 {dimension_numbers = #tpu.dot_dimension_numbers<[1], [0], [0], [1], [0, 0, 1, 1], [], []>} : vector<16x12xbf16>, vector<12x128xbf16>, vector<16x128xf32> -> vector<16x128xf32>
    %75 = arith.addf %67, %74 : vector<16x128xf32>
    %cst_61 = arith.constant 0.000000e+00 : f32
    %76 = vector.broadcast %cst_61 : f32 to vector<16x128xf32>
    %77 = arith.maximumf %75, %76 : vector<16x128xf32>
    %78 = arith.truncf %77 : vector<16x128xf32> to vector<16x128xbf16>
    %c0_62 = arith.constant 0 : index
    %c0_63 = arith.constant 0 : index
    %c0_64 = arith.constant 0 : index
    %c0_65 = arith.constant 0 : index
    %79 = vector.load %arg5[%c0_62, %c0_63, %c0_64, %c0_65] : memref<1x1x16x128xbf16, #tpu.memory_space<vmem>>, vector<1x1x16x128xbf16>
    %80 = vector.shape_cast %79 : vector<1x1x16x128xbf16> to vector<16x128xbf16>
    %81 = vector.shape_cast %78 : vector<16x128xbf16> to vector<1x1x16x128xbf16>
    tpu.vector_store %arg5[%c0_62, %c0_63, %c0_64, %c0_65], %81 {strides = array<i32>} : memref<1x1x16x128xbf16, #tpu.memory_space<vmem>>, vector<1x1x16x128xbf16>,
    return
  }
  func.func @transform_0(%arg0: i32, %arg1: i32) -> (i32, i32, i32, i32) {
    %c0_i32 = arith.constant 0 : i32
    %c0_i32_0 = arith.constant 0 : i32
    %c0_i32_1 = arith.constant 0 : i32
    %c0_i32_2 = arith.constant 0 : i32
    return %arg0, %c0_i32, %c0_i32_0, %c0_i32_1 : i32, i32, i32, i32
  }
  func.func @transform_1(%arg0: i32, %arg1: i32) -> (i32, i32, i32) {
    %c0_i32 = arith.constant 0 : i32
    %c0_i32_0 = arith.constant 0 : i32
    %c0_i32_1 = arith.constant 0 : i32
    %c0_i32_2 = arith.constant 0 : i32
    return %c0_i32, %c0_i32_0, %c0_i32_1 : i32, i32, i32
  }
  func.func @transform_2(%arg0: i32, %arg1: i32) -> (i32, i32) {
    %c0_i32 = arith.constant 0 : i32
    %c0_i32_0 = arith.constant 0 : i32
    %c0_i32_1 = arith.constant 0 : i32
    return %c0_i32, %c0_i32_0 : i32, i32
  }
  func.func @transform_3(%arg0: i32, %arg1: i32) -> (i32, i32, i32, i32) {
    %c0_i32 = arith.constant 0 : i32
    %c0_i32_0 = arith.constant 0 : i32
    %c0_i32_1 = arith.constant 0 : i32
    return %arg0, %arg1, %c0_i32, %c0_i32_0 : i32, i32, i32, i32
  }
}

module attributes {stable_mosaic.version = 11 : i64} {
  func.func @kernel(%arg0: i32, %arg1: i32, %arg2: memref<1x6x42x128xbf16, #tpu.memory_space<vmem>>, %arg3: memref<27x128x128xbf16, #tpu.memory_space<vmem>>, %arg4: memref<1x128xf32, #tpu.memory_space<vmem>>, %arg5: memref<1x1x24x4xbf16, #tpu.memory_space<vmem>>, %arg6: memref<4x128xbf16, #tpu.memory_space<vmem>>, %arg7: memref<1x1x24x128xf32, #tpu.memory_space<vmem>>) attributes {dimension_semantics = [#tpu.dimension_semantics<parallel>, #tpu.dimension_semantics<parallel>], iteration_bounds = array<i64: 2, 4>, scalar_prefetch = 0 : i64, scratch_operands = 0 : i64, tpu.core_type = #tpu.core_type<tc>, window_params = [{transform_indices = @transform_0, window_bounds = array<i64: 1, 6, 42, 128>}, {pipeline_mode = #tpu.pipeline_mode<synchronous>, transform_indices = @transform_1, window_bounds = array<i64: 27, 128, 128>}, {pipeline_mode = #tpu.pipeline_mode<synchronous>, transform_indices = @transform_2, window_bounds = array<i64: 1, 128>}, {transform_indices = @transform_3, window_bounds = array<i64: 1, 1, 24, 4>}, {pipeline_mode = #tpu.pipeline_mode<synchronous>, transform_indices = @transform_4, window_bounds = array<i64: 4, 128>}, {transform_indices = @transform_5, window_bounds = array<i64: 1, 1, 24, 128>}]} {
    %c1_i32 = arith.constant 1 : i32
    %0 = arith.muli %arg1, %c1_i32 : i32
    %c0 = arith.constant 0 : index
    %c0_0 = arith.constant 0 : index
    %1 = vector.load %arg4[%c0, %c0_0] : memref<1x128xf32, #tpu.memory_space<vmem>>, vector<1x128xf32>
    %2 = vector.shape_cast %1 : vector<1x128xf32> to vector<1x128xf32>
    %3 = vector.broadcast %2 : vector<1x128xf32> to vector<24x128xf32>
    %c0_i32 = arith.constant 0 : i32
    %4 = arith.addi %0, %c0_i32 : i32
    %c0_1 = arith.constant 0 : index
    %5 = arith.index_cast %4 : i32 to index
    %c0_2 = arith.constant 0 : index
    %c0_3 = arith.constant 0 : index
    %6 = vector.load %arg2[%c0_1, %5, %c0_2, %c0_3] : memref<1x6x42x128xbf16, #tpu.memory_space<vmem>>, vector<1x1x24x128xbf16>
    %7 = vector.shape_cast %6 : vector<1x1x24x128xbf16> to vector<24x128xbf16>
    %c0_4 = arith.constant 0 : index
    %c0_5 = arith.constant 0 : index
    %c0_6 = arith.constant 0 : index
    %8 = vector.load %arg3[%c0_4, %c0_5, %c0_6] : memref<27x128x128xbf16, #tpu.memory_space<vmem>>, vector<1x128x128xbf16>
    %9 = vector.shape_cast %8 : vector<1x128x128xbf16> to vector<128x128xbf16>
    %cst = arith.constant dense<0.000000e+00> : vector<24x128xf32>
    %10 = tpu.matmul %7, %9, %cst {dimension_numbers = #tpu.dot_dimension_numbers<[1], [0], [0], [1], [0, 0, 1, 1], [], []>} : vector<24x128xbf16>, vector<128x128xbf16>, vector<24x128xf32> -> vector<24x128xf32>
    %11 = arith.addf %3, %10 : vector<24x128xf32>
    %c0_i32_7 = arith.constant 0 : i32
    %12 = arith.addi %0, %c0_i32_7 : i32
    %c0_8 = arith.constant 0 : index
    %13 = arith.index_cast %12 : i32 to index
    %c1 = arith.constant 1 : index
    %c0_9 = arith.constant 0 : index
    %14 = vector.load %arg2[%c0_8, %13, %c1, %c0_9] : memref<1x6x42x128xbf16, #tpu.memory_space<vmem>>, vector<1x1x24x128xbf16>
    %15 = vector.shape_cast %14 : vector<1x1x24x128xbf16> to vector<24x128xbf16>
    %c1_10 = arith.constant 1 : index
    %c0_11 = arith.constant 0 : index
    %c0_12 = arith.constant 0 : index
    %16 = vector.load %arg3[%c1_10, %c0_11, %c0_12] : memref<27x128x128xbf16, #tpu.memory_space<vmem>>, vector<1x128x128xbf16>
    %17 = vector.shape_cast %16 : vector<1x128x128xbf16> to vector<128x128xbf16>
    %cst_13 = arith.constant dense<0.000000e+00> : vector<24x128xf32>
    %18 = tpu.matmul %15, %17, %cst_13 {dimension_numbers = #tpu.dot_dimension_numbers<[1], [0], [0], [1], [0, 0, 1, 1], [], []>} : vector<24x128xbf16>, vector<128x128xbf16>, vector<24x128xf32> -> vector<24x128xf32>
    %19 = arith.addf %11, %18 : vector<24x128xf32>
    %c0_i32_14 = arith.constant 0 : i32
    %20 = arith.addi %0, %c0_i32_14 : i32
    %c0_15 = arith.constant 0 : index
    %21 = arith.index_cast %20 : i32 to index
    %c2 = arith.constant 2 : index
    %c0_16 = arith.constant 0 : index
    %22 = vector.load %arg2[%c0_15, %21, %c2, %c0_16] : memref<1x6x42x128xbf16, #tpu.memory_space<vmem>>, vector<1x1x24x128xbf16>
    %23 = vector.shape_cast %22 : vector<1x1x24x128xbf16> to vector<24x128xbf16>
    %c2_17 = arith.constant 2 : index
    %c0_18 = arith.constant 0 : index
    %c0_19 = arith.constant 0 : index
    %24 = vector.load %arg3[%c2_17, %c0_18, %c0_19] : memref<27x128x128xbf16, #tpu.memory_space<vmem>>, vector<1x128x128xbf16>
    %25 = vector.shape_cast %24 : vector<1x128x128xbf16> to vector<128x128xbf16>
    %cst_20 = arith.constant dense<0.000000e+00> : vector<24x128xf32>
    %26 = tpu.matmul %23, %25, %cst_20 {dimension_numbers = #tpu.dot_dimension_numbers<[1], [0], [0], [1], [0, 0, 1, 1], [], []>} : vector<24x128xbf16>, vector<128x128xbf16>, vector<24x128xf32> -> vector<24x128xf32>
    %27 = arith.addf %19, %26 : vector<24x128xf32>
    %c0_i32_21 = arith.constant 0 : i32
    %28 = arith.addi %0, %c0_i32_21 : i32
    %c0_22 = arith.constant 0 : index
    %29 = arith.index_cast %28 : i32 to index
    %c6 = arith.constant 6 : index
    %c0_23 = arith.constant 0 : index
    %30 = vector.load %arg2[%c0_22, %29, %c6, %c0_23] : memref<1x6x42x128xbf16, #tpu.memory_space<vmem>>, vector<1x1x24x128xbf16>
    %31 = vector.shape_cast %30 : vector<1x1x24x128xbf16> to vector<24x128xbf16>
    %c3 = arith.constant 3 : index
    %c0_24 = arith.constant 0 : index
    %c0_25 = arith.constant 0 : index
    %32 = vector.load %arg3[%c3, %c0_24, %c0_25] : memref<27x128x128xbf16, #tpu.memory_space<vmem>>, vector<1x128x128xbf16>
    %33 = vector.shape_cast %32 : vector<1x128x128xbf16> to vector<128x128xbf16>
    %cst_26 = arith.constant dense<0.000000e+00> : vector<24x128xf32>
    %34 = tpu.matmul %31, %33, %cst_26 {dimension_numbers = #tpu.dot_dimension_numbers<[1], [0], [0], [1], [0, 0, 1, 1], [], []>} : vector<24x128xbf16>, vector<128x128xbf16>, vector<24x128xf32> -> vector<24x128xf32>
    %35 = arith.addf %27, %34 : vector<24x128xf32>
    %c0_i32_27 = arith.constant 0 : i32
    %36 = arith.addi %0, %c0_i32_27 : i32
    %c0_28 = arith.constant 0 : index
    %37 = arith.index_cast %36 : i32 to index
    %c7 = arith.constant 7 : index
    %c0_29 = arith.constant 0 : index
    %38 = vector.load %arg2[%c0_28, %37, %c7, %c0_29] : memref<1x6x42x128xbf16, #tpu.memory_space<vmem>>, vector<1x1x24x128xbf16>
    %39 = vector.shape_cast %38 : vector<1x1x24x128xbf16> to vector<24x128xbf16>
    %c4 = arith.constant 4 : index
    %c0_30 = arith.constant 0 : index
    %c0_31 = arith.constant 0 : index
    %40 = vector.load %arg3[%c4, %c0_30, %c0_31] : memref<27x128x128xbf16, #tpu.memory_space<vmem>>, vector<1x128x128xbf16>
    %41 = vector.shape_cast %40 : vector<1x128x128xbf16> to vector<128x128xbf16>
    %cst_32 = arith.constant dense<0.000000e+00> : vector<24x128xf32>
    %42 = tpu.matmul %39, %41, %cst_32 {dimension_numbers = #tpu.dot_dimension_numbers<[1], [0], [0], [1], [0, 0, 1, 1], [], []>} : vector<24x128xbf16>, vector<128x128xbf16>, vector<24x128xf32> -> vector<24x128xf32>
    %43 = arith.addf %35, %42 : vector<24x128xf32>
    %c0_i32_33 = arith.constant 0 : i32
    %44 = arith.addi %0, %c0_i32_33 : i32
    %c0_34 = arith.constant 0 : index
    %45 = arith.index_cast %44 : i32 to index
    %c8 = arith.constant 8 : index
    %c0_35 = arith.constant 0 : index
    %46 = vector.load %arg2[%c0_34, %45, %c8, %c0_35] : memref<1x6x42x128xbf16, #tpu.memory_space<vmem>>, vector<1x1x24x128xbf16>
    %47 = vector.shape_cast %46 : vector<1x1x24x128xbf16> to vector<24x128xbf16>
    %c5 = arith.constant 5 : index
    %c0_36 = arith.constant 0 : index
    %c0_37 = arith.constant 0 : index
    %48 = vector.load %arg3[%c5, %c0_36, %c0_37] : memref<27x128x128xbf16, #tpu.memory_space<vmem>>, vector<1x128x128xbf16>
    %49 = vector.shape_cast %48 : vector<1x128x128xbf16> to vector<128x128xbf16>
    %cst_38 = arith.constant dense<0.000000e+00> : vector<24x128xf32>
    %50 = tpu.matmul %47, %49, %cst_38 {dimension_numbers = #tpu.dot_dimension_numbers<[1], [0], [0], [1], [0, 0, 1, 1], [], []>} : vector<24x128xbf16>, vector<128x128xbf16>, vector<24x128xf32> -> vector<24x128xf32>
    %51 = arith.addf %43, %50 : vector<24x128xf32>
    %c0_i32_39 = arith.constant 0 : i32
    %52 = arith.addi %0, %c0_i32_39 : i32
    %c0_40 = arith.constant 0 : index
    %53 = arith.index_cast %52 : i32 to index
    %c12 = arith.constant 12 : index
    %c0_41 = arith.constant 0 : index
    %54 = vector.load %arg2[%c0_40, %53, %c12, %c0_41] : memref<1x6x42x128xbf16, #tpu.memory_space<vmem>>, vector<1x1x24x128xbf16>
    %55 = vector.shape_cast %54 : vector<1x1x24x128xbf16> to vector<24x128xbf16>
    %c6_42 = arith.constant 6 : index
    %c0_43 = arith.constant 0 : index
    %c0_44 = arith.constant 0 : index
    %56 = vector.load %arg3[%c6_42, %c0_43, %c0_44] : memref<27x128x128xbf16, #tpu.memory_space<vmem>>, vector<1x128x128xbf16>
    %57 = vector.shape_cast %56 : vector<1x128x128xbf16> to vector<128x128xbf16>
    %cst_45 = arith.constant dense<0.000000e+00> : vector<24x128xf32>
    %58 = tpu.matmul %55, %57, %cst_45 {dimension_numbers = #tpu.dot_dimension_numbers<[1], [0], [0], [1], [0, 0, 1, 1], [], []>} : vector<24x128xbf16>, vector<128x128xbf16>, vector<24x128xf32> -> vector<24x128xf32>
    %59 = arith.addf %51, %58 : vector<24x128xf32>
    %c0_i32_46 = arith.constant 0 : i32
    %60 = arith.addi %0, %c0_i32_46 : i32
    %c0_47 = arith.constant 0 : index
    %61 = arith.index_cast %60 : i32 to index
    %c13 = arith.constant 13 : index
    %c0_48 = arith.constant 0 : index
    %62 = vector.load %arg2[%c0_47, %61, %c13, %c0_48] : memref<1x6x42x128xbf16, #tpu.memory_space<vmem>>, vector<1x1x24x128xbf16>
    %63 = vector.shape_cast %62 : vector<1x1x24x128xbf16> to vector<24x128xbf16>
    %c7_49 = arith.constant 7 : index
    %c0_50 = arith.constant 0 : index
    %c0_51 = arith.constant 0 : index
    %64 = vector.load %arg3[%c7_49, %c0_50, %c0_51] : memref<27x128x128xbf16, #tpu.memory_space<vmem>>, vector<1x128x128xbf16>
    %65 = vector.shape_cast %64 : vector<1x128x128xbf16> to vector<128x128xbf16>
    %cst_52 = arith.constant dense<0.000000e+00> : vector<24x128xf32>
    %66 = tpu.matmul %63, %65, %cst_52 {dimension_numbers = #tpu.dot_dimension_numbers<[1], [0], [0], [1], [0, 0, 1, 1], [], []>} : vector<24x128xbf16>, vector<128x128xbf16>, vector<24x128xf32> -> vector<24x128xf32>
    %67 = arith.addf %59, %66 : vector<24x128xf32>
    %c0_i32_53 = arith.constant 0 : i32
    %68 = arith.addi %0, %c0_i32_53 : i32
    %c0_54 = arith.constant 0 : index
    %69 = arith.index_cast %68 : i32 to index
    %c14 = arith.constant 14 : index
    %c0_55 = arith.constant 0 : index
    %70 = vector.load %arg2[%c0_54, %69, %c14, %c0_55] : memref<1x6x42x128xbf16, #tpu.memory_space<vmem>>, vector<1x1x24x128xbf16>
    %71 = vector.shape_cast %70 : vector<1x1x24x128xbf16> to vector<24x128xbf16>
    %c8_56 = arith.constant 8 : index
    %c0_57 = arith.constant 0 : index
    %c0_58 = arith.constant 0 : index
    %72 = vector.load %arg3[%c8_56, %c0_57, %c0_58] : memref<27x128x128xbf16, #tpu.memory_space<vmem>>, vector<1x128x128xbf16>
    %73 = vector.shape_cast %72 : vector<1x128x128xbf16> to vector<128x128xbf16>
    %cst_59 = arith.constant dense<0.000000e+00> : vector<24x128xf32>
    %74 = tpu.matmul %71, %73, %cst_59 {dimension_numbers = #tpu.dot_dimension_numbers<[1], [0], [0], [1], [0, 0, 1, 1], [], []>} : vector<24x128xbf16>, vector<128x128xbf16>, vector<24x128xf32> -> vector<24x128xf32>
    %75 = arith.addf %67, %74 : vector<24x128xf32>
    %c1_i32_60 = arith.constant 1 : i32
    %76 = arith.addi %0, %c1_i32_60 : i32
    %c0_61 = arith.constant 0 : index
    %77 = arith.index_cast %76 : i32 to index
    %c0_62 = arith.constant 0 : index
    %c0_63 = arith.constant 0 : index
    %78 = vector.load %arg2[%c0_61, %77, %c0_62, %c0_63] : memref<1x6x42x128xbf16, #tpu.memory_space<vmem>>, vector<1x1x24x128xbf16>
    %79 = vector.shape_cast %78 : vector<1x1x24x128xbf16> to vector<24x128xbf16>
    %c9 = arith.constant 9 : index
    %c0_64 = arith.constant 0 : index
    %c0_65 = arith.constant 0 : index
    %80 = vector.load %arg3[%c9, %c0_64, %c0_65] : memref<27x128x128xbf16, #tpu.memory_space<vmem>>, vector<1x128x128xbf16>
    %81 = vector.shape_cast %80 : vector<1x128x128xbf16> to vector<128x128xbf16>
    %cst_66 = arith.constant dense<0.000000e+00> : vector<24x128xf32>
    %82 = tpu.matmul %79, %81, %cst_66 {dimension_numbers = #tpu.dot_dimension_numbers<[1], [0], [0], [1], [0, 0, 1, 1], [], []>} : vector<24x128xbf16>, vector<128x128xbf16>, vector<24x128xf32> -> vector<24x128xf32>
    %83 = arith.addf %75, %82 : vector<24x128xf32>
    %c1_i32_67 = arith.constant 1 : i32
    %84 = arith.addi %0, %c1_i32_67 : i32
    %c0_68 = arith.constant 0 : index
    %85 = arith.index_cast %84 : i32 to index
    %c1_69 = arith.constant 1 : index
    %c0_70 = arith.constant 0 : index
    %86 = vector.load %arg2[%c0_68, %85, %c1_69, %c0_70] : memref<1x6x42x128xbf16, #tpu.memory_space<vmem>>, vector<1x1x24x128xbf16>
    %87 = vector.shape_cast %86 : vector<1x1x24x128xbf16> to vector<24x128xbf16>
    %c10 = arith.constant 10 : index
    %c0_71 = arith.constant 0 : index
    %c0_72 = arith.constant 0 : index
    %88 = vector.load %arg3[%c10, %c0_71, %c0_72] : memref<27x128x128xbf16, #tpu.memory_space<vmem>>, vector<1x128x128xbf16>
    %89 = vector.shape_cast %88 : vector<1x128x128xbf16> to vector<128x128xbf16>
    %cst_73 = arith.constant dense<0.000000e+00> : vector<24x128xf32>
    %90 = tpu.matmul %87, %89, %cst_73 {dimension_numbers = #tpu.dot_dimension_numbers<[1], [0], [0], [1], [0, 0, 1, 1], [], []>} : vector<24x128xbf16>, vector<128x128xbf16>, vector<24x128xf32> -> vector<24x128xf32>
    %91 = arith.addf %83, %90 : vector<24x128xf32>
    %c1_i32_74 = arith.constant 1 : i32
    %92 = arith.addi %0, %c1_i32_74 : i32
    %c0_75 = arith.constant 0 : index
    %93 = arith.index_cast %92 : i32 to index
    %c2_76 = arith.constant 2 : index
    %c0_77 = arith.constant 0 : index
    %94 = vector.load %arg2[%c0_75, %93, %c2_76, %c0_77] : memref<1x6x42x128xbf16, #tpu.memory_space<vmem>>, vector<1x1x24x128xbf16>
    %95 = vector.shape_cast %94 : vector<1x1x24x128xbf16> to vector<24x128xbf16>
    %c11 = arith.constant 11 : index
    %c0_78 = arith.constant 0 : index
    %c0_79 = arith.constant 0 : index
    %96 = vector.load %arg3[%c11, %c0_78, %c0_79] : memref<27x128x128xbf16, #tpu.memory_space<vmem>>, vector<1x128x128xbf16>
    %97 = vector.shape_cast %96 : vector<1x128x128xbf16> to vector<128x128xbf16>
    %cst_80 = arith.constant dense<0.000000e+00> : vector<24x128xf32>
    %98 = tpu.matmul %95, %97, %cst_80 {dimension_numbers = #tpu.dot_dimension_numbers<[1], [0], [0], [1], [0, 0, 1, 1], [], []>} : vector<24x128xbf16>, vector<128x128xbf16>, vector<24x128xf32> -> vector<24x128xf32>
    %99 = arith.addf %91, %98 : vector<24x128xf32>
    %c1_i32_81 = arith.constant 1 : i32
    %100 = arith.addi %0, %c1_i32_81 : i32
    %c0_82 = arith.constant 0 : index
    %101 = arith.index_cast %100 : i32 to index
    %c6_83 = arith.constant 6 : index
    %c0_84 = arith.constant 0 : index
    %102 = vector.load %arg2[%c0_82, %101, %c6_83, %c0_84] : memref<1x6x42x128xbf16, #tpu.memory_space<vmem>>, vector<1x1x24x128xbf16>
    %103 = vector.shape_cast %102 : vector<1x1x24x128xbf16> to vector<24x128xbf16>
    %c12_85 = arith.constant 12 : index
    %c0_86 = arith.constant 0 : index
    %c0_87 = arith.constant 0 : index
    %104 = vector.load %arg3[%c12_85, %c0_86, %c0_87] : memref<27x128x128xbf16, #tpu.memory_space<vmem>>, vector<1x128x128xbf16>
    %105 = vector.shape_cast %104 : vector<1x128x128xbf16> to vector<128x128xbf16>
    %cst_88 = arith.constant dense<0.000000e+00> : vector<24x128xf32>
    %106 = tpu.matmul %103, %105, %cst_88 {dimension_numbers = #tpu.dot_dimension_numbers<[1], [0], [0], [1], [0, 0, 1, 1], [], []>} : vector<24x128xbf16>, vector<128x128xbf16>, vector<24x128xf32> -> vector<24x128xf32>
    %107 = arith.addf %99, %106 : vector<24x128xf32>
    %c1_i32_89 = arith.constant 1 : i32
    %108 = arith.addi %0, %c1_i32_89 : i32
    %c0_90 = arith.constant 0 : index
    %109 = arith.index_cast %108 : i32 to index
    %c7_91 = arith.constant 7 : index
    %c0_92 = arith.constant 0 : index
    %110 = vector.load %arg2[%c0_90, %109, %c7_91, %c0_92] : memref<1x6x42x128xbf16, #tpu.memory_space<vmem>>, vector<1x1x24x128xbf16>
    %111 = vector.shape_cast %110 : vector<1x1x24x128xbf16> to vector<24x128xbf16>
    %c13_93 = arith.constant 13 : index
    %c0_94 = arith.constant 0 : index
    %c0_95 = arith.constant 0 : index
    %112 = vector.load %arg3[%c13_93, %c0_94, %c0_95] : memref<27x128x128xbf16, #tpu.memory_space<vmem>>, vector<1x128x128xbf16>
    %113 = vector.shape_cast %112 : vector<1x128x128xbf16> to vector<128x128xbf16>
    %cst_96 = arith.constant dense<0.000000e+00> : vector<24x128xf32>
    %114 = tpu.matmul %111, %113, %cst_96 {dimension_numbers = #tpu.dot_dimension_numbers<[1], [0], [0], [1], [0, 0, 1, 1], [], []>} : vector<24x128xbf16>, vector<128x128xbf16>, vector<24x128xf32> -> vector<24x128xf32>
    %115 = arith.addf %107, %114 : vector<24x128xf32>
    %c1_i32_97 = arith.constant 1 : i32
    %116 = arith.addi %0, %c1_i32_97 : i32
    %c0_98 = arith.constant 0 : index
    %117 = arith.index_cast %116 : i32 to index
    %c8_99 = arith.constant 8 : index
    %c0_100 = arith.constant 0 : index
    %118 = vector.load %arg2[%c0_98, %117, %c8_99, %c0_100] : memref<1x6x42x128xbf16, #tpu.memory_space<vmem>>, vector<1x1x24x128xbf16>
    %119 = vector.shape_cast %118 : vector<1x1x24x128xbf16> to vector<24x128xbf16>
    %c14_101 = arith.constant 14 : index
    %c0_102 = arith.constant 0 : index
    %c0_103 = arith.constant 0 : index
    %120 = vector.load %arg3[%c14_101, %c0_102, %c0_103] : memref<27x128x128xbf16, #tpu.memory_space<vmem>>, vector<1x128x128xbf16>
    %121 = vector.shape_cast %120 : vector<1x128x128xbf16> to vector<128x128xbf16>
    %cst_104 = arith.constant dense<0.000000e+00> : vector<24x128xf32>
    %122 = tpu.matmul %119, %121, %cst_104 {dimension_numbers = #tpu.dot_dimension_numbers<[1], [0], [0], [1], [0, 0, 1, 1], [], []>} : vector<24x128xbf16>, vector<128x128xbf16>, vector<24x128xf32> -> vector<24x128xf32>
    %123 = arith.addf %115, %122 : vector<24x128xf32>
    %c1_i32_105 = arith.constant 1 : i32
    %124 = arith.addi %0, %c1_i32_105 : i32
    %c0_106 = arith.constant 0 : index
    %125 = arith.index_cast %124 : i32 to index
    %c12_107 = arith.constant 12 : index
    %c0_108 = arith.constant 0 : index
    %126 = vector.load %arg2[%c0_106, %125, %c12_107, %c0_108] : memref<1x6x42x128xbf16, #tpu.memory_space<vmem>>, vector<1x1x24x128xbf16>
    %127 = vector.shape_cast %126 : vector<1x1x24x128xbf16> to vector<24x128xbf16>
    %c15 = arith.constant 15 : index
    %c0_109 = arith.constant 0 : index
    %c0_110 = arith.constant 0 : index
    %128 = vector.load %arg3[%c15, %c0_109, %c0_110] : memref<27x128x128xbf16, #tpu.memory_space<vmem>>, vector<1x128x128xbf16>
    %129 = vector.shape_cast %128 : vector<1x128x128xbf16> to vector<128x128xbf16>
    %cst_111 = arith.constant dense<0.000000e+00> : vector<24x128xf32>
    %130 = tpu.matmul %127, %129, %cst_111 {dimension_numbers = #tpu.dot_dimension_numbers<[1], [0], [0], [1], [0, 0, 1, 1], [], []>} : vector<24x128xbf16>, vector<128x128xbf16>, vector<24x128xf32> -> vector<24x128xf32>
    %131 = arith.addf %123, %130 : vector<24x128xf32>
    %c1_i32_112 = arith.constant 1 : i32
    %132 = arith.addi %0, %c1_i32_112 : i32
    %c0_113 = arith.constant 0 : index
    %133 = arith.index_cast %132 : i32 to index
    %c13_114 = arith.constant 13 : index
    %c0_115 = arith.constant 0 : index
    %134 = vector.load %arg2[%c0_113, %133, %c13_114, %c0_115] : memref<1x6x42x128xbf16, #tpu.memory_space<vmem>>, vector<1x1x24x128xbf16>
    %135 = vector.shape_cast %134 : vector<1x1x24x128xbf16> to vector<24x128xbf16>
    %c16 = arith.constant 16 : index
    %c0_116 = arith.constant 0 : index
    %c0_117 = arith.constant 0 : index
    %136 = vector.load %arg3[%c16, %c0_116, %c0_117] : memref<27x128x128xbf16, #tpu.memory_space<vmem>>, vector<1x128x128xbf16>
    %137 = vector.shape_cast %136 : vector<1x128x128xbf16> to vector<128x128xbf16>
    %cst_118 = arith.constant dense<0.000000e+00> : vector<24x128xf32>
    %138 = tpu.matmul %135, %137, %cst_118 {dimension_numbers = #tpu.dot_dimension_numbers<[1], [0], [0], [1], [0, 0, 1, 1], [], []>} : vector<24x128xbf16>, vector<128x128xbf16>, vector<24x128xf32> -> vector<24x128xf32>
    %139 = arith.addf %131, %138 : vector<24x128xf32>
    %c1_i32_119 = arith.constant 1 : i32
    %140 = arith.addi %0, %c1_i32_119 : i32
    %c0_120 = arith.constant 0 : index
    %141 = arith.index_cast %140 : i32 to index
    %c14_121 = arith.constant 14 : index
    %c0_122 = arith.constant 0 : index
    %142 = vector.load %arg2[%c0_120, %141, %c14_121, %c0_122] : memref<1x6x42x128xbf16, #tpu.memory_space<vmem>>, vector<1x1x24x128xbf16>
    %143 = vector.shape_cast %142 : vector<1x1x24x128xbf16> to vector<24x128xbf16>
    %c17 = arith.constant 17 : index
    %c0_123 = arith.constant 0 : index
    %c0_124 = arith.constant 0 : index
    %144 = vector.load %arg3[%c17, %c0_123, %c0_124] : memref<27x128x128xbf16, #tpu.memory_space<vmem>>, vector<1x128x128xbf16>
    %145 = vector.shape_cast %144 : vector<1x128x128xbf16> to vector<128x128xbf16>
    %cst_125 = arith.constant dense<0.000000e+00> : vector<24x128xf32>
    %146 = tpu.matmul %143, %145, %cst_125 {dimension_numbers = #tpu.dot_dimension_numbers<[1], [0], [0], [1], [0, 0, 1, 1], [], []>} : vector<24x128xbf16>, vector<128x128xbf16>, vector<24x128xf32> -> vector<24x128xf32>
    %147 = arith.addf %139, %146 : vector<24x128xf32>
    %c2_i32 = arith.constant 2 : i32
    %148 = arith.addi %0, %c2_i32 : i32
    %c0_126 = arith.constant 0 : index
    %149 = arith.index_cast %148 : i32 to index
    %c0_127 = arith.constant 0 : index
    %c0_128 = arith.constant 0 : index
    %150 = vector.load %arg2[%c0_126, %149, %c0_127, %c0_128] : memref<1x6x42x128xbf16, #tpu.memory_space<vmem>>, vector<1x1x24x128xbf16>
    %151 = vector.shape_cast %150 : vector<1x1x24x128xbf16> to vector<24x128xbf16>
    %c18 = arith.constant 18 : index
    %c0_129 = arith.constant 0 : index
    %c0_130 = arith.constant 0 : index
    %152 = vector.load %arg3[%c18, %c0_129, %c0_130] : memref<27x128x128xbf16, #tpu.memory_space<vmem>>, vector<1x128x128xbf16>
    %153 = vector.shape_cast %152 : vector<1x128x128xbf16> to vector<128x128xbf16>
    %cst_131 = arith.constant dense<0.000000e+00> : vector<24x128xf32>
    %154 = tpu.matmul %151, %153, %cst_131 {dimension_numbers = #tpu.dot_dimension_numbers<[1], [0], [0], [1], [0, 0, 1, 1], [], []>} : vector<24x128xbf16>, vector<128x128xbf16>, vector<24x128xf32> -> vector<24x128xf32>
    %155 = arith.addf %147, %154 : vector<24x128xf32>
    %c2_i32_132 = arith.constant 2 : i32
    %156 = arith.addi %0, %c2_i32_132 : i32
    %c0_133 = arith.constant 0 : index
    %157 = arith.index_cast %156 : i32 to index
    %c1_134 = arith.constant 1 : index
    %c0_135 = arith.constant 0 : index
    %158 = vector.load %arg2[%c0_133, %157, %c1_134, %c0_135] : memref<1x6x42x128xbf16, #tpu.memory_space<vmem>>, vector<1x1x24x128xbf16>
    %159 = vector.shape_cast %158 : vector<1x1x24x128xbf16> to vector<24x128xbf16>
    %c19 = arith.constant 19 : index
    %c0_136 = arith.constant 0 : index
    %c0_137 = arith.constant 0 : index
    %160 = vector.load %arg3[%c19, %c0_136, %c0_137] : memref<27x128x128xbf16, #tpu.memory_space<vmem>>, vector<1x128x128xbf16>
    %161 = vector.shape_cast %160 : vector<1x128x128xbf16> to vector<128x128xbf16>
    %cst_138 = arith.constant dense<0.000000e+00> : vector<24x128xf32>
    %162 = tpu.matmul %159, %161, %cst_138 {dimension_numbers = #tpu.dot_dimension_numbers<[1], [0], [0], [1], [0, 0, 1, 1], [], []>} : vector<24x128xbf16>, vector<128x128xbf16>, vector<24x128xf32> -> vector<24x128xf32>
    %163 = arith.addf %155, %162 : vector<24x128xf32>
    %c2_i32_139 = arith.constant 2 : i32
    %164 = arith.addi %0, %c2_i32_139 : i32
    %c0_140 = arith.constant 0 : index
    %165 = arith.index_cast %164 : i32 to index
    %c2_141 = arith.constant 2 : index
    %c0_142 = arith.constant 0 : index
    %166 = vector.load %arg2[%c0_140, %165, %c2_141, %c0_142] : memref<1x6x42x128xbf16, #tpu.memory_space<vmem>>, vector<1x1x24x128xbf16>
    %167 = vector.shape_cast %166 : vector<1x1x24x128xbf16> to vector<24x128xbf16>
    %c20 = arith.constant 20 : index
    %c0_143 = arith.constant 0 : index
    %c0_144 = arith.constant 0 : index
    %168 = vector.load %arg3[%c20, %c0_143, %c0_144] : memref<27x128x128xbf16, #tpu.memory_space<vmem>>, vector<1x128x128xbf16>
    %169 = vector.shape_cast %168 : vector<1x128x128xbf16> to vector<128x128xbf16>
    %cst_145 = arith.constant dense<0.000000e+00> : vector<24x128xf32>
    %170 = tpu.matmul %167, %169, %cst_145 {dimension_numbers = #tpu.dot_dimension_numbers<[1], [0], [0], [1], [0, 0, 1, 1], [], []>} : vector<24x128xbf16>, vector<128x128xbf16>, vector<24x128xf32> -> vector<24x128xf32>
    %171 = arith.addf %163, %170 : vector<24x128xf32>
    %c2_i32_146 = arith.constant 2 : i32
    %172 = arith.addi %0, %c2_i32_146 : i32
    %c0_147 = arith.constant 0 : index
    %173 = arith.index_cast %172 : i32 to index
    %c6_148 = arith.constant 6 : index
    %c0_149 = arith.constant 0 : index
    %174 = vector.load %arg2[%c0_147, %173, %c6_148, %c0_149] : memref<1x6x42x128xbf16, #tpu.memory_space<vmem>>, vector<1x1x24x128xbf16>
    %175 = vector.shape_cast %174 : vector<1x1x24x128xbf16> to vector<24x128xbf16>
    %c21 = arith.constant 21 : index
    %c0_150 = arith.constant 0 : index
    %c0_151 = arith.constant 0 : index
    %176 = vector.load %arg3[%c21, %c0_150, %c0_151] : memref<27x128x128xbf16, #tpu.memory_space<vmem>>, vector<1x128x128xbf16>
    %177 = vector.shape_cast %176 : vector<1x128x128xbf16> to vector<128x128xbf16>
    %cst_152 = arith.constant dense<0.000000e+00> : vector<24x128xf32>
    %178 = tpu.matmul %175, %177, %cst_152 {dimension_numbers = #tpu.dot_dimension_numbers<[1], [0], [0], [1], [0, 0, 1, 1], [], []>} : vector<24x128xbf16>, vector<128x128xbf16>, vector<24x128xf32> -> vector<24x128xf32>
    %179 = arith.addf %171, %178 : vector<24x128xf32>
    %c2_i32_153 = arith.constant 2 : i32
    %180 = arith.addi %0, %c2_i32_153 : i32
    %c0_154 = arith.constant 0 : index
    %181 = arith.index_cast %180 : i32 to index
    %c7_155 = arith.constant 7 : index
    %c0_156 = arith.constant 0 : index
    %182 = vector.load %arg2[%c0_154, %181, %c7_155, %c0_156] : memref<1x6x42x128xbf16, #tpu.memory_space<vmem>>, vector<1x1x24x128xbf16>
    %183 = vector.shape_cast %182 : vector<1x1x24x128xbf16> to vector<24x128xbf16>
    %c22 = arith.constant 22 : index
    %c0_157 = arith.constant 0 : index
    %c0_158 = arith.constant 0 : index
    %184 = vector.load %arg3[%c22, %c0_157, %c0_158] : memref<27x128x128xbf16, #tpu.memory_space<vmem>>, vector<1x128x128xbf16>
    %185 = vector.shape_cast %184 : vector<1x128x128xbf16> to vector<128x128xbf16>
    %cst_159 = arith.constant dense<0.000000e+00> : vector<24x128xf32>
    %186 = tpu.matmul %183, %185, %cst_159 {dimension_numbers = #tpu.dot_dimension_numbers<[1], [0], [0], [1], [0, 0, 1, 1], [], []>} : vector<24x128xbf16>, vector<128x128xbf16>, vector<24x128xf32> -> vector<24x128xf32>
    %187 = arith.addf %179, %186 : vector<24x128xf32>
    %c2_i32_160 = arith.constant 2 : i32
    %188 = arith.addi %0, %c2_i32_160 : i32
    %c0_161 = arith.constant 0 : index
    %189 = arith.index_cast %188 : i32 to index
    %c8_162 = arith.constant 8 : index
    %c0_163 = arith.constant 0 : index
    %190 = vector.load %arg2[%c0_161, %189, %c8_162, %c0_163] : memref<1x6x42x128xbf16, #tpu.memory_space<vmem>>, vector<1x1x24x128xbf16>
    %191 = vector.shape_cast %190 : vector<1x1x24x128xbf16> to vector<24x128xbf16>
    %c23 = arith.constant 23 : index
    %c0_164 = arith.constant 0 : index
    %c0_165 = arith.constant 0 : index
    %192 = vector.load %arg3[%c23, %c0_164, %c0_165] : memref<27x128x128xbf16, #tpu.memory_space<vmem>>, vector<1x128x128xbf16>
    %193 = vector.shape_cast %192 : vector<1x128x128xbf16> to vector<128x128xbf16>
    %cst_166 = arith.constant dense<0.000000e+00> : vector<24x128xf32>
    %194 = tpu.matmul %191, %193, %cst_166 {dimension_numbers = #tpu.dot_dimension_numbers<[1], [0], [0], [1], [0, 0, 1, 1], [], []>} : vector<24x128xbf16>, vector<128x128xbf16>, vector<24x128xf32> -> vector<24x128xf32>
    %195 = arith.addf %187, %194 : vector<24x128xf32>
    %c2_i32_167 = arith.constant 2 : i32
    %196 = arith.addi %0, %c2_i32_167 : i32
    %c0_168 = arith.constant 0 : index
    %197 = arith.index_cast %196 : i32 to index
    %c12_169 = arith.constant 12 : index
    %c0_170 = arith.constant 0 : index
    %198 = vector.load %arg2[%c0_168, %197, %c12_169, %c0_170] : memref<1x6x42x128xbf16, #tpu.memory_space<vmem>>, vector<1x1x24x128xbf16>
    %199 = vector.shape_cast %198 : vector<1x1x24x128xbf16> to vector<24x128xbf16>
    %c24 = arith.constant 24 : index
    %c0_171 = arith.constant 0 : index
    %c0_172 = arith.constant 0 : index
    %200 = vector.load %arg3[%c24, %c0_171, %c0_172] : memref<27x128x128xbf16, #tpu.memory_space<vmem>>, vector<1x128x128xbf16>
    %201 = vector.shape_cast %200 : vector<1x128x128xbf16> to vector<128x128xbf16>
    %cst_173 = arith.constant dense<0.000000e+00> : vector<24x128xf32>
    %202 = tpu.matmul %199, %201, %cst_173 {dimension_numbers = #tpu.dot_dimension_numbers<[1], [0], [0], [1], [0, 0, 1, 1], [], []>} : vector<24x128xbf16>, vector<128x128xbf16>, vector<24x128xf32> -> vector<24x128xf32>
    %203 = arith.addf %195, %202 : vector<24x128xf32>
    %c2_i32_174 = arith.constant 2 : i32
    %204 = arith.addi %0, %c2_i32_174 : i32
    %c0_175 = arith.constant 0 : index
    %205 = arith.index_cast %204 : i32 to index
    %c13_176 = arith.constant 13 : index
    %c0_177 = arith.constant 0 : index
    %206 = vector.load %arg2[%c0_175, %205, %c13_176, %c0_177] : memref<1x6x42x128xbf16, #tpu.memory_space<vmem>>, vector<1x1x24x128xbf16>
    %207 = vector.shape_cast %206 : vector<1x1x24x128xbf16> to vector<24x128xbf16>
    %c25 = arith.constant 25 : index
    %c0_178 = arith.constant 0 : index
    %c0_179 = arith.constant 0 : index
    %208 = vector.load %arg3[%c25, %c0_178, %c0_179] : memref<27x128x128xbf16, #tpu.memory_space<vmem>>, vector<1x128x128xbf16>
    %209 = vector.shape_cast %208 : vector<1x128x128xbf16> to vector<128x128xbf16>
    %cst_180 = arith.constant dense<0.000000e+00> : vector<24x128xf32>
    %210 = tpu.matmul %207, %209, %cst_180 {dimension_numbers = #tpu.dot_dimension_numbers<[1], [0], [0], [1], [0, 0, 1, 1], [], []>} : vector<24x128xbf16>, vector<128x128xbf16>, vector<24x128xf32> -> vector<24x128xf32>
    %211 = arith.addf %203, %210 : vector<24x128xf32>
    %c2_i32_181 = arith.constant 2 : i32
    %212 = arith.addi %0, %c2_i32_181 : i32
    %c0_182 = arith.constant 0 : index
    %213 = arith.index_cast %212 : i32 to index
    %c14_183 = arith.constant 14 : index
    %c0_184 = arith.constant 0 : index
    %214 = vector.load %arg2[%c0_182, %213, %c14_183, %c0_184] : memref<1x6x42x128xbf16, #tpu.memory_space<vmem>>, vector<1x1x24x128xbf16>
    %215 = vector.shape_cast %214 : vector<1x1x24x128xbf16> to vector<24x128xbf16>
    %c26 = arith.constant 26 : index
    %c0_185 = arith.constant 0 : index
    %c0_186 = arith.constant 0 : index
    %216 = vector.load %arg3[%c26, %c0_185, %c0_186] : memref<27x128x128xbf16, #tpu.memory_space<vmem>>, vector<1x128x128xbf16>
    %217 = vector.shape_cast %216 : vector<1x128x128xbf16> to vector<128x128xbf16>
    %cst_187 = arith.constant dense<0.000000e+00> : vector<24x128xf32>
    %218 = tpu.matmul %215, %217, %cst_187 {dimension_numbers = #tpu.dot_dimension_numbers<[1], [0], [0], [1], [0, 0, 1, 1], [], []>} : vector<24x128xbf16>, vector<128x128xbf16>, vector<24x128xf32> -> vector<24x128xf32>
    %219 = arith.addf %211, %218 : vector<24x128xf32>
    %c0_188 = arith.constant 0 : index
    %c0_189 = arith.constant 0 : index
    %c0_190 = arith.constant 0 : index
    %c0_191 = arith.constant 0 : index
    %220 = vector.load %arg5[%c0_188, %c0_189, %c0_190, %c0_191] : memref<1x1x24x4xbf16, #tpu.memory_space<vmem>>, vector<1x1x24x4xbf16>
    %221 = vector.shape_cast %220 : vector<1x1x24x4xbf16> to vector<24x4xbf16>
    %c0_192 = arith.constant 0 : index
    %c0_193 = arith.constant 0 : index
    %222 = vector.load %arg6[%c0_192, %c0_193] : memref<4x128xbf16, #tpu.memory_space<vmem>>, vector<4x128xbf16>
    %cst_194 = arith.constant dense<0.000000e+00> : vector<24x128xf32>
    %223 = tpu.matmul %221, %222, %cst_194 {dimension_numbers = #tpu.dot_dimension_numbers<[1], [0], [0], [1], [0, 0, 1, 1], [], []>} : vector<24x4xbf16>, vector<4x128xbf16>, vector<24x128xf32> -> vector<24x128xf32>
    %224 = arith.addf %219, %223 : vector<24x128xf32>
    %cst_195 = arith.constant 0.000000e+00 : f32
    %225 = vector.broadcast %cst_195 : f32 to vector<24x128xf32>
    %226 = arith.maximumf %224, %225 : vector<24x128xf32>
    %c0_196 = arith.constant 0 : index
    %c0_197 = arith.constant 0 : index
    %c0_198 = arith.constant 0 : index
    %c0_199 = arith.constant 0 : index
    %227 = vector.load %arg7[%c0_196, %c0_197, %c0_198, %c0_199] : memref<1x1x24x128xf32, #tpu.memory_space<vmem>>, vector<1x1x24x128xf32>
    %228 = vector.shape_cast %227 : vector<1x1x24x128xf32> to vector<24x128xf32>
    %229 = vector.shape_cast %226 : vector<24x128xf32> to vector<1x1x24x128xf32>
    tpu.vector_store %arg7[%c0_196, %c0_197, %c0_198, %c0_199], %229 {strides = array<i32>} : memref<1x1x24x128xf32, #tpu.memory_space<vmem>>, vector<1x1x24x128xf32>,
    return
  }
  func.func @transform_0(%arg0: i32, %arg1: i32) -> (i32, i32, i32, i32) {
    %c0_i32 = arith.constant 0 : i32
    %c0_i32_0 = arith.constant 0 : i32
    %c0_i32_1 = arith.constant 0 : i32
    %c0_i32_2 = arith.constant 0 : i32
    return %arg0, %c0_i32, %c0_i32_0, %c0_i32_1 : i32, i32, i32, i32
  }
  func.func @transform_1(%arg0: i32, %arg1: i32) -> (i32, i32, i32) {
    %c0_i32 = arith.constant 0 : i32
    %c0_i32_0 = arith.constant 0 : i32
    %c0_i32_1 = arith.constant 0 : i32
    %c0_i32_2 = arith.constant 0 : i32
    return %c0_i32, %c0_i32_0, %c0_i32_1 : i32, i32, i32
  }
  func.func @transform_2(%arg0: i32, %arg1: i32) -> (i32, i32) {
    %c0_i32 = arith.constant 0 : i32
    %c0_i32_0 = arith.constant 0 : i32
    %c0_i32_1 = arith.constant 0 : i32
    return %c0_i32, %c0_i32_0 : i32, i32
  }
  func.func @transform_3(%arg0: i32, %arg1: i32) -> (i32, i32, i32, i32) {
    %c0_i32 = arith.constant 0 : i32
    %c0_i32_0 = arith.constant 0 : i32
    %c0_i32_1 = arith.constant 0 : i32
    return %arg0, %arg1, %c0_i32, %c0_i32_0 : i32, i32, i32, i32
  }
  func.func @transform_4(%arg0: i32, %arg1: i32) -> (i32, i32) {
    %c0_i32 = arith.constant 0 : i32
    %c0_i32_0 = arith.constant 0 : i32
    %c0_i32_1 = arith.constant 0 : i32
    return %c0_i32, %c0_i32_0 : i32, i32
  }
  func.func @transform_5(%arg0: i32, %arg1: i32) -> (i32, i32, i32, i32) {
    %c0_i32 = arith.constant 0 : i32
    %c0_i32_0 = arith.constant 0 : i32
    %c0_i32_1 = arith.constant 0 : i32
    return %arg0, %arg1, %c0_i32, %c0_i32_0 : i32, i32, i32, i32
  }
}

</mosaic_0001>

<llo_original>
// kernel: basic3d_block_forward.2
$region0: #{basic3d_block_forward.2}
  #allocation0 [shape = 'u32[]', space=smem, size = 0x4, offset = 0x4, fixed_abs, tag = 'smem constant byte address 0x4 - core index']
  #allocation1 [shape = 'u32[144,128]{1,0:T(1,128)}', space=vmem, size = 0x12000, scoped, tag = 'internal scratch']
  %s0 = inlined_call_operand.vmem [shape: bf16[2,10,40,12], index: 0, kind: input, shape index: {}]
  %s1 = inlined_call_operand.vmem [shape: bf16[9,12,128], index: 1, kind: input, shape index: {}]
  %s2 = inlined_call_operand.vmem [shape: f32[1,128], index: 2, kind: input, shape index: {}]
  %s3 = inlined_call_operand.vmem [shape: bf16[2,4,16,128], index: 3, kind: output, shape index: {}]
  %s4 = sld [smem:[#allocation0]]
  $region45: #{basic3d_block_forward.2} parent=0
    _
  %s6 = ssub.s32 1, %s4
  %s7 = scalar_select 0, %s6, %s4
  loop: start=0, step=1, limit=10
  $region2: #{basic3d_block_forward.2} parent=0 // loop_pre_header
    _
  $region3: #{basic3d_block_forward.2} parent=0 // loop_header
    %s9 = sphi 0, %s13
    %p10 = scmp.ge.s32.totalorder %s9, 10
    %s16 = sphi 0, %s28
    %s17 = sphi 0, %s24
    %s18 = sphi 0, %s16
    %s19 = sphi 0, %s17
    %s20 = sphi 0, %s18
    %s21 = sphi 0, %s19
    %s31 = sphi 0, %s33
    %s34 = sphi 0, %s31
    %s35 = sphi 0, %s34
    %s51 = sphi 0, %s35
    %s55 = sphi 0, %s55
    %s57 = sphi 0, %s55
    %s58 = sphi 0, %s57
    %s72 = sphi 0, %s58
    %s76 = sphi 0, %s76
    %s78 = sphi 0, %s76
    %s79 = sphi 0, %s78
    %s93 = sphi 0, %s79
    %s101 = sphi 0, %s103
    %s104 = sphi 0, %s101
    %s105 = sphi 0, %s104
    %s121 = sphi 0, %s105
  $region4: #{basic3d_block_forward.2} parent=0 // loop_header_branch
    %12 = sbr.rel (%p10) target = $region8
  $region5: #{basic3d_block_forward.2} parent=0 // loop_body
    %s14 = ssub.s32 %s9, 1
    %s15 = ssub.s32 %s9, 2
    %s22 = sadd.s32 1, %s17
    %p23 = scmp.ge.s32.totalorder %s22, 4
    %s24 = scalar_select %p23, 0, %s22
    %s25 = sadd.s32 1, %s16
    %s26 = scalar_select %p23, %s25, %s16
    %p27 = scmp.ge.s32.totalorder %s26, 2
    %s28 = scalar_select %p27, 0, %s26
    %s29 = ssub.s32 %s16, %s28
    %p30 = scmp.eq.s32.totalorder %s29, 0
    %s32 = sadd.s32 %s31, 1
    %s33 = scalar_select %p30, %s31, %s32
    %p36 = pneg %p30
    %p37 = scmp.eq.s32.totalorder %s9, 7
    %p38 = por %p36, %p37
    %p39 = scmp.ne.s32.totalorder %s31, %s34
    %p40 = scmp.eq.s32.totalorder %s9, 0
    %p41 = por %p39, %p40
    %p42 = scmp.ne.s32.totalorder %s31, %s34
    %p43 = scmp.eq.s32.totalorder %s14, 7
    %p44 = por %p42, %p43
    %p45 = scmp.ne.s32.totalorder %s34, %s35
    %p46 = scmp.eq.s32.totalorder %s14, 0
    %p47 = por %p45, %p46
    %p48 = scmp.ne.s32.totalorder %s34, %s35
    %p49 = scmp.eq.s32.totalorder %s15, 7
    %p50 = por %p48, %p49
    %p52 = scmp.ne.s32.totalorder %s35, %s51
    %p53 = scmp.eq.s32.totalorder %s15, 0
    %p54 = por %p52, %p53
    %s56 = sadd.s32 %s55, 1
    %p59 = scmp.eq.s32.totalorder %s9, 7
    %p60 = scmp.ne.s32.totalorder %s55, %s57
    %p61 = scmp.eq.s32.totalorder %s9, 0
    %p62 = por %p60, %p61
    %p63 = scmp.ne.s32.totalorder %s55, %s57
    %p64 = scmp.eq.s32.totalorder %s14, 7
    %p65 = por %p63, %p64
    %p66 = scmp.ne.s32.totalorder %s57, %s58
    %p67 = scmp.eq.s32.totalorder %s14, 0
    %p68 = por %p66, %p67
    %p69 = scmp.ne.s32.totalorder %s57, %s58
    %p70 = scmp.eq.s32.totalorder %s15, 7
    %p71 = por %p69, %p70
    %p73 = scmp.ne.s32.totalorder %s58, %s72
    %p74 = scmp.eq.s32.totalorder %s15, 0
    %p75 = por %p73, %p74
    %s77 = sadd.s32 %s76, 1
    %p80 = scmp.eq.s32.totalorder %s9, 7
    %p81 = scmp.ne.s32.totalorder %s76, %s78
    %p82 = scmp.eq.s32.totalorder %s9, 0
    %p83 = por %p81, %p82
    %p84 = scmp.ne.s32.totalorder %s76, %s78
    %p85 = scmp.eq.s32.totalorder %s14, 7
    %p86 = por %p84, %p85
    %p87 = scmp.ne.s32.totalorder %s78, %s79
    %p88 = scmp.eq.s32.totalorder %s14, 0
    %p89 = por %p87, %p88
    %p90 = scmp.ne.s32.totalorder %s78, %s79
    %p91 = scmp.eq.s32.totalorder %s15, 7
    %p92 = por %p90, %p91
    %p94 = scmp.ne.s32.totalorder %s79, %s93
    %p95 = scmp.eq.s32.totalorder %s15, 0
    %p96 = por %p94, %p95
    %s97 = ssub.s32 %s16, %s28
    %s98 = ssub.s32 %s17, %s24
    %s99 = sor.u32 %s97, %s98
    %p100 = scmp.eq.s32.totalorder %s99, 0
    %s102 = sadd.s32 %s101, 1
    %s103 = scalar_select %p100, %s101, %s102
    %p106 = pneg %p100
    %p107 = scmp.eq.s32.totalorder %s9, 7
    %p108 = por %p106, %p107
    %p109 = scmp.ne.s32.totalorder %s101, %s104
    %p110 = scmp.eq.s32.totalorder %s9, 0
    %p111 = por %p109, %p110
    %p112 = scmp.ne.s32.totalorder %s101, %s104
    %p113 = scmp.eq.s32.totalorder %s14, 7
    %p114 = por %p112, %p113
    %p115 = scmp.ne.s32.totalorder %s104, %s105
    %p116 = scmp.eq.s32.totalorder %s14, 0
    %p117 = por %p115, %p116
    %p118 = scmp.ne.s32.totalorder %s104, %s105
    %p119 = scmp.eq.s32.totalorder %s15, 7
    %p120 = por %p118, %p119
    %p122 = scmp.ne.s32.totalorder %s105, %s121
    %p123 = scmp.eq.s32.totalorder %s15, 0
    %p124 = por %p122, %p123
    %p125 = scmp.le.s32.totalorder 1, %s9
    %p126 = scmp.lt.s32.totalorder %s9, 9
    %p127 = pnand %p125, %p126
    %p128 = pneg %p127
    // Predicated region
    $region9: #{basic3d_block_forward.2} parent=5 // pred_check
      _
    $region10: #{basic3d_block_forward.2} parent=5 // pred_check_branch
      %130 = sbr.rel (%p127) target = $region12
    $region11: #{basic3d_block_forward.2} parent=5 // pred_region
      %s131 = ssub.s32 %s9, 1
      // Predicated region
      $region13: #{basic3d_block_forward.2} parent=11 // pred_check
        %p132 = pneg %p68
      $region14: #{basic3d_block_forward.2} parent=11 // pred_check_branch
        %134 = sbr.rel (%p132) target = $region16
      $region15: #{basic3d_block_forward.2} parent=11 // pred_region
        _
      $region16: #{basic3d_block_forward.2} parent=11 // pred_fallthru
        _
      // Predicated region
      $region17: #{basic3d_block_forward.2} parent=11 // pred_check
        %p135 = pneg %p89
      $region18: #{basic3d_block_forward.2} parent=11 // pred_check_branch
        %137 = sbr.rel (%p135) target = $region20
      $region19: #{basic3d_block_forward.2} parent=11 // pred_region
        _
      $region20: #{basic3d_block_forward.2} parent=11 // pred_fallthru
        _
    $region12: #{basic3d_block_forward.2} parent=5 // pred_fallthru
      _
    %p138 = scmp.lt.s32.totalorder %s9, 8
    // Predicated region
    $region21: #{basic3d_block_forward.2} parent=5 // pred_check
      %p139 = pneg %p138
    $region22: #{basic3d_block_forward.2} parent=5 // pred_check_branch
      %141 = sbr.rel (%p139) target = $region24
    $region23: #{basic3d_block_forward.2} parent=5 // pred_region
      // Predicated region
      $region25: #{basic3d_block_forward.2} parent=23 // pred_check
        %p142 = pneg %p41
      $region26: #{basic3d_block_forward.2} parent=23 // pred_check_branch
        %144 = sbr.rel (%p142) target = $region28
      $region27: #{basic3d_block_forward.2} parent=23 // pred_region
        %p145 = scmp.lt.s32.totalorder %s16, 1
        %s146 = scalar_select %p145, %s16, 1
        %s147 = smul.addr %s146, 50
        %s148 = smul.addr %s147, 4
        %s149 = scalar_lea.vmem %s0, %s148
      $region28: #{basic3d_block_forward.2} parent=23 // pred_fallthru
        _
    $region24: #{basic3d_block_forward.2} parent=5 // pred_fallthru
      _
    %p150 = scmp.le.s32.totalorder 1, %s9
    %p151 = scmp.lt.s32.totalorder %s9, 9
    %p152 = pnand %p150, %p151
    %p153 = pneg %p152
    // Predicated region
    $region29: #{basic3d_block_forward.2} parent=5 // pred_check
      _
    $region30: #{basic3d_block_forward.2} parent=5 // pred_check_branch
      %155 = sbr.rel (%p152) target = $region32
    $region31: #{basic3d_block_forward.2} parent=5 // pred_region
      %s156 = ssub.s32 %s9, 1
      %p157 = scmp.lt.s32.totalorder %s18, 1
      %s158 = scalar_select %p157, %s18, 1
      %s159 = smul.addr %s158, 50
      %s160 = smul.addr %s159, 4
      %s161 = scalar_lea.vmem %s0, %s160
      %p162 = pneg %p47
      %p163 = pneg %p44
      %p164 = pneg %p68
      %p165 = pneg %p65
      %p166 = pneg %p89
      %p167 = pneg %p86
      %p168 = pneg %p117
      %p169 = pneg %p114
      %p170 = scmp.lt.s32.totalorder %s18, 1
      %s171 = scalar_select %p170, %s18, 1
      %p172 = scmp.lt.s32.totalorder %s19, 3
      %s173 = scalar_select %p172, %s19, 3
      %s174 = smul.addr %s173, 2
      %s175 = smul.addr %s171, 8
      %s176 = sadd.s32 %s174, %s175
      %s177 = smul.addr %s176, 4
      %s178 = scalar_lea.vmem %s3, %s177
      %p179 = scmp.lt.s32.totalorder %s18, 1
      %s180 = scalar_select %p179, %s18, 1
      %s181 = smul.addr %s180, 50
      %s182 = smul.addr %s181, 4
      %s183 = scalar_lea.vmem %s0, %s182
      %p184 = scmp.lt.s32.totalorder %s18, 1
      %s185 = scalar_select %p184, %s18, 1
      %p186 = scmp.lt.s32.totalorder %s19, 3
      %s187 = scalar_select %p186, %s19, 3
      %s188 = smul.addr %s187, 2
      %s189 = smul.addr %s185, 8
      %s190 = sadd.s32 %s188, %s189
      %s191 = smul.addr %s190, 4
      %s192 = scalar_lea.vmem %s3, %s191
      %s194 = smul.u32 %s19, 2
      %v195 = vld [vmem:[%s2] sm:$0x1]
      %v197 = vlaneseq
      %v198 = vshrl.u32 %v197, 7
      %v199 = vsub.s32 0, %v198
      %v200 = vrot.slane %v195, %v199
      %s202 = smul.u32 %s194, 5
      %s203 = smul.addr %s202, 4
      %s204 = scalar_lea.vmem %s183, %s203
      %v205 = vld [vmem:[%s204] sm:$0xf]
      %v206 = vld [vmem:[%s204 + $0x4] sm:$0xf]
      %v207 = vld [vmem:[%s1] sm:$0xf]
      %v208 = vld [vmem:[%s1 + $0x4] sm:$0x3]
      %v211 = vunpack.c.l.b16 %v205
      %v212 = vunpack.c.l.b16 %v206
      %v213 = vpack.c.b16 %v212, %v211
      %v216 = vunpack.c.l.b16 %v207
      %v217 = vunpack.c.l.b16 %v208
      %v218 = vpack.c.b16 %v217, %v216
      %vm219 = vcmask 97280
      %v221 = vsel %vm219, %v213, 0
      %vm223 = vcmask 1045504
      %v225 = vsel %vm223, %v218, 0
      %227 = vmatprep.subr.bf16.mxu0 0
      %228 = vmatpush1.bf16.msra.mxu0 0
      %229 = vmatprep.subr.bf16.mxu0 0
      %230 = vmatpush1.bf16.msra.mxu0 0
      %231 = vmatprep.subr.bf16.mxu0 0
      %232 = vmatpush1.bf16.msra.mxu0 0
      %233 = vmatprep.subr.bf16.mxu0 0
      %234 = vmatpush1.bf16.msra.mxu0 0
      %235 = vmatprep.subr.bf16.mxu0 0
      %236 = vmatpush1.bf16.msra.mxu0 0
      %237 = vmatprep.subr.bf16.mxu0 0
      %238 = vmatpush1.bf16.msra.mxu0 0
      %239 = vmatprep.subr.bf16.mxu0 0
      %240 = vmatpush1.bf16.msra.mxu0 0
      %241 = vmatprep.subr.bf16.mxu0 0
      %242 = vmatpush1.bf16.msra.mxu0 %v225
      %243 = vmatprep.subr.bf16.mxu0 0
      %244 = vmatpush2.bf16.msra.mxu0 0
      %245 = vmatprep.subr.bf16.mxu0 0
      %246 = vmatpush2.bf16.msra.mxu0 0
      %247 = vmatprep.subr.bf16.mxu0 0
      %248 = vmatpush2.bf16.msra.mxu0 0
      %249 = vmatprep.subr.bf16.mxu0 0
      %250 = vmatpush2.bf16.msra.mxu0 0
      %251 = vmatprep.subr.bf16.mxu0 0
      %252 = vmatpush2.bf16.msra.mxu0 0
      %253 = vmatprep.subr.bf16.mxu0 0
      %254 = vmatpush2.bf16.msra.mxu0 0
      %255 = vmatprep.subr.bf16.mxu0 0
      %256 = vmatpush2.bf16.msra.mxu0 0
      %257 = vmatprep.subr.bf16.mxu0 0
      %258 = vmatpush2.bf16.msra.mxu0 0
      %259 = vmatprep.mubr.bf16.mxu0 0
      %260 = vmatmul.mubr.bf16.gmra.mxu0 %v221
      %v261 = vpop.f32.mrf.mxu0
      %v262 = vadd.f32 0.0, %v261
      %v263 = vpop.f32.mrf.mxu0
      %v264 = vpop.f32.mrf.mxu0
      %v265 = vadd.f32 0.0, %v264
      %v266 = vpop.f32.mrf.mxu0
      %267 = vdwg.mxu0
      %v268 = vadd.f32 %v200, %v262
      %v269 = vadd.f32 %v200, %v265
      %v270 = vld [vmem:[%s204 + $0x8] sm:$0xc]
      %v271 = vld [vmem:[%s204 + $0xc] sm:$0xf]
      %v272 = vld [vmem:[%s204 + $0x10] sm:$0x3]
      %s273 = scalar_lea.vmem %s1, 8
      %v274 = vld [vmem:[%s273] sm:$0xf]
      %v275 = vld [vmem:[%s273 + $0x4] sm:$0x3]
      %v279 = vunpack.c.l.b16 %v270
      %v280 = vunpack.c.l.b16 %v271
      %v281 = vunpack.c.l.b16 %v272
      %v282 = vpack.c.b16 %v280, %v279
      %v283 = vpack.c.b16 %v281, %v281
      %vm284 = vcmask 1045504
      %v285 = vrot.slane %v282, 2
      %v286 = vrot.slane %v283, 2
      %v287 = vsel %vm284, %v285, %v286
      %v290 = vunpack.c.l.b16 %v274
      %v291 = vunpack.c.l.b16 %v275
      %v292 = vpack.c.b16 %v291, %v290
      %v294 = vsel %vm219, %v287, 0
      %v297 = vsel %vm223, %v292, 0
      %299 = vmatprep.subr.bf16.mxu0 0
      %300 = vmatpush1.bf16.msra.mxu0 0
      %301 = vmatprep.subr.bf16.mxu0 0
      %302 = vmatpush1.bf16.msra.mxu0 0
      %303 = vmatprep.subr.bf16.mxu0 0
      %304 = vmatpush1.bf16.msra.mxu0 0
      %305 = vmatprep.subr.bf16.mxu0 0
      %306 = vmatpush1.bf16.msra.mxu0 0
      %307 = vmatprep.subr.bf16.mxu0 0
      %308 = vmatpush1.bf16.msra.mxu0 0
      %309 = vmatprep.subr.bf16.mxu0 0
      %310 = vmatpush1.bf16.msra.mxu0 0
      %311 = vmatprep.subr.bf16.mxu0 0
      %312 = vmatpush1.bf16.msra.mxu0 0
      %313 = vmatprep.subr.bf16.mxu0 0
      %314 = vmatpush1.bf16.msra.mxu0 %v297
      %315 = vmatprep.subr.bf16.mxu0 0
      %316 = vmatpush2.bf16.msra.mxu0 0
      %317 = vmatprep.subr.bf16.mxu0 0
      %318 = vmatpush2.bf16.msra.mxu0 0
      %319 = vmatprep.subr.bf16.mxu0 0
      %320 = vmatpush2.bf16.msra.mxu0 0
      %321 = vmatprep.subr.bf16.mxu0 0
      %322 = vmatpush2.bf16.msra.mxu0 0
      %323 = vmatprep.subr.bf16.mxu0 0
      %324 = vmatpush2.bf16.msra.mxu0 0
      %325 = vmatprep.subr.bf16.mxu0 0
      %326 = vmatpush2.bf16.msra.mxu0 0
      %327 = vmatprep.subr.bf16.mxu0 0
      %328 = vmatpush2.bf16.msra.mxu0 0
      %329 = vmatprep.subr.bf16.mxu0 0
      %330 = vmatpush2.bf16.msra.mxu0 0
      %331 = vmatprep.mubr.bf16.mxu0 0
      %332 = vmatmul.mubr.bf16.gmra.mxu0 %v294
      %v333 = vpop.f32.mrf.mxu0
      %v334 = vadd.f32 0.0, %v333
      %v335 = vpop.f32.mrf.mxu0
      %v336 = vpop.f32.mrf.mxu0
      %v337 = vadd.f32 0.0, %v336
      %v338 = vpop.f32.mrf.mxu0
      %339 = vdwg.mxu0
      %v340 = vadd.f32 %v268, %v334
      %v341 = vadd.f32 %v269, %v337
      %v342 = vld [vmem:[%s204] sm:$0xc]
      %v343 = vld [vmem:[%s204 + $0x4] sm:$0xf]
      %v344 = vld [vmem:[%s204 + $0x8] sm:$0x3]
      %s345 = scalar_lea.vmem %s1, 16
      %v346 = vld [vmem:[%s345] sm:$0xf]
      %v347 = vld [vmem:[%s345 + $0x4] sm:$0x3]
      %v351 = vunpack.c.l.b16 %v342
      %v352 = vunpack.c.l.b16 %v343
      %v353 = vunpack.c.l.b16 %v344
      %v354 = vpack.c.b16 %v352, %v351
      %v355 = vpack.c.b16 %v353, %v353
      %v356 = vrot.slane %v354, 2
      %v357 = vrot.slane %v355, 2
      %v358 = vsel %vm284, %v356, %v357
      %v361 = vunpack.c.l.b16 %v346
      %v362 = vunpack.c.l.b16 %v347
      %v363 = vpack.c.b16 %v362, %v361
      %v365 = vsel %vm219, %v358, 0
      %v368 = vsel %vm223, %v363, 0
      %370 = vmatprep.subr.bf16.mxu0 0
      %371 = vmatpush1.bf16.msra.mxu0 0
      %372 = vmatprep.subr.bf16.mxu0 0
      %373 = vmatpush1.bf16.msra.mxu0 0
      %374 = vmatprep.subr.bf16.mxu0 0
      %375 = vmatpush1.bf16.msra.mxu0 0
      %376 = vmatprep.subr.bf16.mxu0 0
      %377 = vmatpush1.bf16.msra.mxu0 0
      %378 = vmatprep.subr.bf16.mxu0 0
      %379 = vmatpush1.bf16.msra.mxu0 0
      %380 = vmatprep.subr.bf16.mxu0 0
      %381 = vmatpush1.bf16.msra.mxu0 0
      %382 = vmatprep.subr.bf16.mxu0 0
      %383 = vmatpush1.bf16.msra.mxu0 0
      %384 = vmatprep.subr.bf16.mxu0 0
      %385 = vmatpush1.bf16.msra.mxu0 %v368
      %386 = vmatprep.subr.bf16.mxu0 0
      %387 = vmatpush2.bf16.msra.mxu0 0
      %388 = vmatprep.subr.bf16.mxu0 0
      %389 = vmatpush2.bf16.msra.mxu0 0
      %390 = vmatprep.subr.bf16.mxu0 0
      %391 = vmatpush2.bf16.msra.mxu0 0
      %392 = vmatprep.subr.bf16.mxu0 0
      %393 = vmatpush2.bf16.msra.mxu0 0
      %394 = vmatprep.subr.bf16.mxu0 0
      %395 = vmatpush2.bf16.msra.mxu0 0
      %396 = vmatprep.subr.bf16.mxu0 0
      %397 = vmatpush2.bf16.msra.mxu0 0
      %398 = vmatprep.subr.bf16.mxu0 0
      %399 = vmatpush2.bf16.msra.mxu0 0
      %400 = vmatprep.subr.bf16.mxu0 0
      %401 = vmatpush2.bf16.msra.mxu0 0
      %402 = vmatprep.mubr.bf16.mxu0 0
      %403 = vmatmul.mubr.bf16.gmra.mxu0 %v365
      %v404 = vpop.f32.mrf.mxu0
      %v405 = vadd.f32 0.0, %v404
      %v406 = vpop.f32.mrf.mxu0
      %v407 = vpop.f32.mrf.mxu0
      %v408 = vadd.f32 0.0, %v407
      %v409 = vpop.f32.mrf.mxu0
      %410 = vdwg.mxu0
      %v411 = vadd.f32 %v340, %v405
      %v412 = vadd.f32 %v341, %v408
      %s413 = sadd.s32 %s194, 1
      %s414 = smul.u32 %s413, 5
      %s415 = smul.addr %s414, 4
      %s416 = scalar_lea.vmem %s183, %s415
      %v417 = vld [vmem:[%s416] sm:$0xf]
      %v418 = vld [vmem:[%s416 + $0x4] sm:$0xf]
      %s419 = scalar_lea.vmem %s1, 24
      %v420 = vld [vmem:[%s419] sm:$0xf]
      %v421 = vld [vmem:[%s419 + $0x4] sm:$0x3]
      %v424 = vunpack.c.l.b16 %v417
      %v425 = vunpack.c.l.b16 %v418
      %v426 = vpack.c.b16 %v425, %v424
      %v429 = vunpack.c.l.b16 %v420
      %v430 = vunpack.c.l.b16 %v421
      %v431 = vpack.c.b16 %v430, %v429
      %v433 = vsel %vm219, %v426, 0
      %v436 = vsel %vm223, %v431, 0
      %438 = vmatprep.subr.bf16.mxu0 0
      %439 = vmatpush1.bf16.msra.mxu0 0
      %440 = vmatprep.subr.bf16.mxu0 0
      %441 = vmatpush1.bf16.msra.mxu0 0
      %442 = vmatprep.subr.bf16.mxu0 0
      %443 = vmatpush1.bf16.msra.mxu0 0
      %444 = vmatprep.subr.bf16.mxu0 0
      %445 = vmatpush1.bf16.msra.mxu0 0
      %446 = vmatprep.subr.bf16.mxu0 0
      %447 = vmatpush1.bf16.msra.mxu0 0
      %448 = vmatprep.subr.bf16.mxu0 0
      %449 = vmatpush1.bf16.msra.mxu0 0
      %450 = vmatprep.subr.bf16.mxu0 0
      %451 = vmatpush1.bf16.msra.mxu0 0
      %452 = vmatprep.subr.bf16.mxu0 0
      %453 = vmatpush1.bf16.msra.mxu0 %v436
      %454 = vmatprep.subr.bf16.mxu0 0
      %455 = vmatpush2.bf16.msra.mxu0 0
      %456 = vmatprep.subr.bf16.mxu0 0
      %457 = vmatpush2.bf16.msra.mxu0 0
      %458 = vmatprep.subr.bf16.mxu0 0
      %459 = vmatpush2.bf16.msra.mxu0 0
      %460 = vmatprep.subr.bf16.mxu0 0
      %461 = vmatpush2.bf16.msra.mxu0 0
      %462 = vmatprep.subr.bf16.mxu0 0
      %463 = vmatpush2.bf16.msra.mxu0 0
      %464 = vmatprep.subr.bf16.mxu0 0
      %465 = vmatpush2.bf16.msra.mxu0 0
      %466 = vmatprep.subr.bf16.mxu0 0
      %467 = vmatpush2.bf16.msra.mxu0 0
      %468 = vmatprep.subr.bf16.mxu0 0
      %469 = vmatpush2.bf16.msra.mxu0 0
      %470 = vmatprep.mubr.bf16.mxu0 0
      %471 = vmatmul.mubr.bf16.gmra.mxu0 %v433
      %v472 = vpop.f32.mrf.mxu0
      %v473 = vadd.f32 0.0, %v472
      %v474 = vpop.f32.mrf.mxu0
      %v475 = vpop.f32.mrf.mxu0
      %v476 = vadd.f32 0.0, %v475
      %v477 = vpop.f32.mrf.mxu0
      %478 = vdwg.mxu0
      %v479 = vadd.f32 %v411, %v473
      %v480 = vadd.f32 %v412, %v476
      %v481 = vld [vmem:[%s416 + $0x8] sm:$0xc]
      %v482 = vld [vmem:[%s416 + $0xc] sm:$0xf]
      %v483 = vld [vmem:[%s416 + $0x10] sm:$0x3]
      %s484 = scalar_lea.vmem %s1, 32
      %v485 = vld [vmem:[%s484] sm:$0xf]
      %v486 = vld [vmem:[%s484 + $0x4] sm:$0x3]
      %v490 = vunpack.c.l.b16 %v481
      %v491 = vunpack.c.l.b16 %v482
      %v492 = vunpack.c.l.b16 %v483
      %v493 = vpack.c.b16 %v491, %v490
      %v494 = vpack.c.b16 %v492, %v492
      %v495 = vrot.slane %v493, 2
      %v496 = vrot.slane %v494, 2
      %v497 = vsel %vm284, %v495, %v496
      %v500 = vunpack.c.l.b16 %v485
      %v501 = vunpack.c.l.b16 %v486
      %v502 = vpack.c.b16 %v501, %v500
      %v504 = vsel %vm219, %v497, 0
      %v507 = vsel %vm223, %v502, 0
      %509 = vmatprep.subr.bf16.mxu0 0
      %510 = vmatpush1.bf16.msra.mxu0 0
      %511 = vmatprep.subr.bf16.mxu0 0
      %512 = vmatpush1.bf16.msra.mxu0 0
      %513 = vmatprep.subr.bf16.mxu0 0
      %514 = vmatpush1.bf16.msra.mxu0 0
      %515 = vmatprep.subr.bf16.mxu0 0
      %516 = vmatpush1.bf16.msra.mxu0 0
      %517 = vmatprep.subr.bf16.mxu0 0
      %518 = vmatpush1.bf16.msra.mxu0 0
      %519 = vmatprep.subr.bf16.mxu0 0
      %520 = vmatpush1.bf16.msra.mxu0 0
      %521 = vmatprep.subr.bf16.mxu0 0
      %522 = vmatpush1.bf16.msra.mxu0 0
      %523 = vmatprep.subr.bf16.mxu0 0
      %524 = vmatpush1.bf16.msra.mxu0 %v507
      %525 = vmatprep.subr.bf16.mxu0 0
      %526 = vmatpush2.bf16.msra.mxu0 0
      %527 = vmatprep.subr.bf16.mxu0 0
      %528 = vmatpush2.bf16.msra.mxu0 0
      %529 = vmatprep.subr.bf16.mxu0 0
      %530 = vmatpush2.bf16.msra.mxu0 0
      %531 = vmatprep.subr.bf16.mxu0 0
      %532 = vmatpush2.bf16.msra.mxu0 0
      %533 = vmatprep.subr.bf16.mxu0 0
      %534 = vmatpush2.bf16.msra.mxu0 0
      %535 = vmatprep.subr.bf16.mxu0 0
      %536 = vmatpush2.bf16.msra.mxu0 0
      %537 = vmatprep.subr.bf16.mxu0 0
      %538 = vmatpush2.bf16.msra.mxu0 0
      %539 = vmatprep.subr.bf16.mxu0 0
      %540 = vmatpush2.bf16.msra.mxu0 0
      %541 = vmatprep.mubr.bf16.mxu0 0
      %542 = vmatmul.mubr.bf16.gmra.mxu0 %v504
      %v543 = vpop.f32.mrf.mxu0
      %v544 = vadd.f32 0.0, %v543
      %v545 = vpop.f32.mrf.mxu0
      %v546 = vpop.f32.mrf.mxu0
      %v547 = vadd.f32 0.0, %v546
      %v548 = vpop.f32.mrf.mxu0
      %549 = vdwg.mxu0
      %v550 = vadd.f32 %v479, %v544
      %v551 = vadd.f32 %v480, %v547
      %v552 = vld [vmem:[%s416] sm:$0xc]
      %v553 = vld [vmem:[%s416 + $0x4] sm:$0xf]
      %v554 = vld [vmem:[%s416 + $0x8] sm:$0x3]
      %s555 = scalar_lea.vmem %s1, 40
      %v556 = vld [vmem:[%s555] sm:$0xf]
      %v557 = vld [vmem:[%s555 + $0x4] sm:$0x3]
      %v561 = vunpack.c.l.b16 %v552
      %v562 = vunpack.c.l.b16 %v553
      %v563 = vunpack.c.l.b16 %v554
      %v564 = vpack.c.b16 %v562, %v561
      %v565 = vpack.c.b16 %v563, %v563
      %v566 = vrot.slane %v564, 2
      %v567 = vrot.slane %v565, 2
      %v568 = vsel %vm284, %v566, %v567
      %v571 = vunpack.c.l.b16 %v556
      %v572 = vunpack.c.l.b16 %v557
      %v573 = vpack.c.b16 %v572, %v571
      %v575 = vsel %vm219, %v568, 0
      %v578 = vsel %vm223, %v573, 0
      %580 = vmatprep.subr.bf16.mxu0 0
      %581 = vmatpush1.bf16.msra.mxu0 0
      %582 = vmatprep.subr.bf16.mxu0 0
      %583 = vmatpush1.bf16.msra.mxu0 0
      %584 = vmatprep.subr.bf16.mxu0 0
      %585 = vmatpush1.bf16.msra.mxu0 0
      %586 = vmatprep.subr.bf16.mxu0 0
      %587 = vmatpush1.bf16.msra.mxu0 0
      %588 = vmatprep.subr.bf16.mxu0 0
      %589 = vmatpush1.bf16.msra.mxu0 0
      %590 = vmatprep.subr.bf16.mxu0 0
      %591 = vmatpush1.bf16.msra.mxu0 0
      %592 = vmatprep.subr.bf16.mxu0 0
      %593 = vmatpush1.bf16.msra.mxu0 0
      %594 = vmatprep.subr.bf16.mxu0 0
      %595 = vmatpush1.bf16.msra.mxu0 %v578
      %596 = vmatprep.subr.bf16.mxu0 0
      %597 = vmatpush2.bf16.msra.mxu0 0
      %598 = vmatprep.subr.bf16.mxu0 0
      %599 = vmatpush2.bf16.msra.mxu0 0
      %600 = vmatprep.subr.bf16.mxu0 0
      %601 = vmatpush2.bf16.msra.mxu0 0
      %602 = vmatprep.subr.bf16.mxu0 0
      %603 = vmatpush2.bf16.msra.mxu0 0
      %604 = vmatprep.subr.bf16.mxu0 0
      %605 = vmatpush2.bf16.msra.mxu0 0
      %606 = vmatprep.subr.bf16.mxu0 0
      %607 = vmatpush2.bf16.msra.mxu0 0
      %608 = vmatprep.subr.bf16.mxu0 0
      %609 = vmatpush2.bf16.msra.mxu0 0
      %610 = vmatprep.subr.bf16.mxu0 0
      %611 = vmatpush2.bf16.msra.mxu0 0
      %612 = vmatprep.mubr.bf16.mxu0 0
      %613 = vmatmul.mubr.bf16.gmra.mxu0 %v575
      %v614 = vpop.f32.mrf.mxu0
      %v615 = vadd.f32 0.0, %v614
      %v616 = vpop.f32.mrf.mxu0
      %v617 = vpop.f32.mrf.mxu0
      %v618 = vadd.f32 0.0, %v617
      %v619 = vpop.f32.mrf.mxu0
      %620 = vdwg.mxu0
      %v621 = vadd.f32 %v550, %v615
      %v622 = vadd.f32 %v551, %v618
      %s623 = sadd.s32 %s194, 2
      %s624 = smul.u32 %s623, 5
      %s625 = smul.addr %s624, 4
      %s626 = scalar_lea.vmem %s183, %s625
      %v627 = vld [vmem:[%s626] sm:$0xf]
      %v628 = vld [vmem:[%s626 + $0x4] sm:$0xf]
      %s629 = scalar_lea.vmem %s1, 48
      %v630 = vld [vmem:[%s629] sm:$0xf]
      %v631 = vld [vmem:[%s629 + $0x4] sm:$0x3]
      %v634 = vunpack.c.l.b16 %v627
      %v635 = vunpack.c.l.b16 %v628
      %v636 = vpack.c.b16 %v635, %v634
      %v639 = vunpack.c.l.b16 %v630
      %v640 = vunpack.c.l.b16 %v631
      %v641 = vpack.c.b16 %v640, %v639
      %v643 = vsel %vm219, %v636, 0
      %v646 = vsel %vm223, %v641, 0
      %648 = vmatprep.subr.bf16.mxu0 0
      %649 = vmatpush1.bf16.msra.mxu0 0
      %650 = vmatprep.subr.bf16.mxu0 0
      %651 = vmatpush1.bf16.msra.mxu0 0
      %652 = vmatprep.subr.bf16.mxu0 0
      %653 = vmatpush1.bf16.msra.mxu0 0
      %654 = vmatprep.subr.bf16.mxu0 0
      %655 = vmatpush1.bf16.msra.mxu0 0
      %656 = vmatprep.subr.bf16.mxu0 0
      %657 = vmatpush1.bf16.msra.mxu0 0
      %658 = vmatprep.subr.bf16.mxu0 0
      %659 = vmatpush1.bf16.msra.mxu0 0
      %660 = vmatprep.subr.bf16.mxu0 0
      %661 = vmatpush1.bf16.msra.mxu0 0
      %662 = vmatprep.subr.bf16.mxu0 0
      %663 = vmatpush1.bf16.msra.mxu0 %v646
      %664 = vmatprep.subr.bf16.mxu0 0
      %665 = vmatpush2.bf16.msra.mxu0 0
      %666 = vmatprep.subr.bf16.mxu0 0
      %667 = vmatpush2.bf16.msra.mxu0 0
      %668 = vmatprep.subr.bf16.mxu0 0
      %669 = vmatpush2.bf16.msra.mxu0 0
      %670 = vmatprep.subr.bf16.mxu0 0
      %671 = vmatpush2.bf16.msra.mxu0 0
      %672 = vmatprep.subr.bf16.mxu0 0
      %673 = vmatpush2.bf16.msra.mxu0 0
      %674 = vmatprep.subr.bf16.mxu0 0
      %675 = vmatpush2.bf16.msra.mxu0 0
      %676 = vmatprep.subr.bf16.mxu0 0
      %677 = vmatpush2.bf16.msra.mxu0 0
      %678 = vmatprep.subr.bf16.mxu0 0
      %679 = vmatpush2.bf16.msra.mxu0 0
      %680 = vmatprep.mubr.bf16.mxu0 0
      %681 = vmatmul.mubr.bf16.gmra.mxu0 %v643
      %v682 = vpop.f32.mrf.mxu0
      %v683 = vadd.f32 0.0, %v682
      %v684 = vpop.f32.mrf.mxu0
      %v685 = vpop.f32.mrf.mxu0
      %v686 = vadd.f32 0.0, %v685
      %v687 = vpop.f32.mrf.mxu0
      %688 = vdwg.mxu0
      %v689 = vadd.f32 %v621, %v683
      %v690 = vadd.f32 %v622, %v686
      %v691 = vld [vmem:[%s626 + $0x8] sm:$0xc]
      %v692 = vld [vmem:[%s626 + $0xc] sm:$0xf]
      %v693 = vld [vmem:[%s626 + $0x10] sm:$0x3]
      %s694 = scalar_lea.vmem %s1, 56
      %v695 = vld [vmem:[%s694] sm:$0xf]
      %v696 = vld [vmem:[%s694 + $0x4] sm:$0x3]
      %v700 = vunpack.c.l.b16 %v691
      %v701 = vunpack.c.l.b16 %v692
      %v702 = vunpack.c.l.b16 %v693
      %v703 = vpack.c.b16 %v701, %v700
      %v704 = vpack.c.b16 %v702, %v702
      %v705 = vrot.slane %v703, 2
      %v706 = vrot.slane %v704, 2
      %v707 = vsel %vm284, %v705, %v706
      %v710 = vunpack.c.l.b16 %v695
      %v711 = vunpack.c.l.b16 %v696
      %v712 = vpack.c.b16 %v711, %v710
      %v714 = vsel %vm219, %v707, 0
      %v717 = vsel %vm223, %v712, 0
      %719 = vmatprep.subr.bf16.mxu0 0
      %720 = vmatpush1.bf16.msra.mxu0 0
      %721 = vmatprep.subr.bf16.mxu0 0
      %722 = vmatpush1.bf16.msra.mxu0 0
      %723 = vmatprep.subr.bf16.mxu0 0
      %724 = vmatpush1.bf16.msra.mxu0 0
      %725 = vmatprep.subr.bf16.mxu0 0
      %726 = vmatpush1.bf16.msra.mxu0 0
      %727 = vmatprep.subr.bf16.mxu0 0
      %728 = vmatpush1.bf16.msra.mxu0 0
      %729 = vmatprep.subr.bf16.mxu0 0
      %730 = vmatpush1.bf16.msra.mxu0 0
      %731 = vmatprep.subr.bf16.mxu0 0
      %732 = vmatpush1.bf16.msra.mxu0 0
      %733 = vmatprep.subr.bf16.mxu0 0
      %734 = vmatpush1.bf16.msra.mxu0 %v717
      %735 = vmatprep.subr.bf16.mxu0 0
      %736 = vmatpush2.bf16.msra.mxu0 0
      %737 = vmatprep.subr.bf16.mxu0 0
      %738 = vmatpush2.bf16.msra.mxu0 0
      %739 = vmatprep.subr.bf16.mxu0 0
      %740 = vmatpush2.bf16.msra.mxu0 0
      %741 = vmatprep.subr.bf16.mxu0 0
      %742 = vmatpush2.bf16.msra.mxu0 0
      %743 = vmatprep.subr.bf16.mxu0 0
      %744 = vmatpush2.bf16.msra.mxu0 0
      %745 = vmatprep.subr.bf16.mxu0 0
      %746 = vmatpush2.bf16.msra.mxu0 0
      %747 = vmatprep.subr.bf16.mxu0 0
      %748 = vmatpush2.bf16.msra.mxu0 0
      %749 = vmatprep.subr.bf16.mxu0 0
      %750 = vmatpush2.bf16.msra.mxu0 0
      %751 = vmatprep.mubr.bf16.mxu0 0
      %752 = vmatmul.mubr.bf16.gmra.mxu0 %v714
      %v753 = vpop.f32.mrf.mxu0
      %v754 = vadd.f32 0.0, %v753
      %v755 = vpop.f32.mrf.mxu0
      %v756 = vpop.f32.mrf.mxu0
      %v757 = vadd.f32 0.0, %v756
      %v758 = vpop.f32.mrf.mxu0
      %759 = vdwg.mxu0
      %v760 = vadd.f32 %v689, %v754
      %v761 = vadd.f32 %v690, %v757
      %v762 = vld [vmem:[%s626] sm:$0xc]
      %v763 = vld [vmem:[%s626 + $0x4] sm:$0xf]
      %v764 = vld [vmem:[%s626 + $0x8] sm:$0x3]
      %s765 = scalar_lea.vmem %s1, 64
      %v766 = vld [vmem:[%s765] sm:$0xf]
      %v767 = vld [vmem:[%s765 + $0x4] sm:$0x3]
      %v771 = vunpack.c.l.b16 %v762
      %v772 = vunpack.c.l.b16 %v763
      %v773 = vunpack.c.l.b16 %v764
      %v774 = vpack.c.b16 %v772, %v771
      %v775 = vpack.c.b16 %v773, %v773
      %v776 = vrot.slane %v774, 2
      %v777 = vrot.slane %v775, 2
      %v778 = vsel %vm284, %v776, %v777
      %v781 = vunpack.c.l.b16 %v766
      %v782 = vunpack.c.l.b16 %v767
      %v783 = vpack.c.b16 %v782, %v781
      %v785 = vsel %vm219, %v778, 0
      %v788 = vsel %vm223, %v783, 0
      %790 = vmatprep.subr.bf16.mxu0 0
      %791 = vmatpush1.bf16.msra.mxu0 0
      %792 = vmatprep.subr.bf16.mxu0 0
      %793 = vmatpush1.bf16.msra.mxu0 0
      %794 = vmatprep.subr.bf16.mxu0 0
      %795 = vmatpush1.bf16.msra.mxu0 0
      %796 = vmatprep.subr.bf16.mxu0 0
      %797 = vmatpush1.bf16.msra.mxu0 0
      %798 = vmatprep.subr.bf16.mxu0 0
      %799 = vmatpush1.bf16.msra.mxu0 0
      %800 = vmatprep.subr.bf16.mxu0 0
      %801 = vmatpush1.bf16.msra.mxu0 0
      %802 = vmatprep.subr.bf16.mxu0 0
      %803 = vmatpush1.bf16.msra.mxu0 0
      %804 = vmatprep.subr.bf16.mxu0 0
      %805 = vmatpush1.bf16.msra.mxu0 %v788
      %806 = vmatprep.subr.bf16.mxu0 0
      %807 = vmatpush2.bf16.msra.mxu0 0
      %808 = vmatprep.subr.bf16.mxu0 0
      %809 = vmatpush2.bf16.msra.mxu0 0
      %810 = vmatprep.subr.bf16.mxu0 0
      %811 = vmatpush2.bf16.msra.mxu0 0
      %812 = vmatprep.subr.bf16.mxu0 0
      %813 = vmatpush2.bf16.msra.mxu0 0
      %814 = vmatprep.subr.bf16.mxu0 0
      %815 = vmatpush2.bf16.msra.mxu0 0
      %816 = vmatprep.subr.bf16.mxu0 0
      %817 = vmatpush2.bf16.msra.mxu0 0
      %818 = vmatprep.subr.bf16.mxu0 0
      %819 = vmatpush2.bf16.msra.mxu0 0
      %820 = vmatprep.subr.bf16.mxu0 0
      %821 = vmatpush2.bf16.msra.mxu0 0
      %822 = vmatprep.mubr.bf16.mxu0 0
      %823 = vmatmul.mubr.bf16.gmra.mxu0 %v785
      %v824 = vpop.f32.mrf.mxu0
      %v825 = vadd.f32 0.0, %v824
      %v826 = vpop.f32.mrf.mxu0
      %v827 = vpop.f32.mrf.mxu0
      %v828 = vadd.f32 0.0, %v827
      %v829 = vpop.f32.mrf.mxu0
      %830 = vdwg.mxu0
      %v831 = vadd.f32 %v760, %v825
      %v832 = vadd.f32 %v761, %v828
      %v833 = vmax.f32 %v831, 0.0
      %v834 = vmax.f32 %v832, 0.0
      %v835 = vpack.c.bf16 %v834, %v833
      %v837 = vunpack.c.l.b16 %v835
      %v838 = vunpack.c.h.b16 %v835
      %v839 = vpack.c.b16 %v837, %v837
      %v840 = vpack.c.b16 %v838, %v838
      %843 = vst [vmem:[%s192] sm:$0xf] %v839
      %844 = vst [vmem:[%s192 + $0x4] sm:$0xf] %v840
      %p845 = scmp.lt.s32.totalorder %s18, 1
      %s846 = scalar_select %p845, %s18, 1
      %p847 = scmp.lt.s32.totalorder %s19, 3
      %s848 = scalar_select %p847, %s19, 3
      %s849 = smul.addr %s848, 2
      %s850 = smul.addr %s846, 8
      %s851 = sadd.s32 %s849, %s850
      %s852 = smul.addr %s851, 4
      %s853 = scalar_lea.vmem %s3, %s852
      // Predicated region
      $region33: #{basic3d_block_forward.2} parent=31 // pred_check
        %p854 = pneg %p114
      $region34: #{basic3d_block_forward.2} parent=31 // pred_check_branch
        %856 = sbr.rel (%p854) target = $region36
      $region35: #{basic3d_block_forward.2} parent=31 // pred_region
        _
      $region36: #{basic3d_block_forward.2} parent=31 // pred_fallthru
        _
    $region32: #{basic3d_block_forward.2} parent=5 // pred_fallthru
      _
    %p857 = scmp.le.s32.totalorder 2, %s9
    // Predicated region
    $region37: #{basic3d_block_forward.2} parent=5 // pred_check
      %p858 = pneg %p857
    $region38: #{basic3d_block_forward.2} parent=5 // pred_check_branch
      %860 = sbr.rel (%p858) target = $region40
    $region39: #{basic3d_block_forward.2} parent=5 // pred_region
      %s861 = ssub.s32 %s9, 2
      // Predicated region
      $region41: #{basic3d_block_forward.2} parent=39 // pred_check
        %p862 = pneg %p120
      $region42: #{basic3d_block_forward.2} parent=39 // pred_check_branch
        %864 = sbr.rel (%p862) target = $region44
      $region43: #{basic3d_block_forward.2} parent=39 // pred_region
        %p865 = scmp.lt.s32.totalorder %s20, 1
        %s866 = scalar_select %p865, %s20, 1
        %p867 = scmp.lt.s32.totalorder %s21, 3
        %s868 = scalar_select %p867, %s21, 3
        %s869 = smul.addr %s868, 2
        %s870 = smul.addr %s866, 8
        %s871 = sadd.s32 %s869, %s870
        %s872 = smul.addr %s871, 4
        %s873 = scalar_lea.vmem %s3, %s872
      $region44: #{basic3d_block_forward.2} parent=39 // pred_fallthru
        _
    $region40: #{basic3d_block_forward.2} parent=5 // pred_fallthru
      _
  $region6: #{basic3d_block_forward.2} parent=0 // loop_footer
    %s13 = sadd.s32 1, %s9
  $region7: #{basic3d_block_forward.2} parent=0 // loop_footer_branch
    %8 = sbr.rel target = $region3
  $region8: #{basic3d_block_forward.2} parent=0 // loop_exit
    _

// kernel: basic3d_block_forward.3
$region0: #{basic3d_block_forward.3}
  #allocation0 [shape = 'u32[]', space=smem, size = 0x4, offset = 0x4, fixed_abs, tag = 'smem constant byte address 0x4 - core index']
  #allocation1 [shape = 'u32[144,128]{1,0:T(1,128)}', space=vmem, size = 0x12000, scoped, tag = 'internal scratch']
  %s0 = inlined_call_operand.vmem [shape: bf16[2,6,42,128], index: 0, kind: input, shape index: {}]
  %s1 = inlined_call_operand.vmem [shape: bf16[27,128,128], index: 1, kind: input, shape index: {}]
  %s2 = inlined_call_operand.vmem [shape: f32[1,128], index: 2, kind: input, shape index: {}]
  %s3 = inlined_call_operand.vmem [shape: bf16[2,4,24,4], index: 3, kind: input, shape index: {}]
  %s4 = inlined_call_operand.vmem [shape: bf16[4,128], index: 4, kind: input, shape index: {}]
  %s5 = inlined_call_operand.vmem [shape: f32[2,4,24,128], index: 5, kind: output, shape index: {}]
  %s6 = sld [smem:[#allocation0]]
  $region53: #{basic3d_block_forward.3} parent=0
    _
  %s8 = ssub.s32 1, %s6
  %s9 = scalar_select 0, %s8, %s6
  loop: start=0, step=1, limit=10
  $region2: #{basic3d_block_forward.3} parent=0 // loop_pre_header
    _
  $region3: #{basic3d_block_forward.3} parent=0 // loop_header
    %s11 = sphi 0, %s15
    %p12 = scmp.ge.s32.totalorder %s11, 10
    %s18 = sphi 0, %s30
    %s19 = sphi 0, %s26
    %s20 = sphi 0, %s18
    %s21 = sphi 0, %s19
    %s22 = sphi 0, %s20
    %s23 = sphi 0, %s21
    %s33 = sphi 0, %s35
    %s36 = sphi 0, %s33
    %s37 = sphi 0, %s36
    %s53 = sphi 0, %s37
    %s57 = sphi 0, %s57
    %s59 = sphi 0, %s57
    %s60 = sphi 0, %s59
    %s74 = sphi 0, %s60
    %s78 = sphi 0, %s78
    %s80 = sphi 0, %s78
    %s81 = sphi 0, %s80
    %s95 = sphi 0, %s81
    %s103 = sphi 0, %s105
    %s106 = sphi 0, %s103
    %s107 = sphi 0, %s106
    %s123 = sphi 0, %s107
    %s127 = sphi 0, %s127
    %s129 = sphi 0, %s127
    %s130 = sphi 0, %s129
    %s144 = sphi 0, %s130
    %s152 = sphi 0, %s154
    %s155 = sphi 0, %s152
    %s156 = sphi 0, %s155
    %s172 = sphi 0, %s156
  $region4: #{basic3d_block_forward.3} parent=0 // loop_header_branch
    %14 = sbr.rel (%p12) target = $region8
  $region5: #{basic3d_block_forward.3} parent=0 // loop_body
    %s16 = ssub.s32 %s11, 1
    %s17 = ssub.s32 %s11, 2
    %s24 = sadd.s32 1, %s19
    %p25 = scmp.ge.s32.totalorder %s24, 4
    %s26 = scalar_select %p25, 0, %s24
    %s27 = sadd.s32 1, %s18
    %s28 = scalar_select %p25, %s27, %s18
    %p29 = scmp.ge.s32.totalorder %s28, 2
    %s30 = scalar_select %p29, 0, %s28
    %s31 = ssub.s32 %s18, %s30
    %p32 = scmp.eq.s32.totalorder %s31, 0
    %s34 = sadd.s32 %s33, 1
    %s35 = scalar_select %p32, %s33, %s34
    %p38 = pneg %p32
    %p39 = scmp.eq.s32.totalorder %s11, 7
    %p40 = por %p38, %p39
    %p41 = scmp.ne.s32.totalorder %s33, %s36
    %p42 = scmp.eq.s32.totalorder %s11, 0
    %p43 = por %p41, %p42
    %p44 = scmp.ne.s32.totalorder %s33, %s36
    %p45 = scmp.eq.s32.totalorder %s16, 7
    %p46 = por %p44, %p45
    %p47 = scmp.ne.s32.totalorder %s36, %s37
    %p48 = scmp.eq.s32.totalorder %s16, 0
    %p49 = por %p47, %p48
    %p50 = scmp.ne.s32.totalorder %s36, %s37
    %p51 = scmp.eq.s32.totalorder %s17, 7
    %p52 = por %p50, %p51
    %p54 = scmp.ne.s32.totalorder %s37, %s53
    %p55 = scmp.eq.s32.totalorder %s17, 0
    %p56 = por %p54, %p55
    %s58 = sadd.s32 %s57, 1
    %p61 = scmp.eq.s32.totalorder %s11, 7
    %p62 = scmp.ne.s32.totalorder %s57, %s59
    %p63 = scmp.eq.s32.totalorder %s11, 0
    %p64 = por %p62, %p63
    %p65 = scmp.ne.s32.totalorder %s57, %s59
    %p66 = scmp.eq.s32.totalorder %s16, 7
    %p67 = por %p65, %p66
    %p68 = scmp.ne.s32.totalorder %s59, %s60
    %p69 = scmp.eq.s32.totalorder %s16, 0
    %p70 = por %p68, %p69
    %p71 = scmp.ne.s32.totalorder %s59, %s60
    %p72 = scmp.eq.s32.totalorder %s17, 7
    %p73 = por %p71, %p72
    %p75 = scmp.ne.s32.totalorder %s60, %s74
    %p76 = scmp.eq.s32.totalorder %s17, 0
    %p77 = por %p75, %p76
    %s79 = sadd.s32 %s78, 1
    %p82 = scmp.eq.s32.totalorder %s11, 7
    %p83 = scmp.ne.s32.totalorder %s78, %s80
    %p84 = scmp.eq.s32.totalorder %s11, 0
    %p85 = por %p83, %p84
    %p86 = scmp.ne.s32.totalorder %s78, %s80
    %p87 = scmp.eq.s32.totalorder %s16, 7
    %p88 = por %p86, %p87
    %p89 = scmp.ne.s32.totalorder %s80, %s81
    %p90 = scmp.eq.s32.totalorder %s16, 0
    %p91 = por %p89, %p90
    %p92 = scmp.ne.s32.totalorder %s80, %s81
    %p93 = scmp.eq.s32.totalorder %s17, 7
    %p94 = por %p92, %p93
    %p96 = scmp.ne.s32.totalorder %s81, %s95
    %p97 = scmp.eq.s32.totalorder %s17, 0
    %p98 = por %p96, %p97
    %s99 = ssub.s32 %s18, %s30
    %s100 = ssub.s32 %s19, %s26
    %s101 = sor.u32 %s99, %s100
    %p102 = scmp.eq.s32.totalorder %s101, 0
    %s104 = sadd.s32 %s103, 1
    %s105 = scalar_select %p102, %s103, %s104
    %p108 = pneg %p102
    %p109 = scmp.eq.s32.totalorder %s11, 7
    %p110 = por %p108, %p109
    %p111 = scmp.ne.s32.totalorder %s103, %s106
    %p112 = scmp.eq.s32.totalorder %s11, 0
    %p113 = por %p111, %p112
    %p114 = scmp.ne.s32.totalorder %s103, %s106
    %p115 = scmp.eq.s32.totalorder %s16, 7
    %p116 = por %p114, %p115
    %p117 = scmp.ne.s32.totalorder %s106, %s107
    %p118 = scmp.eq.s32.totalorder %s16, 0
    %p119 = por %p117, %p118
    %p120 = scmp.ne.s32.totalorder %s106, %s107
    %p121 = scmp.eq.s32.totalorder %s17, 7
    %p122 = por %p120, %p121
    %p124 = scmp.ne.s32.totalorder %s107, %s123
    %p125 = scmp.eq.s32.totalorder %s17, 0
    %p126 = por %p124, %p125
    %s128 = sadd.s32 %s127, 1
    %p131 = scmp.eq.s32.totalorder %s11, 7
    %p132 = scmp.ne.s32.totalorder %s127, %s129
    %p133 = scmp.eq.s32.totalorder %s11, 0
    %p134 = por %p132, %p133
    %p135 = scmp.ne.s32.totalorder %s127, %s129
    %p136 = scmp.eq.s32.totalorder %s16, 7
    %p137 = por %p135, %p136
    %p138 = scmp.ne.s32.totalorder %s129, %s130
    %p139 = scmp.eq.s32.totalorder %s16, 0
    %p140 = por %p138, %p139
    %p141 = scmp.ne.s32.totalorder %s129, %s130
    %p142 = scmp.eq.s32.totalorder %s17, 7
    %p143 = por %p141, %p142
    %p145 = scmp.ne.s32.totalorder %s130, %s144
    %p146 = scmp.eq.s32.totalorder %s17, 0
    %p147 = por %p145, %p146
    %s148 = ssub.s32 %s18, %s30
    %s149 = ssub.s32 %s19, %s26
    %s150 = sor.u32 %s148, %s149
    %p151 = scmp.eq.s32.totalorder %s150, 0
    %s153 = sadd.s32 %s152, 1
    %s154 = scalar_select %p151, %s152, %s153
    %p157 = pneg %p151
    %p158 = scmp.eq.s32.totalorder %s11, 7
    %p159 = por %p157, %p158
    %p160 = scmp.ne.s32.totalorder %s152, %s155
    %p161 = scmp.eq.s32.totalorder %s11, 0
    %p162 = por %p160, %p161
    %p163 = scmp.ne.s32.totalorder %s152, %s155
    %p164 = scmp.eq.s32.totalorder %s16, 7
    %p165 = por %p163, %p164
    %p166 = scmp.ne.s32.totalorder %s155, %s156
    %p167 = scmp.eq.s32.totalorder %s16, 0
    %p168 = por %p166, %p167
    %p169 = scmp.ne.s32.totalorder %s155, %s156
    %p170 = scmp.eq.s32.totalorder %s17, 7
    %p171 = por %p169, %p170
    %p173 = scmp.ne.s32.totalorder %s156, %s172
    %p174 = scmp.eq.s32.totalorder %s17, 0
    %p175 = por %p173, %p174
    %p176 = scmp.le.s32.totalorder 1, %s11
    %p177 = scmp.lt.s32.totalorder %s11, 9
    %p178 = pnand %p176, %p177
    %p179 = pneg %p178
    // Predicated region
    $region9: #{basic3d_block_forward.3} parent=5 // pred_check
      _
    $region10: #{basic3d_block_forward.3} parent=5 // pred_check_branch
      %181 = sbr.rel (%p178) target = $region12
    $region11: #{basic3d_block_forward.3} parent=5 // pred_region
      %s182 = ssub.s32 %s11, 1
      // Predicated region
      $region13: #{basic3d_block_forward.3} parent=11 // pred_check
        %p183 = pneg %p70
      $region14: #{basic3d_block_forward.3} parent=11 // pred_check_branch
        %185 = sbr.rel (%p183) target = $region16
      $region15: #{basic3d_block_forward.3} parent=11 // pred_region
        _
      $region16: #{basic3d_block_forward.3} parent=11 // pred_fallthru
        _
      // Predicated region
      $region17: #{basic3d_block_forward.3} parent=11 // pred_check
        %p186 = pneg %p91
      $region18: #{basic3d_block_forward.3} parent=11 // pred_check_branch
        %188 = sbr.rel (%p186) target = $region20
      $region19: #{basic3d_block_forward.3} parent=11 // pred_region
        _
      $region20: #{basic3d_block_forward.3} parent=11 // pred_fallthru
        _
      // Predicated region
      $region21: #{basic3d_block_forward.3} parent=11 // pred_check
        %p189 = pneg %p140
      $region22: #{basic3d_block_forward.3} parent=11 // pred_check_branch
        %191 = sbr.rel (%p189) target = $region24
      $region23: #{basic3d_block_forward.3} parent=11 // pred_region
        _
      $region24: #{basic3d_block_forward.3} parent=11 // pred_fallthru
        _
    $region12: #{basic3d_block_forward.3} parent=5 // pred_fallthru
      _
    %p192 = scmp.lt.s32.totalorder %s11, 8
    // Predicated region
    $region25: #{basic3d_block_forward.3} parent=5 // pred_check
      %p193 = pneg %p192
    $region26: #{basic3d_block_forward.3} parent=5 // pred_check_branch
      %195 = sbr.rel (%p193) target = $region28
    $region27: #{basic3d_block_forward.3} parent=5 // pred_region
      // Predicated region
      $region29: #{basic3d_block_forward.3} parent=27 // pred_check
        %p196 = pneg %p43
      $region30: #{basic3d_block_forward.3} parent=27 // pred_check_branch
        %198 = sbr.rel (%p196) target = $region32
      $region31: #{basic3d_block_forward.3} parent=27 // pred_region
        %p199 = scmp.lt.s32.totalorder %s18, 1
        %s200 = scalar_select %p199, %s18, 1
        %s201 = smul.addr %s200, 36
        %s202 = smul.addr %s201, 4
        %s203 = scalar_lea.vmem %s0, %s202
      $region32: #{basic3d_block_forward.3} parent=27 // pred_fallthru
        _
      // Predicated region
      $region33: #{basic3d_block_forward.3} parent=27 // pred_check
        %p204 = pneg %p113
      $region34: #{basic3d_block_forward.3} parent=27 // pred_check_branch
        %206 = sbr.rel (%p204) target = $region36
      $region35: #{basic3d_block_forward.3} parent=27 // pred_region
        %p207 = scmp.lt.s32.totalorder %s18, 1
        %s208 = scalar_select %p207, %s18, 1
        %p209 = scmp.lt.s32.totalorder %s19, 3
        %s210 = scalar_select %p209, %s19, 3
        %s211 = smul.addr %s210, 3
        %s212 = smul.addr %s208, 12
        %s213 = sadd.s32 %s211, %s212
        %s214 = smul.addr %s213, 4
        %s215 = scalar_lea.vmem %s3, %s214
      $region36: #{basic3d_block_forward.3} parent=27 // pred_fallthru
        _
    $region28: #{basic3d_block_forward.3} parent=5 // pred_fallthru
      _
    %p216 = scmp.le.s32.totalorder 1, %s11
    %p217 = scmp.lt.s32.totalorder %s11, 9
    %p218 = pnand %p216, %p217
    %p219 = pneg %p218
    // Predicated region
    $region37: #{basic3d_block_forward.3} parent=5 // pred_check
      _
    $region38: #{basic3d_block_forward.3} parent=5 // pred_check_branch
      %221 = sbr.rel (%p218) target = $region40
    $region39: #{basic3d_block_forward.3} parent=5 // pred_region
      %s222 = ssub.s32 %s11, 1
      %p223 = scmp.lt.s32.totalorder %s20, 1
      %s224 = scalar_select %p223, %s20, 1
      %s225 = smul.addr %s224, 36
      %s226 = smul.addr %s225, 4
      %s227 = scalar_lea.vmem %s0, %s226
      %p228 = pneg %p49
      %p229 = pneg %p46
      %p230 = pneg %p70
      %p231 = pneg %p67
      %p232 = pneg %p91
      %p233 = pneg %p88
      %p234 = scmp.lt.s32.totalorder %s20, 1
      %s235 = scalar_select %p234, %s20, 1
      %p236 = scmp.lt.s32.totalorder %s21, 3
      %s237 = scalar_select %p236, %s21, 3
      %s238 = smul.addr %s237, 3
      %s239 = smul.addr %s235, 12
      %s240 = sadd.s32 %s238, %s239
      %s241 = smul.addr %s240, 4
      %s242 = scalar_lea.vmem %s3, %s241
      %p243 = pneg %p119
      %p244 = pneg %p116
      %p245 = pneg %p140
      %p246 = pneg %p137
      %p247 = pneg %p168
      %p248 = pneg %p165
      %p249 = scmp.lt.s32.totalorder %s20, 1
      %s250 = scalar_select %p249, %s20, 1
      %p251 = scmp.lt.s32.totalorder %s21, 3
      %s252 = scalar_select %p251, %s21, 3
      %s253 = smul.addr %s252, 3
      %s254 = smul.addr %s250, 12
      %s255 = sadd.s32 %s253, %s254
      %s256 = smul.addr %s255, 8
      %s257 = scalar_lea.vmem %s5, %s256
      %p258 = scmp.lt.s32.totalorder %s20, 1
      %s259 = scalar_select %p258, %s20, 1
      %s260 = smul.addr %s259, 36
      %s261 = smul.addr %s260, 4
      %s262 = scalar_lea.vmem %s0, %s261
      %p263 = scmp.lt.s32.totalorder %s20, 1
      %s264 = scalar_select %p263, %s20, 1
      %p265 = scmp.lt.s32.totalorder %s21, 3
      %s266 = scalar_select %p265, %s21, 3
      %s267 = smul.addr %s266, 3
      %s268 = smul.addr %s264, 12
      %s269 = sadd.s32 %s267, %s268
      %s270 = smul.addr %s269, 4
      %s271 = scalar_lea.vmem %s3, %s270
      %p272 = scmp.lt.s32.totalorder %s20, 1
      %s273 = scalar_select %p272, %s20, 1
      %p274 = scmp.lt.s32.totalorder %s21, 3
      %s275 = scalar_select %p274, %s21, 3
      %s276 = smul.addr %s275, 3
      %s277 = smul.addr %s273, 12
      %s278 = sadd.s32 %s276, %s277
      %s279 = smul.addr %s278, 8
      %s280 = scalar_lea.vmem %s5, %s279
      %v282 = vld [vmem:[%s2] sm:$0x1]
      %v284 = vlaneseq
      %v285 = vshrl.u32 %v284, 7
      %v286 = vsub.s32 0, %v285
      %v287 = vrot.slane %v282, %v286
      %s289 = smul.u32 %s21, 6
      %s290 = smul.addr %s289, 4
      %s291 = scalar_lea.vmem %s262, %s290
      %v292 = vld [vmem:[%s291] sm:$0xf]
      %v293 = vld [vmem:[%s291 + $0x4] sm:$0xf]
      %v294 = vld [vmem:[%s291 + $0x8] sm:$0xf]
      %v295 = vld [vmem:[%s1] sm:$0xf]
      %v296 = vld [vmem:[%s1 + $0x4] sm:$0xf]
      %v297 = vld [vmem:[%s1 + $0x8] sm:$0xf]
      %v298 = vld [vmem:[%s1 + $0xc] sm:$0xf]
      %v299 = vld [vmem:[%s1 + $0x10] sm:$0xf]
      %v300 = vld [vmem:[%s1 + $0x14] sm:$0xf]
      %v301 = vld [vmem:[%s1 + $0x18] sm:$0xf]
      %v302 = vld [vmem:[%s1 + $0x1c] sm:$0xf]
      %v303 = vld [vmem:[%s1 + $0x20] sm:$0xf]
      %v304 = vld [vmem:[%s1 + $0x24] sm:$0xf]
      %v305 = vld [vmem:[%s1 + $0x28] sm:$0xf]
      %v306 = vld [vmem:[%s1 + $0x2c] sm:$0xf]
      %v307 = vld [vmem:[%s1 + $0x30] sm:$0xf]
      %v308 = vld [vmem:[%s1 + $0x34] sm:$0xf]
      %v309 = vld [vmem:[%s1 + $0x38] sm:$0xf]
      %v310 = vld [vmem:[%s1 + $0x3c] sm:$0xf]
      %v314 = vunpack.c.l.b16 %v292
      %v315 = vunpack.c.l.b16 %v293
      %v316 = vunpack.c.l.b16 %v294
      %v317 = vpack.c.b16 %v315, %v314
      %v318 = vpack.c.b16 %v316, %v316
      %v337 = vunpack.c.l.b16 %v295
      %v338 = vunpack.c.l.b16 %v296
      %v339 = vunpack.c.l.b16 %v297
      %v340 = vunpack.c.l.b16 %v298
      %v341 = vunpack.c.l.b16 %v299
      %v342 = vunpack.c.l.b16 %v300
      %v343 = vunpack.c.l.b16 %v301
      %v344 = vunpack.c.l.b16 %v302
      %v345 = vunpack.c.l.b16 %v303
      %v346 = vunpack.c.l.b16 %v304
      %v347 = vunpack.c.l.b16 %v305
      %v348 = vunpack.c.l.b16 %v306
      %v349 = vunpack.c.l.b16 %v307
      %v350 = vunpack.c.l.b16 %v308
      %v351 = vunpack.c.l.b16 %v309
      %v352 = vunpack.c.l.b16 %v310
      %v353 = vpack.c.b16 %v338, %v337
      %v354 = vpack.c.b16 %v340, %v339
      %v355 = vpack.c.b16 %v342, %v341
      %v356 = vpack.c.b16 %v344, %v343
      %v357 = vpack.c.b16 %v346, %v345
      %v358 = vpack.c.b16 %v348, %v347
      %v359 = vpack.c.b16 %v350, %v349
      %v360 = vpack.c.b16 %v352, %v351
      %369 = vmatprep.subr.bf16.mxu0 0
      %370 = vmatpush1.bf16.msra.mxu0 %v360
      %371 = vmatprep.subr.bf16.mxu0 0
      %372 = vmatpush1.bf16.msra.mxu0 %v359
      %373 = vmatprep.subr.bf16.mxu0 0
      %374 = vmatpush1.bf16.msra.mxu0 %v358
      %375 = vmatprep.subr.bf16.mxu0 0
      %376 = vmatpush1.bf16.msra.mxu0 %v357
      %377 = vmatprep.subr.bf16.mxu0 0
      %378 = vmatpush1.bf16.msra.mxu0 %v356
      %379 = vmatprep.subr.bf16.mxu0 0
      %380 = vmatpush1.bf16.msra.mxu0 %v355
      %381 = vmatprep.subr.bf16.mxu0 0
      %382 = vmatpush1.bf16.msra.mxu0 %v354
      %383 = vmatprep.subr.bf16.mxu0 0
      %384 = vmatpush1.bf16.msra.mxu0 %v353
      %385 = vmatprep.subr.bf16.mxu0 0
      %386 = vmatpush2.bf16.msra.mxu0 0
      %387 = vmatprep.subr.bf16.mxu0 0
      %388 = vmatpush2.bf16.msra.mxu0 0
      %389 = vmatprep.subr.bf16.mxu0 0
      %390 = vmatpush2.bf16.msra.mxu0 0
      %391 = vmatprep.subr.bf16.mxu0 0
      %392 = vmatpush2.bf16.msra.mxu0 0
      %393 = vmatprep.subr.bf16.mxu0 0
      %394 = vmatpush2.bf16.msra.mxu0 0
      %395 = vmatprep.subr.bf16.mxu0 0
      %396 = vmatpush2.bf16.msra.mxu0 0
      %397 = vmatprep.subr.bf16.mxu0 0
      %398 = vmatpush2.bf16.msra.mxu0 0
      %399 = vmatprep.subr.bf16.mxu0 0
      %400 = vmatpush2.bf16.msra.mxu0 0
      %401 = vmatprep.mubr.bf16.mxu0 0
      %402 = vmatmul.mubr.bf16.gmra.mxu0 %v317
      %v403 = vpop.f32.mrf.mxu0
      %v404 = vadd.f32 0.0, %v403
      %v405 = vpop.f32.mrf.mxu0
      %v406 = vpop.f32.mrf.mxu0
      %v407 = vadd.f32 0.0, %v406
      %v408 = vpop.f32.mrf.mxu0
      %409 = vmatprep.mubr.bf16.mxu0 0
      %410 = vmatmul.mubr.bf16.gmra.mxu0 %v318
      %v411 = vpop.f32.mrf.mxu0
      %v412 = vadd.f32 0.0, %v411
      %v413 = vpop.f32.mrf.mxu0
      %v414 = vpop.f32.mrf.mxu0
      %v415 = vpop.f32.mrf.mxu0
      %416 = vdwg.mxu0
      %v417 = vadd.f32 %v287, %v404
      %v418 = vadd.f32 %v287, %v407
      %v419 = vadd.f32 %v287, %v412
      %v420 = vld [vmem:[%s291] sm:$0xf]
      %v421 = vld [vmem:[%s291 + $0x4] sm:$0xf]
      %v422 = vld [vmem:[%s291 + $0x8] sm:$0xf]
      %v423 = vld [vmem:[%s291 + $0xc] sm:$0x1]
      %s424 = scalar_lea.vmem %s1, 64
      %v425 = vld [vmem:[%s424] sm:$0xf]
      %v426 = vld [vmem:[%s424 + $0x4] sm:$0xf]
      %v427 = vld [vmem:[%s424 + $0x8] sm:$0xf]
      %v428 = vld [vmem:[%s424 + $0xc] sm:$0xf]
      %v429 = vld [vmem:[%s424 + $0x10] sm:$0xf]
      %v430 = vld [vmem:[%s424 + $0x14] sm:$0xf]
      %v431 = vld [vmem:[%s424 + $0x18] sm:$0xf]
      %v432 = vld [vmem:[%s424 + $0x1c] sm:$0xf]
      %v433 = vld [vmem:[%s424 + $0x20] sm:$0xf]
      %v434 = vld [vmem:[%s424 + $0x24] sm:$0xf]
      %v435 = vld [vmem:[%s424 + $0x28] sm:$0xf]
      %v436 = vld [vmem:[%s424 + $0x2c] sm:$0xf]
      %v437 = vld [vmem:[%s424 + $0x30] sm:$0xf]
      %v438 = vld [vmem:[%s424 + $0x34] sm:$0xf]
      %v439 = vld [vmem:[%s424 + $0x38] sm:$0xf]
      %v440 = vld [vmem:[%s424 + $0x3c] sm:$0xf]
      %v445 = vunpack.c.l.b16 %v420
      %v446 = vunpack.c.l.b16 %v421
      %v447 = vunpack.c.l.b16 %v422
      %v448 = vunpack.c.l.b16 %v423
      %v449 = vpack.c.b16 %v446, %v445
      %v450 = vpack.c.b16 %v448, %v447
      %vm451 = vsmask.f32 7424
      %v453 = vshrl.u32 %v449, 16
      %v455 = vshll.u32 %v449, 16
      %v457 = vrot.slane %v455, 1
      %v458 = vor.u32 %v453, %v457
      %v460 = vshll.u32 %v450, 16
      %v462 = vrot.slane %v460, 1
      %v463 = vsel %vm451, %v458, %v462
      %v464 = vshrl.u32 %v450, 16
      %v466 = vor.u32 %v464, %v462
      %v485 = vunpack.c.l.b16 %v425
      %v486 = vunpack.c.l.b16 %v426
      %v487 = vunpack.c.l.b16 %v427
      %v488 = vunpack.c.l.b16 %v428
      %v489 = vunpack.c.l.b16 %v429
      %v490 = vunpack.c.l.b16 %v430
      %v491 = vunpack.c.l.b16 %v431
      %v492 = vunpack.c.l.b16 %v432
      %v493 = vunpack.c.l.b16 %v433
      %v494 = vunpack.c.l.b16 %v434
      %v495 = vunpack.c.l.b16 %v435
      %v496 = vunpack.c.l.b16 %v436
      %v497 = vunpack.c.l.b16 %v437
      %v498 = vunpack.c.l.b16 %v438
      %v499 = vunpack.c.l.b16 %v439
      %v500 = vunpack.c.l.b16 %v440
      %v501 = vpack.c.b16 %v486, %v485
      %v502 = vpack.c.b16 %v488, %v487
      %v503 = vpack.c.b16 %v490, %v489
      %v504 = vpack.c.b16 %v492, %v491
      %v505 = vpack.c.b16 %v494, %v493
      %v506 = vpack.c.b16 %v496, %v495
      %v507 = vpack.c.b16 %v498, %v497
      %v508 = vpack.c.b16 %v500, %v499
      %517 = vmatprep.subr.bf16.mxu0 0
      %518 = vmatpush1.bf16.msra.mxu0 %v508
      %519 = vmatprep.subr.bf16.mxu0 0
      %520 = vmatpush1.bf16.msra.mxu0 %v507
      %521 = vmatprep.subr.bf16.mxu0 0
      %522 = vmatpush1.bf16.msra.mxu0 %v506
      %523 = vmatprep.subr.bf16.mxu0 0
      %524 = vmatpush1.bf16.msra.mxu0 %v505
      %525 = vmatprep.subr.bf16.mxu0 0
      %526 = vmatpush1.bf16.msra.mxu0 %v504
      %527 = vmatprep.subr.bf16.mxu0 0
      %528 = vmatpush1.bf16.msra.mxu0 %v503
      %529 = vmatprep.subr.bf16.mxu0 0
      %530 = vmatpush1.bf16.msra.mxu0 %v502
      %531 = vmatprep.subr.bf16.mxu0 0
      %532 = vmatpush1.bf16.msra.mxu0 %v501
      %533 = vmatprep.subr.bf16.mxu0 0
      %534 = vmatpush2.bf16.msra.mxu0 0
      %535 = vmatprep.subr.bf16.mxu0 0
      %536 = vmatpush2.bf16.msra.mxu0 0
      %537 = vmatprep.subr.bf16.mxu0 0
      %538 = vmatpush2.bf16.msra.mxu0 0
      %539 = vmatprep.subr.bf16.mxu0 0
      %540 = vmatpush2.bf16.msra.mxu0 0
      %541 = vmatprep.subr.bf16.mxu0 0
      %542 = vmatpush2.bf16.msra.mxu0 0
      %543 = vmatprep.subr.bf16.mxu0 0
      %544 = vmatpush2.bf16.msra.mxu0 0
      %545 = vmatprep.subr.bf16.mxu0 0
      %546 = vmatpush2.bf16.msra.mxu0 0
      %547 = vmatprep.subr.bf16.mxu0 0
      %548 = vmatpush2.bf16.msra.mxu0 0
      %549 = vmatprep.mubr.bf16.mxu0 0
      %550 = vmatmul.mubr.bf16.gmra.mxu0 %v463
      %v551 = vpop.f32.mrf.mxu0
      %v552 = vadd.f32 0.0, %v551
      %v553 = vpop.f32.mrf.mxu0
      %v554 = vpop.f32.mrf.mxu0
      %v555 = vadd.f32 0.0, %v554
      %v556 = vpop.f32.mrf.mxu0
      %557 = vmatprep.mubr.bf16.mxu0 0
      %558 = vmatmul.mubr.bf16.gmra.mxu0 %v466
      %v559 = vpop.f32.mrf.mxu0
      %v560 = vadd.f32 0.0, %v559
      %v561 = vpop.f32.mrf.mxu0
      %v562 = vpop.f32.mrf.mxu0
      %v563 = vpop.f32.mrf.mxu0
      %564 = vdwg.mxu0
      %v565 = vadd.f32 %v417, %v552
      %v566 = vadd.f32 %v418, %v555
      %v567 = vadd.f32 %v419, %v560
      %v568 = vld [vmem:[%s291] sm:$0xe]
      %s569 = scalar_lea.vmem %s1, 128
      %v570 = vld [vmem:[%s569] sm:$0xf]
      %v571 = vld [vmem:[%s569 + $0x4] sm:$0xf]
      %v572 = vld [vmem:[%s569 + $0x8] sm:$0xf]
      %v573 = vld [vmem:[%s569 + $0xc] sm:$0xf]
      %v574 = vld [vmem:[%s569 + $0x10] sm:$0xf]
      %v575 = vld [vmem:[%s569 + $0x14] sm:$0xf]
      %v576 = vld [vmem:[%s569 + $0x18] sm:$0xf]
      %v577 = vld [vmem:[%s569 + $0x1c] sm:$0xf]
      %v578 = vld [vmem:[%s569 + $0x20] sm:$0xf]
      %v579 = vld [vmem:[%s569 + $0x24] sm:$0xf]
      %v580 = vld [vmem:[%s569 + $0x28] sm:$0xf]
      %v581 = vld [vmem:[%s569 + $0x2c] sm:$0xf]
      %v582 = vld [vmem:[%s569 + $0x30] sm:$0xf]
      %v583 = vld [vmem:[%s569 + $0x34] sm:$0xf]
      %v584 = vld [vmem:[%s569 + $0x38] sm:$0xf]
      %v585 = vld [vmem:[%s569 + $0x3c] sm:$0xf]
      %v587 = vunpack.c.l.b16 %v568
      %v588 = vpack.c.b16 %v446, %v587
      %vm589 = vcmask 1046528
      %v590 = vrot.slane %v588, 1
      %v591 = vrot.slane %v450, 1
      %v592 = vsel %vm589, %v590, %v591
      %v611 = vunpack.c.l.b16 %v570
      %v612 = vunpack.c.l.b16 %v571
      %v613 = vunpack.c.l.b16 %v572
      %v614 = vunpack.c.l.b16 %v573
      %v615 = vunpack.c.l.b16 %v574
      %v616 = vunpack.c.l.b16 %v575
      %v617 = vunpack.c.l.b16 %v576
      %v618 = vunpack.c.l.b16 %v577
      %v619 = vunpack.c.l.b16 %v578
      %v620 = vunpack.c.l.b16 %v579
      %v621 = vunpack.c.l.b16 %v580
      %v622 = vunpack.c.l.b16 %v581
      %v623 = vunpack.c.l.b16 %v582
      %v624 = vunpack.c.l.b16 %v583
      %v625 = vunpack.c.l.b16 %v584
      %v626 = vunpack.c.l.b16 %v585
      %v627 = vpack.c.b16 %v612, %v611
      %v628 = vpack.c.b16 %v614, %v613
      %v629 = vpack.c.b16 %v616, %v615
      %v630 = vpack.c.b16 %v618, %v617
      %v631 = vpack.c.b16 %v620, %v619
      %v632 = vpack.c.b16 %v622, %v621
      %v633 = vpack.c.b16 %v624, %v623
      %v634 = vpack.c.b16 %v626, %v625
      %643 = vmatprep.subr.bf16.mxu0 0
      %644 = vmatpush1.bf16.msra.mxu0 %v634
      %645 = vmatprep.subr.bf16.mxu0 0
      %646 = vmatpush1.bf16.msra.mxu0 %v633
      %647 = vmatprep.subr.bf16.mxu0 0
      %648 = vmatpush1.bf16.msra.mxu0 %v632
      %649 = vmatprep.subr.bf16.mxu0 0
      %650 = vmatpush1.bf16.msra.mxu0 %v631
      %651 = vmatprep.subr.bf16.mxu0 0
      %652 = vmatpush1.bf16.msra.mxu0 %v630
      %653 = vmatprep.subr.bf16.mxu0 0
      %654 = vmatpush1.bf16.msra.mxu0 %v629
      %655 = vmatprep.subr.bf16.mxu0 0
      %656 = vmatpush1.bf16.msra.mxu0 %v628
      %657 = vmatprep.subr.bf16.mxu0 0
      %658 = vmatpush1.bf16.msra.mxu0 %v627
      %659 = vmatprep.subr.bf16.mxu0 0
      %660 = vmatpush2.bf16.msra.mxu0 0
      %661 = vmatprep.subr.bf16.mxu0 0
      %662 = vmatpush2.bf16.msra.mxu0 0
      %663 = vmatprep.subr.bf16.mxu0 0
      %664 = vmatpush2.bf16.msra.mxu0 0
      %665 = vmatprep.subr.bf16.mxu0 0
      %666 = vmatpush2.bf16.msra.mxu0 0
      %667 = vmatprep.subr.bf16.mxu0 0
      %668 = vmatpush2.bf16.msra.mxu0 0
      %669 = vmatprep.subr.bf16.mxu0 0
      %670 = vmatpush2.bf16.msra.mxu0 0
      %671 = vmatprep.subr.bf16.mxu0 0
      %672 = vmatpush2.bf16.msra.mxu0 0
      %673 = vmatprep.subr.bf16.mxu0 0
      %674 = vmatpush2.bf16.msra.mxu0 0
      %675 = vmatprep.mubr.bf16.mxu0 0
      %676 = vmatmul.mubr.bf16.gmra.mxu0 %v592
      %v677 = vpop.f32.mrf.mxu0
      %v678 = vadd.f32 0.0, %v677
      %v679 = vpop.f32.mrf.mxu0
      %v680 = vpop.f32.mrf.mxu0
      %v681 = vadd.f32 0.0, %v680
      %v682 = vpop.f32.mrf.mxu0
      %683 = vmatprep.mubr.bf16.mxu0 0
      %684 = vmatmul.mubr.bf16.gmra.mxu0 %v591
      %v685 = vpop.f32.mrf.mxu0
      %v686 = vadd.f32 0.0, %v685
      %v687 = vpop.f32.mrf.mxu0
      %v688 = vpop.f32.mrf.mxu0
      %v689 = vpop.f32.mrf.mxu0
      %690 = vdwg.mxu0
      %v691 = vadd.f32 %v565, %v678
      %v692 = vadd.f32 %v566, %v681
      %v693 = vadd.f32 %v567, %v686
      %v694 = vld [vmem:[%s291] sm:$0x8]
      %v695 = vld [vmem:[%s291 + $0xc] sm:$0x7]
      %s696 = scalar_lea.vmem %s1, 192
      %v697 = vld [vmem:[%s696] sm:$0xf]
      %v698 = vld [vmem:[%s696 + $0x4] sm:$0xf]
      %v699 = vld [vmem:[%s696 + $0x8] sm:$0xf]
      %v700 = vld [vmem:[%s696 + $0xc] sm:$0xf]
      %v701 = vld [vmem:[%s696 + $0x10] sm:$0xf]
      %v702 = vld [vmem:[%s696 + $0x14] sm:$0xf]
      %v703 = vld [vmem:[%s696 + $0x18] sm:$0xf]
      %v704 = vld [vmem:[%s696 + $0x1c] sm:$0xf]
      %v705 = vld [vmem:[%s696 + $0x20] sm:$0xf]
      %v706 = vld [vmem:[%s696 + $0x24] sm:$0xf]
      %v707 = vld [vmem:[%s696 + $0x28] sm:$0xf]
      %v708 = vld [vmem:[%s696 + $0x2c] sm:$0xf]
      %v709 = vld [vmem:[%s696 + $0x30] sm:$0xf]
      %v710 = vld [vmem:[%s696 + $0x34] sm:$0xf]
      %v711 = vld [vmem:[%s696 + $0x38] sm:$0xf]
      %v712 = vld [vmem:[%s696 + $0x3c] sm:$0xf]
      %v715 = vunpack.c.l.b16 %v694
      %v716 = vunpack.c.l.b16 %v695
      %v717 = vpack.c.b16 %v446, %v715
      %v718 = vpack.c.b16 %v716, %v447
      %vm719 = vcmask 1044480
      %v720 = vrot.slane %v717, 3
      %v721 = vrot.slane %v718, 3
      %v722 = vsel %vm719, %v720, %v721
      %v741 = vunpack.c.l.b16 %v697
      %v742 = vunpack.c.l.b16 %v698
      %v743 = vunpack.c.l.b16 %v699
      %v744 = vunpack.c.l.b16 %v700
      %v745 = vunpack.c.l.b16 %v701
      %v746 = vunpack.c.l.b16 %v702
      %v747 = vunpack.c.l.b16 %v703
      %v748 = vunpack.c.l.b16 %v704
      %v749 = vunpack.c.l.b16 %v705
      %v750 = vunpack.c.l.b16 %v706
      %v751 = vunpack.c.l.b16 %v707
      %v752 = vunpack.c.l.b16 %v708
      %v753 = vunpack.c.l.b16 %v709
      %v754 = vunpack.c.l.b16 %v710
      %v755 = vunpack.c.l.b16 %v711
      %v756 = vunpack.c.l.b16 %v712
      %v757 = vpack.c.b16 %v742, %v741
      %v758 = vpack.c.b16 %v744, %v743
      %v759 = vpack.c.b16 %v746, %v745
      %v760 = vpack.c.b16 %v748, %v747
      %v761 = vpack.c.b16 %v750, %v749
      %v762 = vpack.c.b16 %v752, %v751
      %v763 = vpack.c.b16 %v754, %v753
      %v764 = vpack.c.b16 %v756, %v755
      %773 = vmatprep.subr.bf16.mxu0 0
      %774 = vmatpush1.bf16.msra.mxu0 %v764
      %775 = vmatprep.subr.bf16.mxu0 0
      %776 = vmatpush1.bf16.msra.mxu0 %v763
      %777 = vmatprep.subr.bf16.mxu0 0
      %778 = vmatpush1.bf16.msra.mxu0 %v762
      %779 = vmatprep.subr.bf16.mxu0 0
      %780 = vmatpush1.bf16.msra.mxu0 %v761
      %781 = vmatprep.subr.bf16.mxu0 0
      %782 = vmatpush1.bf16.msra.mxu0 %v760
      %783 = vmatprep.subr.bf16.mxu0 0
      %784 = vmatpush1.bf16.msra.mxu0 %v759
      %785 = vmatprep.subr.bf16.mxu0 0
      %786 = vmatpush1.bf16.msra.mxu0 %v758
      %787 = vmatprep.subr.bf16.mxu0 0
      %788 = vmatpush1.bf16.msra.mxu0 %v757
      %789 = vmatprep.subr.bf16.mxu0 0
      %790 = vmatpush2.bf16.msra.mxu0 0
      %791 = vmatprep.subr.bf16.mxu0 0
      %792 = vmatpush2.bf16.msra.mxu0 0
      %793 = vmatprep.subr.bf16.mxu0 0
      %794 = vmatpush2.bf16.msra.mxu0 0
      %795 = vmatprep.subr.bf16.mxu0 0
      %796 = vmatpush2.bf16.msra.mxu0 0
      %797 = vmatprep.subr.bf16.mxu0 0
      %798 = vmatpush2.bf16.msra.mxu0 0
      %799 = vmatprep.subr.bf16.mxu0 0
      %800 = vmatpush2.bf16.msra.mxu0 0
      %801 = vmatprep.subr.bf16.mxu0 0
      %802 = vmatpush2.bf16.msra.mxu0 0
      %803 = vmatprep.subr.bf16.mxu0 0
      %804 = vmatpush2.bf16.msra.mxu0 0
      %805 = vmatprep.mubr.bf16.mxu0 0
      %806 = vmatmul.mubr.bf16.gmra.mxu0 %v722
      %v807 = vpop.f32.mrf.mxu0
      %v808 = vadd.f32 0.0, %v807
      %v809 = vpop.f32.mrf.mxu0
      %v810 = vpop.f32.mrf.mxu0
      %v811 = vadd.f32 0.0, %v810
      %v812 = vpop.f32.mrf.mxu0
      %813 = vmatprep.mubr.bf16.mxu0 0
      %814 = vmatmul.mubr.bf16.gmra.mxu0 %v721
      %v815 = vpop.f32.mrf.mxu0
      %v816 = vadd.f32 0.0, %v815
      %v817 = vpop.f32.mrf.mxu0
      %v818 = vpop.f32.mrf.mxu0
      %v819 = vpop.f32.mrf.mxu0
      %820 = vdwg.mxu0
      %v821 = vadd.f32 %v691, %v808
      %v822 = vadd.f32 %v692, %v811
      %v823 = vadd.f32 %v693, %v816
      %v824 = vld [vmem:[%s291 + $0xc] sm:$0xf]
      %s825 = scalar_lea.vmem %s1, 256
      %v826 = vld [vmem:[%s825] sm:$0xf]
      %v827 = vld [vmem:[%s825 + $0x4] sm:$0xf]
      %v828 = vld [vmem:[%s825 + $0x8] sm:$0xf]
      %v829 = vld [vmem:[%s825 + $0xc] sm:$0xf]
      %v830 = vld [vmem:[%s825 + $0x10] sm:$0xf]
      %v831 = vld [vmem:[%s825 + $0x14] sm:$0xf]
      %v832 = vld [vmem:[%s825 + $0x18] sm:$0xf]
      %v833 = vld [vmem:[%s825 + $0x1c] sm:$0xf]
      %v834 = vld [vmem:[%s825 + $0x20] sm:$0xf]
      %v835 = vld [vmem:[%s825 + $0x24] sm:$0xf]
      %v836 = vld [vmem:[%s825 + $0x28] sm:$0xf]
      %v837 = vld [vmem:[%s825 + $0x2c] sm:$0xf]
      %v838 = vld [vmem:[%s825 + $0x30] sm:$0xf]
      %v839 = vld [vmem:[%s825 + $0x34] sm:$0xf]
      %v840 = vld [vmem:[%s825 + $0x38] sm:$0xf]
      %v841 = vld [vmem:[%s825 + $0x3c] sm:$0xf]
      %v843 = vunpack.c.l.b16 %v824
      %v844 = vpack.c.b16 %v843, %v447
      %vm845 = vsmask.f32 4352
      %v847 = vshrl.u32 %v717, 16
      %v849 = vrot.slane %v847, 3
      %v850 = vshll.u32 %v717, 16
      %v852 = vrot.slane %v850, 4
      %v853 = vor.u32 %v849, %v852
      %v855 = vshrl.u32 %v844, 16
      %v857 = vrot.slane %v855, 3
      %v858 = vshll.u32 %v844, 16
      %v860 = vrot.slane %v858, 4
      %v861 = vor.u32 %v857, %v860
      %v862 = vsel %vm845, %v853, %v861
      %v881 = vunpack.c.l.b16 %v826
      %v882 = vunpack.c.l.b16 %v827
      %v883 = vunpack.c.l.b16 %v828
      %v884 = vunpack.c.l.b16 %v829
      %v885 = vunpack.c.l.b16 %v830
      %v886 = vunpack.c.l.b16 %v831
      %v887 = vunpack.c.l.b16 %v832
      %v888 = vunpack.c.l.b16 %v833
      %v889 = vunpack.c.l.b16 %v834
      %v890 = vunpack.c.l.b16 %v835
      %v891 = vunpack.c.l.b16 %v836
      %v892 = vunpack.c.l.b16 %v837
      %v893 = vunpack.c.l.b16 %v838
      %v894 = vunpack.c.l.b16 %v839
      %v895 = vunpack.c.l.b16 %v840
      %v896 = vunpack.c.l.b16 %v841
      %v897 = vpack.c.b16 %v882, %v881
      %v898 = vpack.c.b16 %v884, %v883
      %v899 = vpack.c.b16 %v886, %v885
      %v900 = vpack.c.b16 %v888, %v887
      %v901 = vpack.c.b16 %v890, %v889
      %v902 = vpack.c.b16 %v892, %v891
      %v903 = vpack.c.b16 %v894, %v893
      %v904 = vpack.c.b16 %v896, %v895
      %913 = vmatprep.subr.bf16.mxu0 0
      %914 = vmatpush1.bf16.msra.mxu0 %v904
      %915 = vmatprep.subr.bf16.mxu0 0
      %916 = vmatpush1.bf16.msra.mxu0 %v903
      %917 = vmatprep.subr.bf16.mxu0 0
      %918 = vmatpush1.bf16.msra.mxu0 %v902
      %919 = vmatprep.subr.bf16.mxu0 0
      %920 = vmatpush1.bf16.msra.mxu0 %v901
      %921 = vmatprep.subr.bf16.mxu0 0
      %922 = vmatpush1.bf16.msra.mxu0 %v900
      %923 = vmatprep.subr.bf16.mxu0 0
      %924 = vmatpush1.bf16.msra.mxu0 %v899
      %925 = vmatprep.subr.bf16.mxu0 0
      %926 = vmatpush1.bf16.msra.mxu0 %v898
      %927 = vmatprep.subr.bf16.mxu0 0
      %928 = vmatpush1.bf16.msra.mxu0 %v897
      %929 = vmatprep.subr.bf16.mxu0 0
      %930 = vmatpush2.bf16.msra.mxu0 0
      %931 = vmatprep.subr.bf16.mxu0 0
      %932 = vmatpush2.bf16.msra.mxu0 0
      %933 = vmatprep.subr.bf16.mxu0 0
      %934 = vmatpush2.bf16.msra.mxu0 0
      %935 = vmatprep.subr.bf16.mxu0 0
      %936 = vmatpush2.bf16.msra.mxu0 0
      %937 = vmatprep.subr.bf16.mxu0 0
      %938 = vmatpush2.bf16.msra.mxu0 0
      %939 = vmatprep.subr.bf16.mxu0 0
      %940 = vmatpush2.bf16.msra.mxu0 0
      %941 = vmatprep.subr.bf16.mxu0 0
      %942 = vmatpush2.bf16.msra.mxu0 0
      %943 = vmatprep.subr.bf16.mxu0 0
      %944 = vmatpush2.bf16.msra.mxu0 0
      %945 = vmatprep.mubr.bf16.mxu0 0
      %946 = vmatmul.mubr.bf16.gmra.mxu0 %v862
      %v947 = vpop.f32.mrf.mxu0
      %v948 = vadd.f32 0.0, %v947
      %v949 = vpop.f32.mrf.mxu0
      %v950 = vpop.f32.mrf.mxu0
      %v951 = vadd.f32 0.0, %v950
      %v952 = vpop.f32.mrf.mxu0
      %953 = vmatprep.mubr.bf16.mxu0 0
      %954 = vmatmul.mubr.bf16.gmra.mxu0 %v861
      %v955 = vpop.f32.mrf.mxu0
      %v956 = vadd.f32 0.0, %v955
      %v957 = vpop.f32.mrf.mxu0
      %v958 = vpop.f32.mrf.mxu0
      %v959 = vpop.f32.mrf.mxu0
      %960 = vdwg.mxu0
      %v961 = vadd.f32 %v821, %v948
      %v962 = vadd.f32 %v822, %v951
      %v963 = vadd.f32 %v823, %v956
      %s964 = scalar_lea.vmem %s1, 320
      %v965 = vld [vmem:[%s964] sm:$0xf]
      %v966 = vld [vmem:[%s964 + $0x4] sm:$0xf]
      %v967 = vld [vmem:[%s964 + $0x8] sm:$0xf]
      %v968 = vld [vmem:[%s964 + $0xc] sm:$0xf]
      %v969 = vld [vmem:[%s964 + $0x10] sm:$0xf]
      %v970 = vld [vmem:[%s964 + $0x14] sm:$0xf]
      %v971 = vld [vmem:[%s964 + $0x18] sm:$0xf]
      %v972 = vld [vmem:[%s964 + $0x1c] sm:$0xf]
      %v973 = vld [vmem:[%s964 + $0x20] sm:$0xf]
      %v974 = vld [vmem:[%s964 + $0x24] sm:$0xf]
      %v975 = vld [vmem:[%s964 + $0x28] sm:$0xf]
      %v976 = vld [vmem:[%s964 + $0x2c] sm:$0xf]
      %v977 = vld [vmem:[%s964 + $0x30] sm:$0xf]
      %v978 = vld [vmem:[%s964 + $0x34] sm:$0xf]
      %v979 = vld [vmem:[%s964 + $0x38] sm:$0xf]
      %v980 = vld [vmem:[%s964 + $0x3c] sm:$0xf]
      %v981 = vpack.c.b16 %v447, %v446
      %v982 = vpack.c.b16 %v843, %v843
      %v1001 = vunpack.c.l.b16 %v965
      %v1002 = vunpack.c.l.b16 %v966
      %v1003 = vunpack.c.l.b16 %v967
      %v1004 = vunpack.c.l.b16 %v968
      %v1005 = vunpack.c.l.b16 %v969
      %v1006 = vunpack.c.l.b16 %v970
      %v1007 = vunpack.c.l.b16 %v971
      %v1008 = vunpack.c.l.b16 %v972
      %v1009 = vunpack.c.l.b16 %v973
      %v1010 = vunpack.c.l.b16 %v974
      %v1011 = vunpack.c.l.b16 %v975
      %v1012 = vunpack.c.l.b16 %v976
      %v1013 = vunpack.c.l.b16 %v977
      %v1014 = vunpack.c.l.b16 %v978
      %v1015 = vunpack.c.l.b16 %v979
      %v1016 = vunpack.c.l.b16 %v980
      %v1017 = vpack.c.b16 %v1002, %v1001
      %v1018 = vpack.c.b16 %v1004, %v1003
      %v1019 = vpack.c.b16 %v1006, %v1005
      %v1020 = vpack.c.b16 %v1008, %v1007
      %v1021 = vpack.c.b16 %v1010, %v1009
      %v1022 = vpack.c.b16 %v1012, %v1011
      %v1023 = vpack.c.b16 %v1014, %v1013
      %v1024 = vpack.c.b16 %v1016, %v1015
      %1033 = vmatprep.subr.bf16.mxu0 0
      %1034 = vmatpush1.bf16.msra.mxu0 %v1024
      %1035 = vmatprep.subr.bf16.mxu0 0
      %1036 = vmatpush1.bf16.msra.mxu0 %v1023
      %1037 = vmatprep.subr.bf16.mxu0 0
      %1038 = vmatpush1.bf16.msra.mxu0 %v1022
      %1039 = vmatprep.subr.bf16.mxu0 0
      %1040 = vmatpush1.bf16.msra.mxu0 %v1021
      %1041 = vmatprep.subr.bf16.mxu0 0
      %1042 = vmatpush1.bf16.msra.mxu0 %v1020
      %1043 = vmatprep.subr.bf16.mxu0 0
      %1044 = vmatpush1.bf16.msra.mxu0 %v1019
      %1045 = vmatprep.subr.bf16.mxu0 0
      %1046 = vmatpush1.bf16.msra.mxu0 %v1018
      %1047 = vmatprep.subr.bf16.mxu0 0
      %1048 = vmatpush1.bf16.msra.mxu0 %v1017
      %1049 = vmatprep.subr.bf16.mxu0 0
      %1050 = vmatpush2.bf16.msra.mxu0 0
      %1051 = vmatprep.subr.bf16.mxu0 0
      %1052 = vmatpush2.bf16.msra.mxu0 0
      %1053 = vmatprep.subr.bf16.mxu0 0
      %1054 = vmatpush2.bf16.msra.mxu0 0
      %1055 = vmatprep.subr.bf16.mxu0 0
      %1056 = vmatpush2.bf16.msra.mxu0 0
      %1057 = vmatprep.subr.bf16.mxu0 0
      %1058 = vmatpush2.bf16.msra.mxu0 0
      %1059 = vmatprep.subr.bf16.mxu0 0
      %1060 = vmatpush2.bf16.msra.mxu0 0
      %1061 = vmatprep.subr.bf16.mxu0 0
      %1062 = vmatpush2.bf16.msra.mxu0 0
      %1063 = vmatprep.subr.bf16.mxu0 0
      %1064 = vmatpush2.bf16.msra.mxu0 0
      %1065 = vmatprep.mubr.bf16.mxu0 0
      %1066 = vmatmul.mubr.bf16.gmra.mxu0 %v981
      %v1067 = vpop.f32.mrf.mxu0
      %v1068 = vadd.f32 0.0, %v1067
      %v1069 = vpop.f32.mrf.mxu0
      %v1070 = vpop.f32.mrf.mxu0
      %v1071 = vadd.f32 0.0, %v1070
      %v1072 = vpop.f32.mrf.mxu0
      %1073 = vmatprep.mubr.bf16.mxu0 0
      %1074 = vmatmul.mubr.bf16.gmra.mxu0 %v982
      %v1075 = vpop.f32.mrf.mxu0
      %v1076 = vadd.f32 0.0, %v1075
      %v1077 = vpop.f32.mrf.mxu0
      %v1078 = vpop.f32.mrf.mxu0
      %v1079 = vpop.f32.mrf.mxu0
      %1080 = vdwg.mxu0
      %v1081 = vadd.f32 %v961, %v1068
      %v1082 = vadd.f32 %v962, %v1071
      %v1083 = vadd.f32 %v963, %v1076
      %v1084 = vld [vmem:[%s291 + $0x4] sm:$0xc]
      %v1085 = vld [vmem:[%s291 + $0x8] sm:$0xf]
      %v1086 = vld [vmem:[%s291 + $0xc] sm:$0xf]
      %v1087 = vld [vmem:[%s291 + $0x10] sm:$0x3]
      %s1088 = scalar_lea.vmem %s1, 384
      %v1089 = vld [vmem:[%s1088] sm:$0xf]
      %v1090 = vld [vmem:[%s1088 + $0x4] sm:$0xf]
      %v1091 = vld [vmem:[%s1088 + $0x8] sm:$0xf]
      %v1092 = vld [vmem:[%s1088 + $0xc] sm:$0xf]
      %v1093 = vld [vmem:[%s1088 + $0x10] sm:$0xf]
      %v1094 = vld [vmem:[%s1088 + $0x14] sm:$0xf]
      %v1095 = vld [vmem:[%s1088 + $0x18] sm:$0xf]
      %v1096 = vld [vmem:[%s1088 + $0x1c] sm:$0xf]
      %v1097 = vld [vmem:[%s1088 + $0x20] sm:$0xf]
      %v1098 = vld [vmem:[%s1088 + $0x24] sm:$0xf]
      %v1099 = vld [vmem:[%s1088 + $0x28] sm:$0xf]
      %v1100 = vld [vmem:[%s1088 + $0x2c] sm:$0xf]
      %v1101 = vld [vmem:[%s1088 + $0x30] sm:$0xf]
      %v1102 = vld [vmem:[%s1088 + $0x34] sm:$0xf]
      %v1103 = vld [vmem:[%s1088 + $0x38] sm:$0xf]
      %v1104 = vld [vmem:[%s1088 + $0x3c] sm:$0xf]
      %v1109 = vunpack.c.l.b16 %v1084
      %v1110 = vunpack.c.l.b16 %v1085
      %v1111 = vunpack.c.l.b16 %v1086
      %v1112 = vunpack.c.l.b16 %v1087
      %v1113 = vpack.c.b16 %v1110, %v1109
      %v1114 = vpack.c.b16 %v1112, %v1111
      %vm1115 = vcmask 1045504
      %v1116 = vrot.slane %v1113, 2
      %v1117 = vrot.slane %v1114, 2
      %v1118 = vsel %vm1115, %v1116, %v1117
      %v1137 = vunpack.c.l.b16 %v1089
      %v1138 = vunpack.c.l.b16 %v1090
      %v1139 = vunpack.c.l.b16 %v1091
      %v1140 = vunpack.c.l.b16 %v1092
      %v1141 = vunpack.c.l.b16 %v1093
      %v1142 = vunpack.c.l.b16 %v1094
      %v1143 = vunpack.c.l.b16 %v1095
      %v1144 = vunpack.c.l.b16 %v1096
      %v1145 = vunpack.c.l.b16 %v1097
      %v1146 = vunpack.c.l.b16 %v1098
      %v1147 = vunpack.c.l.b16 %v1099
      %v1148 = vunpack.c.l.b16 %v1100
      %v1149 = vunpack.c.l.b16 %v1101
      %v1150 = vunpack.c.l.b16 %v1102
      %v1151 = vunpack.c.l.b16 %v1103
      %v1152 = vunpack.c.l.b16 %v1104
      %v1153 = vpack.c.b16 %v1138, %v1137
      %v1154 = vpack.c.b16 %v1140, %v1139
      %v1155 = vpack.c.b16 %v1142, %v1141
      %v1156 = vpack.c.b16 %v1144, %v1143
      %v1157 = vpack.c.b16 %v1146, %v1145
      %v1158 = vpack.c.b16 %v1148, %v1147
      %v1159 = vpack.c.b16 %v1150, %v1149
      %v1160 = vpack.c.b16 %v1152, %v1151
      %1169 = vmatprep.subr.bf16.mxu0 0
      %1170 = vmatpush1.bf16.msra.mxu0 %v1160
      %1171 = vmatprep.subr.bf16.mxu0 0
      %1172 = vmatpush1.bf16.msra.mxu0 %v1159
      %1173 = vmatprep.subr.bf16.mxu0 0
      %1174 = vmatpush1.bf16.msra.mxu0 %v1158
      %1175 = vmatprep.subr.bf16.mxu0 0
      %1176 = vmatpush1.bf16.msra.mxu0 %v1157
      %1177 = vmatprep.subr.bf16.mxu0 0
      %1178 = vmatpush1.bf16.msra.mxu0 %v1156
      %1179 = vmatprep.subr.bf16.mxu0 0
      %1180 = vmatpush1.bf16.msra.mxu0 %v1155
      %1181 = vmatprep.subr.bf16.mxu0 0
      %1182 = vmatpush1.bf16.msra.mxu0 %v1154
      %1183 = vmatprep.subr.bf16.mxu0 0
      %1184 = vmatpush1.bf16.msra.mxu0 %v1153
      %1185 = vmatprep.subr.bf16.mxu0 0
      %1186 = vmatpush2.bf16.msra.mxu0 0
      %1187 = vmatprep.subr.bf16.mxu0 0
      %1188 = vmatpush2.bf16.msra.mxu0 0
      %1189 = vmatprep.subr.bf16.mxu0 0
      %1190 = vmatpush2.bf16.msra.mxu0 0
      %1191 = vmatprep.subr.bf16.mxu0 0
      %1192 = vmatpush2.bf16.msra.mxu0 0
      %1193 = vmatprep.subr.bf16.mxu0 0
      %1194 = vmatpush2.bf16.msra.mxu0 0
      %1195 = vmatprep.subr.bf16.mxu0 0
      %1196 = vmatpush2.bf16.msra.mxu0 0
      %1197 = vmatprep.subr.bf16.mxu0 0
      %1198 = vmatpush2.bf16.msra.mxu0 0
      %1199 = vmatprep.subr.bf16.mxu0 0
      %1200 = vmatpush2.bf16.msra.mxu0 0
      %1201 = vmatprep.mubr.bf16.mxu0 0
      %1202 = vmatmul.mubr.bf16.gmra.mxu0 %v1118
      %v1203 = vpop.f32.mrf.mxu0
      %v1204 = vadd.f32 0.0, %v1203
      %v1205 = vpop.f32.mrf.mxu0
      %v1206 = vpop.f32.mrf.mxu0
      %v1207 = vadd.f32 0.0, %v1206
      %v1208 = vpop.f32.mrf.mxu0
      %1209 = vmatprep.mubr.bf16.mxu0 0
      %1210 = vmatmul.mubr.bf16.gmra.mxu0 %v1117
      %v1211 = vpop.f32.mrf.mxu0
      %v1212 = vadd.f32 0.0, %v1211
      %v1213 = vpop.f32.mrf.mxu0
      %v1214 = vpop.f32.mrf.mxu0
      %v1215 = vpop.f32.mrf.mxu0
      %1216 = vdwg.mxu0
      %v1217 = vadd.f32 %v1081, %v1204
      %v1218 = vadd.f32 %v1082, %v1207
      %v1219 = vadd.f32 %v1083, %v1212
      %v1220 = vld [vmem:[%s291 + $0x10] sm:$0x7]
      %s1221 = scalar_lea.vmem %s1, 448
      %v1222 = vld [vmem:[%s1221] sm:$0xf]
      %v1223 = vld [vmem:[%s1221 + $0x4] sm:$0xf]
      %v1224 = vld [vmem:[%s1221 + $0x8] sm:$0xf]
      %v1225 = vld [vmem:[%s1221 + $0xc] sm:$0xf]
      %v1226 = vld [vmem:[%s1221 + $0x10] sm:$0xf]
      %v1227 = vld [vmem:[%s1221 + $0x14] sm:$0xf]
      %v1228 = vld [vmem:[%s1221 + $0x18] sm:$0xf]
      %v1229 = vld [vmem:[%s1221 + $0x1c] sm:$0xf]
      %v1230 = vld [vmem:[%s1221 + $0x20] sm:$0xf]
      %v1231 = vld [vmem:[%s1221 + $0x24] sm:$0xf]
      %v1232 = vld [vmem:[%s1221 + $0x28] sm:$0xf]
      %v1233 = vld [vmem:[%s1221 + $0x2c] sm:$0xf]
      %v1234 = vld [vmem:[%s1221 + $0x30] sm:$0xf]
      %v1235 = vld [vmem:[%s1221 + $0x34] sm:$0xf]
      %v1236 = vld [vmem:[%s1221 + $0x38] sm:$0xf]
      %v1237 = vld [vmem:[%s1221 + $0x3c] sm:$0xf]
      %v1239 = vunpack.c.l.b16 %v1220
      %v1240 = vpack.c.b16 %v1239, %v1111
      %vm1241 = vsmask.f32 5376
      %v1243 = vshrl.u32 %v1113, 16
      %v1245 = vrot.slane %v1243, 2
      %v1246 = vshll.u32 %v1113, 16
      %v1248 = vrot.slane %v1246, 3
      %v1249 = vor.u32 %v1245, %v1248
      %v1251 = vshrl.u32 %v1240, 16
      %v1253 = vrot.slane %v1251, 2
      %v1254 = vshll.u32 %v1240, 16
      %v1256 = vrot.slane %v1254, 3
      %v1257 = vor.u32 %v1253, %v1256
      %v1258 = vsel %vm1241, %v1249, %v1257
      %v1277 = vunpack.c.l.b16 %v1222
      %v1278 = vunpack.c.l.b16 %v1223
      %v1279 = vunpack.c.l.b16 %v1224
      %v1280 = vunpack.c.l.b16 %v1225
      %v1281 = vunpack.c.l.b16 %v1226
      %v1282 = vunpack.c.l.b16 %v1227
      %v1283 = vunpack.c.l.b16 %v1228
      %v1284 = vunpack.c.l.b16 %v1229
      %v1285 = vunpack.c.l.b16 %v1230
      %v1286 = vunpack.c.l.b16 %v1231
      %v1287 = vunpack.c.l.b16 %v1232
      %v1288 = vunpack.c.l.b16 %v1233
      %v1289 = vunpack.c.l.b16 %v1234
      %v1290 = vunpack.c.l.b16 %v1235
      %v1291 = vunpack.c.l.b16 %v1236
      %v1292 = vunpack.c.l.b16 %v1237
      %v1293 = vpack.c.b16 %v1278, %v1277
      %v1294 = vpack.c.b16 %v1280, %v1279
      %v1295 = vpack.c.b16 %v1282, %v1281
      %v1296 = vpack.c.b16 %v1284, %v1283
      %v1297 = vpack.c.b16 %v1286, %v1285
      %v1298 = vpack.c.b16 %v1288, %v1287
      %v1299 = vpack.c.b16 %v1290, %v1289
      %v1300 = vpack.c.b16 %v1292, %v1291
      %1309 = vmatprep.subr.bf16.mxu0 0
      %1310 = vmatpush1.bf16.msra.mxu0 %v1300
      %1311 = vmatprep.subr.bf16.mxu0 0
      %1312 = vmatpush1.bf16.msra.mxu0 %v1299
      %1313 = vmatprep.subr.bf16.mxu0 0
      %1314 = vmatpush1.bf16.msra.mxu0 %v1298
      %1315 = vmatprep.subr.bf16.mxu0 0
      %1316 = vmatpush1.bf16.msra.mxu0 %v1297
      %1317 = vmatprep.subr.bf16.mxu0 0
      %1318 = vmatpush1.bf16.msra.mxu0 %v1296
      %1319 = vmatprep.subr.bf16.mxu0 0
      %1320 = vmatpush1.bf16.msra.mxu0 %v1295
      %1321 = vmatprep.subr.bf16.mxu0 0
      %1322 = vmatpush1.bf16.msra.mxu0 %v1294
      %1323 = vmatprep.subr.bf16.mxu0 0
      %1324 = vmatpush1.bf16.msra.mxu0 %v1293
      %1325 = vmatprep.subr.bf16.mxu0 0
      %1326 = vmatpush2.bf16.msra.mxu0 0
      %1327 = vmatprep.subr.bf16.mxu0 0
      %1328 = vmatpush2.bf16.msra.mxu0 0
      %1329 = vmatprep.subr.bf16.mxu0 0
      %1330 = vmatpush2.bf16.msra.mxu0 0
      %1331 = vmatprep.subr.bf16.mxu0 0
      %1332 = vmatpush2.bf16.msra.mxu0 0
      %1333 = vmatprep.subr.bf16.mxu0 0
      %1334 = vmatpush2.bf16.msra.mxu0 0
      %1335 = vmatprep.subr.bf16.mxu0 0
      %1336 = vmatpush2.bf16.msra.mxu0 0
      %1337 = vmatprep.subr.bf16.mxu0 0
      %1338 = vmatpush2.bf16.msra.mxu0 0
      %1339 = vmatprep.subr.bf16.mxu0 0
      %1340 = vmatpush2.bf16.msra.mxu0 0
      %1341 = vmatprep.mubr.bf16.mxu0 0
      %1342 = vmatmul.mubr.bf16.gmra.mxu0 %v1258
      %v1343 = vpop.f32.mrf.mxu0
      %v1344 = vadd.f32 0.0, %v1343
      %v1345 = vpop.f32.mrf.mxu0
      %v1346 = vpop.f32.mrf.mxu0
      %v1347 = vadd.f32 0.0, %v1346
      %v1348 = vpop.f32.mrf.mxu0
      %1349 = vmatprep.mubr.bf16.mxu0 0
      %1350 = vmatmul.mubr.bf16.gmra.mxu0 %v1257
      %v1351 = vpop.f32.mrf.mxu0
      %v1352 = vadd.f32 0.0, %v1351
      %v1353 = vpop.f32.mrf.mxu0
      %v1354 = vpop.f32.mrf.mxu0
      %v1355 = vpop.f32.mrf.mxu0
      %1356 = vdwg.mxu0
      %v1357 = vadd.f32 %v1217, %v1344
      %v1358 = vadd.f32 %v1218, %v1347
      %v1359 = vadd.f32 %v1219, %v1352
      %v1360 = vld [vmem:[%s291 + $0x4] sm:$0x8]
      %s1361 = scalar_lea.vmem %s1, 512
      %v1362 = vld [vmem:[%s1361] sm:$0xf]
      %v1363 = vld [vmem:[%s1361 + $0x4] sm:$0xf]
      %v1364 = vld [vmem:[%s1361 + $0x8] sm:$0xf]
      %v1365 = vld [vmem:[%s1361 + $0xc] sm:$0xf]
      %v1366 = vld [vmem:[%s1361 + $0x10] sm:$0xf]
      %v1367 = vld [vmem:[%s1361 + $0x14] sm:$0xf]
      %v1368 = vld [vmem:[%s1361 + $0x18] sm:$0xf]
      %v1369 = vld [vmem:[%s1361 + $0x1c] sm:$0xf]
      %v1370 = vld [vmem:[%s1361 + $0x20] sm:$0xf]
      %v1371 = vld [vmem:[%s1361 + $0x24] sm:$0xf]
      %v1372 = vld [vmem:[%s1361 + $0x28] sm:$0xf]
      %v1373 = vld [vmem:[%s1361 + $0x2c] sm:$0xf]
      %v1374 = vld [vmem:[%s1361 + $0x30] sm:$0xf]
      %v1375 = vld [vmem:[%s1361 + $0x34] sm:$0xf]
      %v1376 = vld [vmem:[%s1361 + $0x38] sm:$0xf]
      %v1377 = vld [vmem:[%s1361 + $0x3c] sm:$0xf]
      %v1379 = vunpack.c.l.b16 %v1360
      %v1380 = vpack.c.b16 %v1110, %v1379
      %v1381 = vrot.slane %v1380, 3
      %v1382 = vrot.slane %v1240, 3
      %v1383 = vsel %vm719, %v1381, %v1382
      %v1402 = vunpack.c.l.b16 %v1362
      %v1403 = vunpack.c.l.b16 %v1363
      %v1404 = vunpack.c.l.b16 %v1364
      %v1405 = vunpack.c.l.b16 %v1365
      %v1406 = vunpack.c.l.b16 %v1366
      %v1407 = vunpack.c.l.b16 %v1367
      %v1408 = vunpack.c.l.b16 %v1368
      %v1409 = vunpack.c.l.b16 %v1369
      %v1410 = vunpack.c.l.b16 %v1370
      %v1411 = vunpack.c.l.b16 %v1371
      %v1412 = vunpack.c.l.b16 %v1372
      %v1413 = vunpack.c.l.b16 %v1373
      %v1414 = vunpack.c.l.b16 %v1374
      %v1415 = vunpack.c.l.b16 %v1375
      %v1416 = vunpack.c.l.b16 %v1376
      %v1417 = vunpack.c.l.b16 %v1377
      %v1418 = vpack.c.b16 %v1403, %v1402
      %v1419 = vpack.c.b16 %v1405, %v1404
      %v1420 = vpack.c.b16 %v1407, %v1406
      %v1421 = vpack.c.b16 %v1409, %v1408
      %v1422 = vpack.c.b16 %v1411, %v1410
      %v1423 = vpack.c.b16 %v1413, %v1412
      %v1424 = vpack.c.b16 %v1415, %v1414
      %v1425 = vpack.c.b16 %v1417, %v1416
      %1434 = vmatprep.subr.bf16.mxu0 0
      %1435 = vmatpush1.bf16.msra.mxu0 %v1425
      %1436 = vmatprep.subr.bf16.mxu0 0
      %1437 = vmatpush1.bf16.msra.mxu0 %v1424
      %1438 = vmatprep.subr.bf16.mxu0 0
      %1439 = vmatpush1.bf16.msra.mxu0 %v1423
      %1440 = vmatprep.subr.bf16.mxu0 0
      %1441 = vmatpush1.bf16.msra.mxu0 %v1422
      %1442 = vmatprep.subr.bf16.mxu0 0
      %1443 = vmatpush1.bf16.msra.mxu0 %v1421
      %1444 = vmatprep.subr.bf16.mxu0 0
      %1445 = vmatpush1.bf16.msra.mxu0 %v1420
      %1446 = vmatprep.subr.bf16.mxu0 0
      %1447 = vmatpush1.bf16.msra.mxu0 %v1419
      %1448 = vmatprep.subr.bf16.mxu0 0
      %1449 = vmatpush1.bf16.msra.mxu0 %v1418
      %1450 = vmatprep.subr.bf16.mxu0 0
      %1451 = vmatpush2.bf16.msra.mxu0 0
      %1452 = vmatprep.subr.bf16.mxu0 0
      %1453 = vmatpush2.bf16.msra.mxu0 0
      %1454 = vmatprep.subr.bf16.mxu0 0
      %1455 = vmatpush2.bf16.msra.mxu0 0
      %1456 = vmatprep.subr.bf16.mxu0 0
      %1457 = vmatpush2.bf16.msra.mxu0 0
      %1458 = vmatprep.subr.bf16.mxu0 0
      %1459 = vmatpush2.bf16.msra.mxu0 0
      %1460 = vmatprep.subr.bf16.mxu0 0
      %1461 = vmatpush2.bf16.msra.mxu0 0
      %1462 = vmatprep.subr.bf16.mxu0 0
      %1463 = vmatpush2.bf16.msra.mxu0 0
      %1464 = vmatprep.subr.bf16.mxu0 0
      %1465 = vmatpush2.bf16.msra.mxu0 0
      %1466 = vmatprep.mubr.bf16.mxu0 0
      %1467 = vmatmul.mubr.bf16.gmra.mxu0 %v1383
      %v1468 = vpop.f32.mrf.mxu0
      %v1469 = vadd.f32 0.0, %v1468
      %v1470 = vpop.f32.mrf.mxu0
      %v1471 = vpop.f32.mrf.mxu0
      %v1472 = vadd.f32 0.0, %v1471
      %v1473 = vpop.f32.mrf.mxu0
      %1474 = vmatprep.mubr.bf16.mxu0 0
      %1475 = vmatmul.mubr.bf16.gmra.mxu0 %v1382
      %v1476 = vpop.f32.mrf.mxu0
      %v1477 = vadd.f32 0.0, %v1476
      %v1478 = vpop.f32.mrf.mxu0
      %v1479 = vpop.f32.mrf.mxu0
      %v1480 = vpop.f32.mrf.mxu0
      %1481 = vdwg.mxu0
      %v1482 = vadd.f32 %v1357, %v1469
      %v1483 = vadd.f32 %v1358, %v1472
      %v1484 = vadd.f32 %v1359, %v1477
      %s1485 = sadd.s32 %s21, 1
      %s1486 = smul.u32 %s1485, 6
      %s1487 = smul.addr %s1486, 4
      %s1488 = scalar_lea.vmem %s262, %s1487
      %v1489 = vld [vmem:[%s1488] sm:$0xf]
      %v1490 = vld [vmem:[%s1488 + $0x4] sm:$0xf]
      %v1491 = vld [vmem:[%s1488 + $0x8] sm:$0xf]
      %s1492 = scalar_lea.vmem %s1, 576
      %v1493 = vld [vmem:[%s1492] sm:$0xf]
      %v1494 = vld [vmem:[%s1492 + $0x4] sm:$0xf]
      %v1495 = vld [vmem:[%s1492 + $0x8] sm:$0xf]
      %v1496 = vld [vmem:[%s1492 + $0xc] sm:$0xf]
      %v1497 = vld [vmem:[%s1492 + $0x10] sm:$0xf]
      %v1498 = vld [vmem:[%s1492 + $0x14] sm:$0xf]
      %v1499 = vld [vmem:[%s1492 + $0x18] sm:$0xf]
      %v1500 = vld [vmem:[%s1492 + $0x1c] sm:$0xf]
      %v1501 = vld [vmem:[%s1492 + $0x20] sm:$0xf]
      %v1502 = vld [vmem:[%s1492 + $0x24] sm:$0xf]
      %v1503 = vld [vmem:[%s1492 + $0x28] sm:$0xf]
      %v1504 = vld [vmem:[%s1492 + $0x2c] sm:$0xf]
      %v1505 = vld [vmem:[%s1492 + $0x30] sm:$0xf]
      %v1506 = vld [vmem:[%s1492 + $0x34] sm:$0xf]
      %v1507 = vld [vmem:[%s1492 + $0x38] sm:$0xf]
      %v1508 = vld [vmem:[%s1492 + $0x3c] sm:$0xf]
      %v1512 = vunpack.c.l.b16 %v1489
      %v1513 = vunpack.c.l.b16 %v1490
      %v1514 = vunpack.c.l.b16 %v1491
      %v1515 = vpack.c.b16 %v1513, %v1512
      %v1516 = vpack.c.b16 %v1514, %v1514
      %v1535 = vunpack.c.l.b16 %v1493
      %v1536 = vunpack.c.l.b16 %v1494
      %v1537 = vunpack.c.l.b16 %v1495
      %v1538 = vunpack.c.l.b16 %v1496
      %v1539 = vunpack.c.l.b16 %v1497
      %v1540 = vunpack.c.l.b16 %v1498
      %v1541 = vunpack.c.l.b16 %v1499
      %v1542 = vunpack.c.l.b16 %v1500
      %v1543 = vunpack.c.l.b16 %v1501
      %v1544 = vunpack.c.l.b16 %v1502
      %v1545 = vunpack.c.l.b16 %v1503
      %v1546 = vunpack.c.l.b16 %v1504
      %v1547 = vunpack.c.l.b16 %v1505
      %v1548 = vunpack.c.l.b16 %v1506
      %v1549 = vunpack.c.l.b16 %v1507
      %v1550 = vunpack.c.l.b16 %v1508
      %v1551 = vpack.c.b16 %v1536, %v1535
      %v1552 = vpack.c.b16 %v1538, %v1537
      %v1553 = vpack.c.b16 %v1540, %v1539
      %v1554 = vpack.c.b16 %v1542, %v1541
      %v1555 = vpack.c.b16 %v1544, %v1543
      %v1556 = vpack.c.b16 %v1546, %v1545
      %v1557 = vpack.c.b16 %v1548, %v1547
      %v1558 = vpack.c.b16 %v1550, %v1549
      %1567 = vmatprep.subr.bf16.mxu0 0
      %1568 = vmatpush1.bf16.msra.mxu0 %v1558
      %1569 = vmatprep.subr.bf16.mxu0 0
      %1570 = vmatpush1.bf16.msra.mxu0 %v1557
      %1571 = vmatprep.subr.bf16.mxu0 0
      %1572 = vmatpush1.bf16.msra.mxu0 %v1556
      %1573 = vmatprep.subr.bf16.mxu0 0
      %1574 = vmatpush1.bf16.msra.mxu0 %v1555
      %1575 = vmatprep.subr.bf16.mxu0 0
      %1576 = vmatpush1.bf16.msra.mxu0 %v1554
      %1577 = vmatprep.subr.bf16.mxu0 0
      %1578 = vmatpush1.bf16.msra.mxu0 %v1553
      %1579 = vmatprep.subr.bf16.mxu0 0
      %1580 = vmatpush1.bf16.msra.mxu0 %v1552
      %1581 = vmatprep.subr.bf16.mxu0 0
      %1582 = vmatpush1.bf16.msra.mxu0 %v1551
      %1583 = vmatprep.subr.bf16.mxu0 0
      %1584 = vmatpush2.bf16.msra.mxu0 0
      %1585 = vmatprep.subr.bf16.mxu0 0
      %1586 = vmatpush2.bf16.msra.mxu0 0
      %1587 = vmatprep.subr.bf16.mxu0 0
      %1588 = vmatpush2.bf16.msra.mxu0 0
      %1589 = vmatprep.subr.bf16.mxu0 0
      %1590 = vmatpush2.bf16.msra.mxu0 0
      %1591 = vmatprep.subr.bf16.mxu0 0
      %1592 = vmatpush2.bf16.msra.mxu0 0
      %1593 = vmatprep.subr.bf16.mxu0 0
      %1594 = vmatpush2.bf16.msra.mxu0 0
      %1595 = vmatprep.subr.bf16.mxu0 0
      %1596 = vmatpush2.bf16.msra.mxu0 0
      %1597 = vmatprep.subr.bf16.mxu0 0
      %1598 = vmatpush2.bf16.msra.mxu0 0
      %1599 = vmatprep.mubr.bf16.mxu0 0
      %1600 = vmatmul.mubr.bf16.gmra.mxu0 %v1515
      %v1601 = vpop.f32.mrf.mxu0
      %v1602 = vadd.f32 0.0, %v1601
      %v1603 = vpop.f32.mrf.mxu0
      %v1604 = vpop.f32.mrf.mxu0
      %v1605 = vadd.f32 0.0, %v1604
      %v1606 = vpop.f32.mrf.mxu0
      %1607 = vmatprep.mubr.bf16.mxu0 0
      %1608 = vmatmul.mubr.bf16.gmra.mxu0 %v1516
      %v1609 = vpop.f32.mrf.mxu0
      %v1610 = vadd.f32 0.0, %v1609
      %v1611 = vpop.f32.mrf.mxu0
      %v1612 = vpop.f32.mrf.mxu0
      %v1613 = vpop.f32.mrf.mxu0
      %1614 = vdwg.mxu0
      %v1615 = vadd.f32 %v1482, %v1602
      %v1616 = vadd.f32 %v1483, %v1605
      %v1617 = vadd.f32 %v1484, %v1610
      %v1618 = vld [vmem:[%s1488] sm:$0xf]
      %v1619 = vld [vmem:[%s1488 + $0x4] sm:$0xf]
      %v1620 = vld [vmem:[%s1488 + $0x8] sm:$0xf]
      %v1621 = vld [vmem:[%s1488 + $0xc] sm:$0x1]
      %s1622 = scalar_lea.vmem %s1, 640
      %v1623 = vld [vmem:[%s1622] sm:$0xf]
      %v1624 = vld [vmem:[%s1622 + $0x4] sm:$0xf]
      %v1625 = vld [vmem:[%s1622 + $0x8] sm:$0xf]
      %v1626 = vld [vmem:[%s1622 + $0xc] sm:$0xf]
      %v1627 = vld [vmem:[%s1622 + $0x10] sm:$0xf]
      %v1628 = vld [vmem:[%s1622 + $0x14] sm:$0xf]
      %v1629 = vld [vmem:[%s1622 + $0x18] sm:$0xf]
      %v1630 = vld [vmem:[%s1622 + $0x1c] sm:$0xf]
      %v1631 = vld [vmem:[%s1622 + $0x20] sm:$0xf]
      %v1632 = vld [vmem:[%s1622 + $0x24] sm:$0xf]
      %v1633 = vld [vmem:[%s1622 + $0x28] sm:$0xf]
      %v1634 = vld [vmem:[%s1622 + $0x2c] sm:$0xf]
      %v1635 = vld [vmem:[%s1622 + $0x30] sm:$0xf]
      %v1636 = vld [vmem:[%s1622 + $0x34] sm:$0xf]
      %v1637 = vld [vmem:[%s1622 + $0x38] sm:$0xf]
      %v1638 = vld [vmem:[%s1622 + $0x3c] sm:$0xf]
      %v1643 = vunpack.c.l.b16 %v1618
      %v1644 = vunpack.c.l.b16 %v1619
      %v1645 = vunpack.c.l.b16 %v1620
      %v1646 = vunpack.c.l.b16 %v1621
      %v1647 = vpack.c.b16 %v1644, %v1643
      %v1648 = vpack.c.b16 %v1646, %v1645
      %v1650 = vshrl.u32 %v1647, 16
      %v1652 = vshll.u32 %v1647, 16
      %v1654 = vrot.slane %v1652, 1
      %v1655 = vor.u32 %v1650, %v1654
      %v1657 = vshll.u32 %v1648, 16
      %v1659 = vrot.slane %v1657, 1
      %v1660 = vsel %vm451, %v1655, %v1659
      %v1661 = vshrl.u32 %v1648, 16
      %v1663 = vor.u32 %v1661, %v1659
      %v1682 = vunpack.c.l.b16 %v1623
      %v1683 = vunpack.c.l.b16 %v1624
      %v1684 = vunpack.c.l.b16 %v1625
      %v1685 = vunpack.c.l.b16 %v1626
      %v1686 = vunpack.c.l.b16 %v1627
      %v1687 = vunpack.c.l.b16 %v1628
      %v1688 = vunpack.c.l.b16 %v1629
      %v1689 = vunpack.c.l.b16 %v1630
      %v1690 = vunpack.c.l.b16 %v1631
      %v1691 = vunpack.c.l.b16 %v1632
      %v1692 = vunpack.c.l.b16 %v1633
      %v1693 = vunpack.c.l.b16 %v1634
      %v1694 = vunpack.c.l.b16 %v1635
      %v1695 = vunpack.c.l.b16 %v1636
      %v1696 = vunpack.c.l.b16 %v1637
      %v1697 = vunpack.c.l.b16 %v1638
      %v1698 = vpack.c.b16 %v1683, %v1682
      %v1699 = vpack.c.b16 %v1685, %v1684
      %v1700 = vpack.c.b16 %v1687, %v1686
      %v1701 = vpack.c.b16 %v1689, %v1688
      %v1702 = vpack.c.b16 %v1691, %v1690
      %v1703 = vpack.c.b16 %v1693, %v1692
      %v1704 = vpack.c.b16 %v1695, %v1694
      %v1705 = vpack.c.b16 %v1697, %v1696
      %1714 = vmatprep.subr.bf16.mxu0 0
      %1715 = vmatpush1.bf16.msra.mxu0 %v1705
      %1716 = vmatprep.subr.bf16.mxu0 0
      %1717 = vmatpush1.bf16.msra.mxu0 %v1704
      %1718 = vmatprep.subr.bf16.mxu0 0
      %1719 = vmatpush1.bf16.msra.mxu0 %v1703
      %1720 = vmatprep.subr.bf16.mxu0 0
      %1721 = vmatpush1.bf16.msra.mxu0 %v1702
      %1722 = vmatprep.subr.bf16.mxu0 0
      %1723 = vmatpush1.bf16.msra.mxu0 %v1701
      %1724 = vmatprep.subr.bf16.mxu0 0
      %1725 = vmatpush1.bf16.msra.mxu0 %v1700
      %1726 = vmatprep.subr.bf16.mxu0 0
      %1727 = vmatpush1.bf16.msra.mxu0 %v1699
      %1728 = vmatprep.subr.bf16.mxu0 0
      %1729 = vmatpush1.bf16.msra.mxu0 %v1698
      %1730 = vmatprep.subr.bf16.mxu0 0
      %1731 = vmatpush2.bf16.msra.mxu0 0
      %1732 = vmatprep.subr.bf16.mxu0 0
      %1733 = vmatpush2.bf16.msra.mxu0 0
      %1734 = vmatprep.subr.bf16.mxu0 0
      %1735 = vmatpush2.bf16.msra.mxu0 0
      %1736 = vmatprep.subr.bf16.mxu0 0
      %1737 = vmatpush2.bf16.msra.mxu0 0
      %1738 = vmatprep.subr.bf16.mxu0 0
      %1739 = vmatpush2.bf16.msra.mxu0 0
      %1740 = vmatprep.subr.bf16.mxu0 0
      %1741 = vmatpush2.bf16.msra.mxu0 0
      %1742 = vmatprep.subr.bf16.mxu0 0
      %1743 = vmatpush2.bf16.msra.mxu0 0
      %1744 = vmatprep.subr.bf16.mxu0 0
      %1745 = vmatpush2.bf16.msra.mxu0 0
      %1746 = vmatprep.mubr.bf16.mxu0 0
      %1747 = vmatmul.mubr.bf16.gmra.mxu0 %v1660
      %v1748 = vpop.f32.mrf.mxu0
      %v1749 = vadd.f32 0.0, %v1748
      %v1750 = vpop.f32.mrf.mxu0
      %v1751 = vpop.f32.mrf.mxu0
      %v1752 = vadd.f32 0.0, %v1751
      %v1753 = vpop.f32.mrf.mxu0
      %1754 = vmatprep.mubr.bf16.mxu0 0
      %1755 = vmatmul.mubr.bf16.gmra.mxu0 %v1663
      %v1756 = vpop.f32.mrf.mxu0
      %v1757 = vadd.f32 0.0, %v1756
      %v1758 = vpop.f32.mrf.mxu0
      %v1759 = vpop.f32.mrf.mxu0
      %v1760 = vpop.f32.mrf.mxu0
      %1761 = vdwg.mxu0
      %v1762 = vadd.f32 %v1615, %v1749
      %v1763 = vadd.f32 %v1616, %v1752
      %v1764 = vadd.f32 %v1617, %v1757
      %v1765 = vld [vmem:[%s1488] sm:$0xe]
      %s1766 = scalar_lea.vmem %s1, 704
      %v1767 = vld [vmem:[%s1766] sm:$0xf]
      %v1768 = vld [vmem:[%s1766 + $0x4] sm:$0xf]
      %v1769 = vld [vmem:[%s1766 + $0x8] sm:$0xf]
      %v1770 = vld [vmem:[%s1766 + $0xc] sm:$0xf]
      %v1771 = vld [vmem:[%s1766 + $0x10] sm:$0xf]
      %v1772 = vld [vmem:[%s1766 + $0x14] sm:$0xf]
      %v1773 = vld [vmem:[%s1766 + $0x18] sm:$0xf]
      %v1774 = vld [vmem:[%s1766 + $0x1c] sm:$0xf]
      %v1775 = vld [vmem:[%s1766 + $0x20] sm:$0xf]
      %v1776 = vld [vmem:[%s1766 + $0x24] sm:$0xf]
      %v1777 = vld [vmem:[%s1766 + $0x28] sm:$0xf]
      %v1778 = vld [vmem:[%s1766 + $0x2c] sm:$0xf]
      %v1779 = vld [vmem:[%s1766 + $0x30] sm:$0xf]
      %v1780 = vld [vmem:[%s1766 + $0x34] sm:$0xf]
      %v1781 = vld [vmem:[%s1766 + $0x38] sm:$0xf]
      %v1782 = vld [vmem:[%s1766 + $0x3c] sm:$0xf]
      %v1784 = vunpack.c.l.b16 %v1765
      %v1785 = vpack.c.b16 %v1644, %v1784
      %v1786 = vrot.slane %v1785, 1
      %v1787 = vrot.slane %v1648, 1
      %v1788 = vsel %vm589, %v1786, %v1787
      %v1807 = vunpack.c.l.b16 %v1767
      %v1808 = vunpack.c.l.b16 %v1768
      %v1809 = vunpack.c.l.b16 %v1769
      %v1810 = vunpack.c.l.b16 %v1770
      %v1811 = vunpack.c.l.b16 %v1771
      %v1812 = vunpack.c.l.b16 %v1772
      %v1813 = vunpack.c.l.b16 %v1773
      %v1814 = vunpack.c.l.b16 %v1774
      %v1815 = vunpack.c.l.b16 %v1775
      %v1816 = vunpack.c.l.b16 %v1776
      %v1817 = vunpack.c.l.b16 %v1777
      %v1818 = vunpack.c.l.b16 %v1778
      %v1819 = vunpack.c.l.b16 %v1779
      %v1820 = vunpack.c.l.b16 %v1780
      %v1821 = vunpack.c.l.b16 %v1781
      %v1822 = vunpack.c.l.b16 %v1782
      %v1823 = vpack.c.b16 %v1808, %v1807
      %v1824 = vpack.c.b16 %v1810, %v1809
      %v1825 = vpack.c.b16 %v1812, %v1811
      %v1826 = vpack.c.b16 %v1814, %v1813
      %v1827 = vpack.c.b16 %v1816, %v1815
      %v1828 = vpack.c.b16 %v1818, %v1817
      %v1829 = vpack.c.b16 %v1820, %v1819
      %v1830 = vpack.c.b16 %v1822, %v1821
      %1839 = vmatprep.subr.bf16.mxu0 0
      %1840 = vmatpush1.bf16.msra.mxu0 %v1830
      %1841 = vmatprep.subr.bf16.mxu0 0
      %1842 = vmatpush1.bf16.msra.mxu0 %v1829
      %1843 = vmatprep.subr.bf16.mxu0 0
      %1844 = vmatpush1.bf16.msra.mxu0 %v1828
      %1845 = vmatprep.subr.bf16.mxu0 0
      %1846 = vmatpush1.bf16.msra.mxu0 %v1827
      %1847 = vmatprep.subr.bf16.mxu0 0
      %1848 = vmatpush1.bf16.msra.mxu0 %v1826
      %1849 = vmatprep.subr.bf16.mxu0 0
      %1850 = vmatpush1.bf16.msra.mxu0 %v1825
      %1851 = vmatprep.subr.bf16.mxu0 0
      %1852 = vmatpush1.bf16.msra.mxu0 %v1824
      %1853 = vmatprep.subr.bf16.mxu0 0
      %1854 = vmatpush1.bf16.msra.mxu0 %v1823
      %1855 = vmatprep.subr.bf16.mxu0 0
      %1856 = vmatpush2.bf16.msra.mxu0 0
      %1857 = vmatprep.subr.bf16.mxu0 0
      %1858 = vmatpush2.bf16.msra.mxu0 0
      %1859 = vmatprep.subr.bf16.mxu0 0
      %1860 = vmatpush2.bf16.msra.mxu0 0
      %1861 = vmatprep.subr.bf16.mxu0 0
      %1862 = vmatpush2.bf16.msra.mxu0 0
      %1863 = vmatprep.subr.bf16.mxu0 0
      %1864 = vmatpush2.bf16.msra.mxu0 0
      %1865 = vmatprep.subr.bf16.mxu0 0
      %1866 = vmatpush2.bf16.msra.mxu0 0
      %1867 = vmatprep.subr.bf16.mxu0 0
      %1868 = vmatpush2.bf16.msra.mxu0 0
      %1869 = vmatprep.subr.bf16.mxu0 0
      %1870 = vmatpush2.bf16.msra.mxu0 0
      %1871 = vmatprep.mubr.bf16.mxu0 0
      %1872 = vmatmul.mubr.bf16.gmra.mxu0 %v1788
      %v1873 = vpop.f32.mrf.mxu0
      %v1874 = vadd.f32 0.0, %v1873
      %v1875 = vpop.f32.mrf.mxu0
      %v1876 = vpop.f32.mrf.mxu0
      %v1877 = vadd.f32 0.0, %v1876
      %v1878 = vpop.f32.mrf.mxu0
      %1879 = vmatprep.mubr.bf16.mxu0 0
      %1880 = vmatmul.mubr.bf16.gmra.mxu0 %v1787
      %v1881 = vpop.f32.mrf.mxu0
      %v1882 = vadd.f32 0.0, %v1881
      %v1883 = vpop.f32.mrf.mxu0
      %v1884 = vpop.f32.mrf.mxu0
      %v1885 = vpop.f32.mrf.mxu0
      %1886 = vdwg.mxu0
      %v1887 = vadd.f32 %v1762, %v1874
      %v1888 = vadd.f32 %v1763, %v1877
      %v1889 = vadd.f32 %v1764, %v1882
      %v1890 = vld [vmem:[%s1488] sm:$0x8]
      %v1891 = vld [vmem:[%s1488 + $0xc] sm:$0x7]
      %s1892 = scalar_lea.vmem %s1, 768
      %v1893 = vld [vmem:[%s1892] sm:$0xf]
      %v1894 = vld [vmem:[%s1892 + $0x4] sm:$0xf]
      %v1895 = vld [vmem:[%s1892 + $0x8] sm:$0xf]
      %v1896 = vld [vmem:[%s1892 + $0xc] sm:$0xf]
      %v1897 = vld [vmem:[%s1892 + $0x10] sm:$0xf]
      %v1898 = vld [vmem:[%s1892 + $0x14] sm:$0xf]
      %v1899 = vld [vmem:[%s1892 + $0x18] sm:$0xf]
      %v1900 = vld [vmem:[%s1892 + $0x1c] sm:$0xf]
      %v1901 = vld [vmem:[%s1892 + $0x20] sm:$0xf]
      %v1902 = vld [vmem:[%s1892 + $0x24] sm:$0xf]
      %v1903 = vld [vmem:[%s1892 + $0x28] sm:$0xf]
      %v1904 = vld [vmem:[%s1892 + $0x2c] sm:$0xf]
      %v1905 = vld [vmem:[%s1892 + $0x30] sm:$0xf]
      %v1906 = vld [vmem:[%s1892 + $0x34] sm:$0xf]
      %v1907 = vld [vmem:[%s1892 + $0x38] sm:$0xf]
      %v1908 = vld [vmem:[%s1892 + $0x3c] sm:$0xf]
      %v1911 = vunpack.c.l.b16 %v1890
      %v1912 = vunpack.c.l.b16 %v1891
      %v1913 = vpack.c.b16 %v1644, %v1911
      %v1914 = vpack.c.b16 %v1912, %v1645
      %v1915 = vrot.slane %v1913, 3
      %v1916 = vrot.slane %v1914, 3
      %v1917 = vsel %vm719, %v1915, %v1916
      %v1936 = vunpack.c.l.b16 %v1893
      %v1937 = vunpack.c.l.b16 %v1894
      %v1938 = vunpack.c.l.b16 %v1895
      %v1939 = vunpack.c.l.b16 %v1896
      %v1940 = vunpack.c.l.b16 %v1897
      %v1941 = vunpack.c.l.b16 %v1898
      %v1942 = vunpack.c.l.b16 %v1899
      %v1943 = vunpack.c.l.b16 %v1900
      %v1944 = vunpack.c.l.b16 %v1901
      %v1945 = vunpack.c.l.b16 %v1902
      %v1946 = vunpack.c.l.b16 %v1903
      %v1947 = vunpack.c.l.b16 %v1904
      %v1948 = vunpack.c.l.b16 %v1905
      %v1949 = vunpack.c.l.b16 %v1906
      %v1950 = vunpack.c.l.b16 %v1907
      %v1951 = vunpack.c.l.b16 %v1908
      %v1952 = vpack.c.b16 %v1937, %v1936
      %v1953 = vpack.c.b16 %v1939, %v1938
      %v1954 = vpack.c.b16 %v1941, %v1940
      %v1955 = vpack.c.b16 %v1943, %v1942
      %v1956 = vpack.c.b16 %v1945, %v1944
      %v1957 = vpack.c.b16 %v1947, %v1946
      %v1958 = vpack.c.b16 %v1949, %v1948
      %v1959 = vpack.c.b16 %v1951, %v1950
      %1968 = vmatprep.subr.bf16.mxu0 0
      %1969 = vmatpush1.bf16.msra.mxu0 %v1959
      %1970 = vmatprep.subr.bf16.mxu0 0
      %1971 = vmatpush1.bf16.msra.mxu0 %v1958
      %1972 = vmatprep.subr.bf16.mxu0 0
      %1973 = vmatpush1.bf16.msra.mxu0 %v1957
      %1974 = vmatprep.subr.bf16.mxu0 0
      %1975 = vmatpush1.bf16.msra.mxu0 %v1956
      %1976 = vmatprep.subr.bf16.mxu0 0
      %1977 = vmatpush1.bf16.msra.mxu0 %v1955
      %1978 = vmatprep.subr.bf16.mxu0 0
      %1979 = vmatpush1.bf16.msra.mxu0 %v1954
      %1980 = vmatprep.subr.bf16.mxu0 0
      %1981 = vmatpush1.bf16.msra.mxu0 %v1953
      %1982 = vmatprep.subr.bf16.mxu0 0
      %1983 = vmatpush1.bf16.msra.mxu0 %v1952
      %1984 = vmatprep.subr.bf16.mxu0 0
      %1985 = vmatpush2.bf16.msra.mxu0 0
      %1986 = vmatprep.subr.bf16.mxu0 0
      %1987 = vmatpush2.bf16.msra.mxu0 0
      %1988 = vmatprep.subr.bf16.mxu0 0
      %1989 = vmatpush2.bf16.msra.mxu0 0
      %1990 = vmatprep.subr.bf16.mxu0 0
      %1991 = vmatpush2.bf16.msra.mxu0 0
      %1992 = vmatprep.subr.bf16.mxu0 0
      %1993 = vmatpush2.bf16.msra.mxu0 0
      %1994 = vmatprep.subr.bf16.mxu0 0
      %1995 = vmatpush2.bf16.msra.mxu0 0
      %1996 = vmatprep.subr.bf16.mxu0 0
      %1997 = vmatpush2.bf16.msra.mxu0 0
      %1998 = vmatprep.subr.bf16.mxu0 0
      %1999 = vmatpush2.bf16.msra.mxu0 0
      %2000 = vmatprep.mubr.bf16.mxu0 0
      %2001 = vmatmul.mubr.bf16.gmra.mxu0 %v1917
      %v2002 = vpop.f32.mrf.mxu0
      %v2003 = vadd.f32 0.0, %v2002
      %v2004 = vpop.f32.mrf.mxu0
      %v2005 = vpop.f32.mrf.mxu0
      %v2006 = vadd.f32 0.0, %v2005
      %v2007 = vpop.f32.mrf.mxu0
      %2008 = vmatprep.mubr.bf16.mxu0 0
      %2009 = vmatmul.mubr.bf16.gmra.mxu0 %v1916
      %v2010 = vpop.f32.mrf.mxu0
      %v2011 = vadd.f32 0.0, %v2010
      %v2012 = vpop.f32.mrf.mxu0
      %v2013 = vpop.f32.mrf.mxu0
      %v2014 = vpop.f32.mrf.mxu0
      %2015 = vdwg.mxu0
      %v2016 = vadd.f32 %v1887, %v2003
      %v2017 = vadd.f32 %v1888, %v2006
      %v2018 = vadd.f32 %v1889, %v2011
      %v2019 = vld [vmem:[%s1488 + $0xc] sm:$0xf]
      %s2020 = scalar_lea.vmem %s1, 832
      %v2021 = vld [vmem:[%s2020] sm:$0xf]
      %v2022 = vld [vmem:[%s2020 + $0x4] sm:$0xf]
      %v2023 = vld [vmem:[%s2020 + $0x8] sm:$0xf]
      %v2024 = vld [vmem:[%s2020 + $0xc] sm:$0xf]
      %v2025 = vld [vmem:[%s2020 + $0x10] sm:$0xf]
      %v2026 = vld [vmem:[%s2020 + $0x14] sm:$0xf]
      %v2027 = vld [vmem:[%s2020 + $0x18] sm:$0xf]
      %v2028 = vld [vmem:[%s2020 + $0x1c] sm:$0xf]
      %v2029 = vld [vmem:[%s2020 + $0x20] sm:$0xf]
      %v2030 = vld [vmem:[%s2020 + $0x24] sm:$0xf]
      %v2031 = vld [vmem:[%s2020 + $0x28] sm:$0xf]
      %v2032 = vld [vmem:[%s2020 + $0x2c] sm:$0xf]
      %v2033 = vld [vmem:[%s2020 + $0x30] sm:$0xf]
      %v2034 = vld [vmem:[%s2020 + $0x34] sm:$0xf]
      %v2035 = vld [vmem:[%s2020 + $0x38] sm:$0xf]
      %v2036 = vld [vmem:[%s2020 + $0x3c] sm:$0xf]
      %v2038 = vunpack.c.l.b16 %v2019
      %v2039 = vpack.c.b16 %v2038, %v1645
      %v2041 = vshrl.u32 %v1913, 16
      %v2043 = vrot.slane %v2041, 3
      %v2044 = vshll.u32 %v1913, 16
      %v2046 = vrot.slane %v2044, 4
      %v2047 = vor.u32 %v2043, %v2046
      %v2049 = vshrl.u32 %v2039, 16
      %v2051 = vrot.slane %v2049, 3
      %v2052 = vshll.u32 %v2039, 16
      %v2054 = vrot.slane %v2052, 4
      %v2055 = vor.u32 %v2051, %v2054
      %v2056 = vsel %vm845, %v2047, %v2055
      %v2075 = vunpack.c.l.b16 %v2021
      %v2076 = vunpack.c.l.b16 %v2022
      %v2077 = vunpack.c.l.b16 %v2023
      %v2078 = vunpack.c.l.b16 %v2024
      %v2079 = vunpack.c.l.b16 %v2025
      %v2080 = vunpack.c.l.b16 %v2026
      %v2081 = vunpack.c.l.b16 %v2027
      %v2082 = vunpack.c.l.b16 %v2028
      %v2083 = vunpack.c.l.b16 %v2029
      %v2084 = vunpack.c.l.b16 %v2030
      %v2085 = vunpack.c.l.b16 %v2031
      %v2086 = vunpack.c.l.b16 %v2032
      %v2087 = vunpack.c.l.b16 %v2033
      %v2088 = vunpack.c.l.b16 %v2034
      %v2089 = vunpack.c.l.b16 %v2035
      %v2090 = vunpack.c.l.b16 %v2036
      %v2091 = vpack.c.b16 %v2076, %v2075
      %v2092 = vpack.c.b16 %v2078, %v2077
      %v2093 = vpack.c.b16 %v2080, %v2079
      %v2094 = vpack.c.b16 %v2082, %v2081
      %v2095 = vpack.c.b16 %v2084, %v2083
      %v2096 = vpack.c.b16 %v2086, %v2085
      %v2097 = vpack.c.b16 %v2088, %v2087
      %v2098 = vpack.c.b16 %v2090, %v2089
      %2107 = vmatprep.subr.bf16.mxu0 0
      %2108 = vmatpush1.bf16.msra.mxu0 %v2098
      %2109 = vmatprep.subr.bf16.mxu0 0
      %2110 = vmatpush1.bf16.msra.mxu0 %v2097
      %2111 = vmatprep.subr.bf16.mxu0 0
      %2112 = vmatpush1.bf16.msra.mxu0 %v2096
      %2113 = vmatprep.subr.bf16.mxu0 0
      %2114 = vmatpush1.bf16.msra.mxu0 %v2095
      %2115 = vmatprep.subr.bf16.mxu0 0
      %2116 = vmatpush1.bf16.msra.mxu0 %v2094
      %2117 = vmatprep.subr.bf16.mxu0 0
      %2118 = vmatpush1.bf16.msra.mxu0 %v2093
      %2119 = vmatprep.subr.bf16.mxu0 0
      %2120 = vmatpush1.bf16.msra.mxu0 %v2092
      %2121 = vmatprep.subr.bf16.mxu0 0
      %2122 = vmatpush1.bf16.msra.mxu0 %v2091
      %2123 = vmatprep.subr.bf16.mxu0 0
      %2124 = vmatpush2.bf16.msra.mxu0 0
      %2125 = vmatprep.subr.bf16.mxu0 0
      %2126 = vmatpush2.bf16.msra.mxu0 0
      %2127 = vmatprep.subr.bf16.mxu0 0
      %2128 = vmatpush2.bf16.msra.mxu0 0
      %2129 = vmatprep.subr.bf16.mxu0 0
      %2130 = vmatpush2.bf16.msra.mxu0 0
      %2131 = vmatprep.subr.bf16.mxu0 0
      %2132 = vmatpush2.bf16.msra.mxu0 0
      %2133 = vmatprep.subr.bf16.mxu0 0
      %2134 = vmatpush2.bf16.msra.mxu0 0
      %2135 = vmatprep.subr.bf16.mxu0 0
      %2136 = vmatpush2.bf16.msra.mxu0 0
      %2137 = vmatprep.subr.bf16.mxu0 0
      %2138 = vmatpush2.bf16.msra.mxu0 0
      %2139 = vmatprep.mubr.bf16.mxu0 0
      %2140 = vmatmul.mubr.bf16.gmra.mxu0 %v2056
      %v2141 = vpop.f32.mrf.mxu0
      %v2142 = vadd.f32 0.0, %v2141
      %v2143 = vpop.f32.mrf.mxu0
      %v2144 = vpop.f32.mrf.mxu0
      %v2145 = vadd.f32 0.0, %v2144
      %v2146 = vpop.f32.mrf.mxu0
      %2147 = vmatprep.mubr.bf16.mxu0 0
      %2148 = vmatmul.mubr.bf16.gmra.mxu0 %v2055
      %v2149 = vpop.f32.mrf.mxu0
      %v2150 = vadd.f32 0.0, %v2149
      %v2151 = vpop.f32.mrf.mxu0
      %v2152 = vpop.f32.mrf.mxu0
      %v2153 = vpop.f32.mrf.mxu0
      %2154 = vdwg.mxu0
      %v2155 = vadd.f32 %v2016, %v2142
      %v2156 = vadd.f32 %v2017, %v2145
      %v2157 = vadd.f32 %v2018, %v2150
      %s2158 = scalar_lea.vmem %s1, 896
      %v2159 = vld [vmem:[%s2158] sm:$0xf]
      %v2160 = vld [vmem:[%s2158 + $0x4] sm:$0xf]
      %v2161 = vld [vmem:[%s2158 + $0x8] sm:$0xf]
      %v2162 = vld [vmem:[%s2158 + $0xc] sm:$0xf]
      %v2163 = vld [vmem:[%s2158 + $0x10] sm:$0xf]
      %v2164 = vld [vmem:[%s2158 + $0x14] sm:$0xf]
      %v2165 = vld [vmem:[%s2158 + $0x18] sm:$0xf]
      %v2166 = vld [vmem:[%s2158 + $0x1c] sm:$0xf]
      %v2167 = vld [vmem:[%s2158 + $0x20] sm:$0xf]
      %v2168 = vld [vmem:[%s2158 + $0x24] sm:$0xf]
      %v2169 = vld [vmem:[%s2158 + $0x28] sm:$0xf]
      %v2170 = vld [vmem:[%s2158 + $0x2c] sm:$0xf]
      %v2171 = vld [vmem:[%s2158 + $0x30] sm:$0xf]
      %v2172 = vld [vmem:[%s2158 + $0x34] sm:$0xf]
      %v2173 = vld [vmem:[%s2158 + $0x38] sm:$0xf]
      %v2174 = vld [vmem:[%s2158 + $0x3c] sm:$0xf]
      %v2175 = vpack.c.b16 %v1645, %v1644
      %v2176 = vpack.c.b16 %v2038, %v2038
      %v2195 = vunpack.c.l.b16 %v2159
      %v2196 = vunpack.c.l.b16 %v2160
      %v2197 = vunpack.c.l.b16 %v2161
      %v2198 = vunpack.c.l.b16 %v2162
      %v2199 = vunpack.c.l.b16 %v2163
      %v2200 = vunpack.c.l.b16 %v2164
      %v2201 = vunpack.c.l.b16 %v2165
      %v2202 = vunpack.c.l.b16 %v2166
      %v2203 = vunpack.c.l.b16 %v2167
      %v2204 = vunpack.c.l.b16 %v2168
      %v2205 = vunpack.c.l.b16 %v2169
      %v2206 = vunpack.c.l.b16 %v2170
      %v2207 = vunpack.c.l.b16 %v2171
      %v2208 = vunpack.c.l.b16 %v2172
      %v2209 = vunpack.c.l.b16 %v2173
      %v2210 = vunpack.c.l.b16 %v2174
      %v2211 = vpack.c.b16 %v2196, %v2195
      %v2212 = vpack.c.b16 %v2198, %v2197
      %v2213 = vpack.c.b16 %v2200, %v2199
      %v2214 = vpack.c.b16 %v2202, %v2201
      %v2215 = vpack.c.b16 %v2204, %v2203
      %v2216 = vpack.c.b16 %v2206, %v2205
      %v2217 = vpack.c.b16 %v2208, %v2207
      %v2218 = vpack.c.b16 %v2210, %v2209
      %2227 = vmatprep.subr.bf16.mxu0 0
      %2228 = vmatpush1.bf16.msra.mxu0 %v2218
      %2229 = vmatprep.subr.bf16.mxu0 0
      %2230 = vmatpush1.bf16.msra.mxu0 %v2217
      %2231 = vmatprep.subr.bf16.mxu0 0
      %2232 = vmatpush1.bf16.msra.mxu0 %v2216
      %2233 = vmatprep.subr.bf16.mxu0 0
      %2234 = vmatpush1.bf16.msra.mxu0 %v2215
      %2235 = vmatprep.subr.bf16.mxu0 0
      %2236 = vmatpush1.bf16.msra.mxu0 %v2214
      %2237 = vmatprep.subr.bf16.mxu0 0
      %2238 = vmatpush1.bf16.msra.mxu0 %v2213
      %2239 = vmatprep.subr.bf16.mxu0 0
      %2240 = vmatpush1.bf16.msra.mxu0 %v2212
      %2241 = vmatprep.subr.bf16.mxu0 0
      %2242 = vmatpush1.bf16.msra.mxu0 %v2211
      %2243 = vmatprep.subr.bf16.mxu0 0
      %2244 = vmatpush2.bf16.msra.mxu0 0
      %2245 = vmatprep.subr.bf16.mxu0 0
      %2246 = vmatpush2.bf16.msra.mxu0 0
      %2247 = vmatprep.subr.bf16.mxu0 0
      %2248 = vmatpush2.bf16.msra.mxu0 0
      %2249 = vmatprep.subr.bf16.mxu0 0
      %2250 = vmatpush2.bf16.msra.mxu0 0
      %2251 = vmatprep.subr.bf16.mxu0 0
      %2252 = vmatpush2.bf16.msra.mxu0 0
      %2253 = vmatprep.subr.bf16.mxu0 0
      %2254 = vmatpush2.bf16.msra.mxu0 0
      %2255 = vmatprep.subr.bf16.mxu0 0
      %2256 = vmatpush2.bf16.msra.mxu0 0
      %2257 = vmatprep.subr.bf16.mxu0 0
      %2258 = vmatpush2.bf16.msra.mxu0 0
      %2259 = vmatprep.mubr.bf16.mxu0 0
      %2260 = vmatmul.mubr.bf16.gmra.mxu0 %v2175
      %v2261 = vpop.f32.mrf.mxu0
      %v2262 = vadd.f32 0.0, %v2261
      %v2263 = vpop.f32.mrf.mxu0
      %v2264 = vpop.f32.mrf.mxu0
      %v2265 = vadd.f32 0.0, %v2264
      %v2266 = vpop.f32.mrf.mxu0
      %2267 = vmatprep.mubr.bf16.mxu0 0
      %2268 = vmatmul.mubr.bf16.gmra.mxu0 %v2176
      %v2269 = vpop.f32.mrf.mxu0
      %v2270 = vadd.f32 0.0, %v2269
      %v2271 = vpop.f32.mrf.mxu0
      %v2272 = vpop.f32.mrf.mxu0
      %v2273 = vpop.f32.mrf.mxu0
      %2274 = vdwg.mxu0
      %v2275 = vadd.f32 %v2155, %v2262
      %v2276 = vadd.f32 %v2156, %v2265
      %v2277 = vadd.f32 %v2157, %v2270
      %v2278 = vld [vmem:[%s1488 + $0x4] sm:$0xc]
      %v2279 = vld [vmem:[%s1488 + $0x8] sm:$0xf]
      %v2280 = vld [vmem:[%s1488 + $0xc] sm:$0xf]
      %v2281 = vld [vmem:[%s1488 + $0x10] sm:$0x3]
      %s2282 = scalar_lea.vmem %s1, 960
      %v2283 = vld [vmem:[%s2282] sm:$0xf]
      %v2284 = vld [vmem:[%s2282 + $0x4] sm:$0xf]
      %v2285 = vld [vmem:[%s2282 + $0x8] sm:$0xf]
      %v2286 = vld [vmem:[%s2282 + $0xc] sm:$0xf]
      %v2287 = vld [vmem:[%s2282 + $0x10] sm:$0xf]
      %v2288 = vld [vmem:[%s2282 + $0x14] sm:$0xf]
      %v2289 = vld [vmem:[%s2282 + $0x18] sm:$0xf]
      %v2290 = vld [vmem:[%s2282 + $0x1c] sm:$0xf]
      %v2291 = vld [vmem:[%s2282 + $0x20] sm:$0xf]
      %v2292 = vld [vmem:[%s2282 + $0x24] sm:$0xf]
      %v2293 = vld [vmem:[%s2282 + $0x28] sm:$0xf]
      %v2294 = vld [vmem:[%s2282 + $0x2c] sm:$0xf]
      %v2295 = vld [vmem:[%s2282 + $0x30] sm:$0xf]
      %v2296 = vld [vmem:[%s2282 + $0x34] sm:$0xf]
      %v2297 = vld [vmem:[%s2282 + $0x38] sm:$0xf]
      %v2298 = vld [vmem:[%s2282 + $0x3c] sm:$0xf]
      %v2303 = vunpack.c.l.b16 %v2278
      %v2304 = vunpack.c.l.b16 %v2279
      %v2305 = vunpack.c.l.b16 %v2280
      %v2306 = vunpack.c.l.b16 %v2281
      %v2307 = vpack.c.b16 %v2304, %v2303
      %v2308 = vpack.c.b16 %v2306, %v2305
      %v2309 = vrot.slane %v2307, 2
      %v2310 = vrot.slane %v2308, 2
      %v2311 = vsel %vm1115, %v2309, %v2310
      %v2330 = vunpack.c.l.b16 %v2283
      %v2331 = vunpack.c.l.b16 %v2284
      %v2332 = vunpack.c.l.b16 %v2285
      %v2333 = vunpack.c.l.b16 %v2286
      %v2334 = vunpack.c.l.b16 %v2287
      %v2335 = vunpack.c.l.b16 %v2288
      %v2336 = vunpack.c.l.b16 %v2289
      %v2337 = vunpack.c.l.b16 %v2290
      %v2338 = vunpack.c.l.b16 %v2291
      %v2339 = vunpack.c.l.b16 %v2292
      %v2340 = vunpack.c.l.b16 %v2293
      %v2341 = vunpack.c.l.b16 %v2294
      %v2342 = vunpack.c.l.b16 %v2295
      %v2343 = vunpack.c.l.b16 %v2296
      %v2344 = vunpack.c.l.b16 %v2297
      %v2345 = vunpack.c.l.b16 %v2298
      %v2346 = vpack.c.b16 %v2331, %v2330
      %v2347 = vpack.c.b16 %v2333, %v2332
      %v2348 = vpack.c.b16 %v2335, %v2334
      %v2349 = vpack.c.b16 %v2337, %v2336
      %v2350 = vpack.c.b16 %v2339, %v2338
      %v2351 = vpack.c.b16 %v2341, %v2340
      %v2352 = vpack.c.b16 %v2343, %v2342
      %v2353 = vpack.c.b16 %v2345, %v2344
      %2362 = vmatprep.subr.bf16.mxu0 0
      %2363 = vmatpush1.bf16.msra.mxu0 %v2353
      %2364 = vmatprep.subr.bf16.mxu0 0
      %2365 = vmatpush1.bf16.msra.mxu0 %v2352
      %2366 = vmatprep.subr.bf16.mxu0 0
      %2367 = vmatpush1.bf16.msra.mxu0 %v2351
      %2368 = vmatprep.subr.bf16.mxu0 0
      %2369 = vmatpush1.bf16.msra.mxu0 %v2350
      %2370 = vmatprep.subr.bf16.mxu0 0
      %2371 = vmatpush1.bf16.msra.mxu0 %v2349
      %2372 = vmatprep.subr.bf16.mxu0 0
      %2373 = vmatpush1.bf16.msra.mxu0 %v2348
      %2374 = vmatprep.subr.bf16.mxu0 0
      %2375 = vmatpush1.bf16.msra.mxu0 %v2347
      %2376 = vmatprep.subr.bf16.mxu0 0
      %2377 = vmatpush1.bf16.msra.mxu0 %v2346
      %2378 = vmatprep.subr.bf16.mxu0 0
      %2379 = vmatpush2.bf16.msra.mxu0 0
      %2380 = vmatprep.subr.bf16.mxu0 0
      %2381 = vmatpush2.bf16.msra.mxu0 0
      %2382 = vmatprep.subr.bf16.mxu0 0
      %2383 = vmatpush2.bf16.msra.mxu0 0
      %2384 = vmatprep.subr.bf16.mxu0 0
      %2385 = vmatpush2.bf16.msra.mxu0 0
      %2386 = vmatprep.subr.bf16.mxu0 0
      %2387 = vmatpush2.bf16.msra.mxu0 0
      %2388 = vmatprep.subr.bf16.mxu0 0
      %2389 = vmatpush2.bf16.msra.mxu0 0
      %2390 = vmatprep.subr.bf16.mxu0 0
      %2391 = vmatpush2.bf16.msra.mxu0 0
      %2392 = vmatprep.subr.bf16.mxu0 0
      %2393 = vmatpush2.bf16.msra.mxu0 0
      %2394 = vmatprep.mubr.bf16.mxu0 0
      %2395 = vmatmul.mubr.bf16.gmra.mxu0 %v2311
      %v2396 = vpop.f32.mrf.mxu0
      %v2397 = vadd.f32 0.0, %v2396
      %v2398 = vpop.f32.mrf.mxu0
      %v2399 = vpop.f32.mrf.mxu0
      %v2400 = vadd.f32 0.0, %v2399
      %v2401 = vpop.f32.mrf.mxu0
      %2402 = vmatprep.mubr.bf16.mxu0 0
      %2403 = vmatmul.mubr.bf16.gmra.mxu0 %v2310
      %v2404 = vpop.f32.mrf.mxu0
      %v2405 = vadd.f32 0.0, %v2404
      %v2406 = vpop.f32.mrf.mxu0
      %v2407 = vpop.f32.mrf.mxu0
      %v2408 = vpop.f32.mrf.mxu0
      %2409 = vdwg.mxu0
      %v2410 = vadd.f32 %v2275, %v2397
      %v2411 = vadd.f32 %v2276, %v2400
      %v2412 = vadd.f32 %v2277, %v2405
      %v2413 = vld [vmem:[%s1488 + $0x10] sm:$0x7]
      %s2414 = scalar_lea.vmem %s1, 1024
      %v2415 = vld [vmem:[%s2414] sm:$0xf]
      %v2416 = vld [vmem:[%s2414 + $0x4] sm:$0xf]
      %v2417 = vld [vmem:[%s2414 + $0x8] sm:$0xf]
      %v2418 = vld [vmem:[%s2414 + $0xc] sm:$0xf]
      %v2419 = vld [vmem:[%s2414 + $0x10] sm:$0xf]
      %v2420 = vld [vmem:[%s2414 + $0x14] sm:$0xf]
      %v2421 = vld [vmem:[%s2414 + $0x18] sm:$0xf]
      %v2422 = vld [vmem:[%s2414 + $0x1c] sm:$0xf]
      %v2423 = vld [vmem:[%s2414 + $0x20] sm:$0xf]
      %v2424 = vld [vmem:[%s2414 + $0x24] sm:$0xf]
      %v2425 = vld [vmem:[%s2414 + $0x28] sm:$0xf]
      %v2426 = vld [vmem:[%s2414 + $0x2c] sm:$0xf]
      %v2427 = vld [vmem:[%s2414 + $0x30] sm:$0xf]
      %v2428 = vld [vmem:[%s2414 + $0x34] sm:$0xf]
      %v2429 = vld [vmem:[%s2414 + $0x38] sm:$0xf]
      %v2430 = vld [vmem:[%s2414 + $0x3c] sm:$0xf]
      %v2432 = vunpack.c.l.b16 %v2413
      %v2433 = vpack.c.b16 %v2432, %v2305
      %v2435 = vshrl.u32 %v2307, 16
      %v2437 = vrot.slane %v2435, 2
      %v2438 = vshll.u32 %v2307, 16
      %v2440 = vrot.slane %v2438, 3
      %v2441 = vor.u32 %v2437, %v2440
      %v2443 = vshrl.u32 %v2433, 16
      %v2445 = vrot.slane %v2443, 2
      %v2446 = vshll.u32 %v2433, 16
      %v2448 = vrot.slane %v2446, 3
      %v2449 = vor.u32 %v2445, %v2448
      %v2450 = vsel %vm1241, %v2441, %v2449
      %v2469 = vunpack.c.l.b16 %v2415
      %v2470 = vunpack.c.l.b16 %v2416
      %v2471 = vunpack.c.l.b16 %v2417
      %v2472 = vunpack.c.l.b16 %v2418
      %v2473 = vunpack.c.l.b16 %v2419
      %v2474 = vunpack.c.l.b16 %v2420
      %v2475 = vunpack.c.l.b16 %v2421
      %v2476 = vunpack.c.l.b16 %v2422
      %v2477 = vunpack.c.l.b16 %v2423
      %v2478 = vunpack.c.l.b16 %v2424
      %v2479 = vunpack.c.l.b16 %v2425
      %v2480 = vunpack.c.l.b16 %v2426
      %v2481 = vunpack.c.l.b16 %v2427
      %v2482 = vunpack.c.l.b16 %v2428
      %v2483 = vunpack.c.l.b16 %v2429
      %v2484 = vunpack.c.l.b16 %v2430
      %v2485 = vpack.c.b16 %v2470, %v2469
      %v2486 = vpack.c.b16 %v2472, %v2471
      %v2487 = vpack.c.b16 %v2474, %v2473
      %v2488 = vpack.c.b16 %v2476, %v2475
      %v2489 = vpack.c.b16 %v2478, %v2477
      %v2490 = vpack.c.b16 %v2480, %v2479
      %v2491 = vpack.c.b16 %v2482, %v2481
      %v2492 = vpack.c.b16 %v2484, %v2483
      %2501 = vmatprep.subr.bf16.mxu0 0
      %2502 = vmatpush1.bf16.msra.mxu0 %v2492
      %2503 = vmatprep.subr.bf16.mxu0 0
      %2504 = vmatpush1.bf16.msra.mxu0 %v2491
      %2505 = vmatprep.subr.bf16.mxu0 0
      %2506 = vmatpush1.bf16.msra.mxu0 %v2490
      %2507 = vmatprep.subr.bf16.mxu0 0
      %2508 = vmatpush1.bf16.msra.mxu0 %v2489
      %2509 = vmatprep.subr.bf16.mxu0 0
      %2510 = vmatpush1.bf16.msra.mxu0 %v2488
      %2511 = vmatprep.subr.bf16.mxu0 0
      %2512 = vmatpush1.bf16.msra.mxu0 %v2487
      %2513 = vmatprep.subr.bf16.mxu0 0
      %2514 = vmatpush1.bf16.msra.mxu0 %v2486
      %2515 = vmatprep.subr.bf16.mxu0 0
      %2516 = vmatpush1.bf16.msra.mxu0 %v2485
      %2517 = vmatprep.subr.bf16.mxu0 0
      %2518 = vmatpush2.bf16.msra.mxu0 0
      %2519 = vmatprep.subr.bf16.mxu0 0
      %2520 = vmatpush2.bf16.msra.mxu0 0
      %2521 = vmatprep.subr.bf16.mxu0 0
      %2522 = vmatpush2.bf16.msra.mxu0 0
      %2523 = vmatprep.subr.bf16.mxu0 0
      %2524 = vmatpush2.bf16.msra.mxu0 0
      %2525 = vmatprep.subr.bf16.mxu0 0
      %2526 = vmatpush2.bf16.msra.mxu0 0
      %2527 = vmatprep.subr.bf16.mxu0 0
      %2528 = vmatpush2.bf16.msra.mxu0 0
      %2529 = vmatprep.subr.bf16.mxu0 0
      %2530 = vmatpush2.bf16.msra.mxu0 0
      %2531 = vmatprep.subr.bf16.mxu0 0
      %2532 = vmatpush2.bf16.msra.mxu0 0
      %2533 = vmatprep.mubr.bf16.mxu0 0
      %2534 = vmatmul.mubr.bf16.gmra.mxu0 %v2450
      %v2535 = vpop.f32.mrf.mxu0
      %v2536 = vadd.f32 0.0, %v2535
      %v2537 = vpop.f32.mrf.mxu0
      %v2538 = vpop.f32.mrf.mxu0
      %v2539 = vadd.f32 0.0, %v2538
      %v2540 = vpop.f32.mrf.mxu0
      %2541 = vmatprep.mubr.bf16.mxu0 0
      %2542 = vmatmul.mubr.bf16.gmra.mxu0 %v2449
      %v2543 = vpop.f32.mrf.mxu0
      %v2544 = vadd.f32 0.0, %v2543
      %v2545 = vpop.f32.mrf.mxu0
      %v2546 = vpop.f32.mrf.mxu0
      %v2547 = vpop.f32.mrf.mxu0
      %2548 = vdwg.mxu0
      %v2549 = vadd.f32 %v2410, %v2536
      %v2550 = vadd.f32 %v2411, %v2539
      %v2551 = vadd.f32 %v2412, %v2544
      %v2552 = vld [vmem:[%s1488 + $0x4] sm:$0x8]
      %s2553 = scalar_lea.vmem %s1, 1088
      %v2554 = vld [vmem:[%s2553] sm:$0xf]
      %v2555 = vld [vmem:[%s2553 + $0x4] sm:$0xf]
      %v2556 = vld [vmem:[%s2553 + $0x8] sm:$0xf]
      %v2557 = vld [vmem:[%s2553 + $0xc] sm:$0xf]
      %v2558 = vld [vmem:[%s2553 + $0x10] sm:$0xf]
      %v2559 = vld [vmem:[%s2553 + $0x14] sm:$0xf]
      %v2560 = vld [vmem:[%s2553 + $0x18] sm:$0xf]
      %v2561 = vld [vmem:[%s2553 + $0x1c] sm:$0xf]
      %v2562 = vld [vmem:[%s2553 + $0x20] sm:$0xf]
      %v2563 = vld [vmem:[%s2553 + $0x24] sm:$0xf]
      %v2564 = vld [vmem:[%s2553 + $0x28] sm:$0xf]
      %v2565 = vld [vmem:[%s2553 + $0x2c] sm:$0xf]
      %v2566 = vld [vmem:[%s2553 + $0x30] sm:$0xf]
      %v2567 = vld [vmem:[%s2553 + $0x34] sm:$0xf]
      %v2568 = vld [vmem:[%s2553 + $0x38] sm:$0xf]
      %v2569 = vld [vmem:[%s2553 + $0x3c] sm:$0xf]
      %v2571 = vunpack.c.l.b16 %v2552
      %v2572 = vpack.c.b16 %v2304, %v2571
      %v2573 = vrot.slane %v2572, 3
      %v2574 = vrot.slane %v2433, 3
      %v2575 = vsel %vm719, %v2573, %v2574
      %v2594 = vunpack.c.l.b16 %v2554
      %v2595 = vunpack.c.l.b16 %v2555
      %v2596 = vunpack.c.l.b16 %v2556
      %v2597 = vunpack.c.l.b16 %v2557
      %v2598 = vunpack.c.l.b16 %v2558
      %v2599 = vunpack.c.l.b16 %v2559
      %v2600 = vunpack.c.l.b16 %v2560
      %v2601 = vunpack.c.l.b16 %v2561
      %v2602 = vunpack.c.l.b16 %v2562
      %v2603 = vunpack.c.l.b16 %v2563
      %v2604 = vunpack.c.l.b16 %v2564
      %v2605 = vunpack.c.l.b16 %v2565
      %v2606 = vunpack.c.l.b16 %v2566
      %v2607 = vunpack.c.l.b16 %v2567
      %v2608 = vunpack.c.l.b16 %v2568
      %v2609 = vunpack.c.l.b16 %v2569
      %v2610 = vpack.c.b16 %v2595, %v2594
      %v2611 = vpack.c.b16 %v2597, %v2596
      %v2612 = vpack.c.b16 %v2599, %v2598
      %v2613 = vpack.c.b16 %v2601, %v2600
      %v2614 = vpack.c.b16 %v2603, %v2602
      %v2615 = vpack.c.b16 %v2605, %v2604
      %v2616 = vpack.c.b16 %v2607, %v2606
      %v2617 = vpack.c.b16 %v2609, %v2608
      %2626 = vmatprep.subr.bf16.mxu0 0
      %2627 = vmatpush1.bf16.msra.mxu0 %v2617
      %2628 = vmatprep.subr.bf16.mxu0 0
      %2629 = vmatpush1.bf16.msra.mxu0 %v2616
      %2630 = vmatprep.subr.bf16.mxu0 0
      %2631 = vmatpush1.bf16.msra.mxu0 %v2615
      %2632 = vmatprep.subr.bf16.mxu0 0
      %2633 = vmatpush1.bf16.msra.mxu0 %v2614
      %2634 = vmatprep.subr.bf16.mxu0 0
      %2635 = vmatpush1.bf16.msra.mxu0 %v2613
      %2636 = vmatprep.subr.bf16.mxu0 0
      %2637 = vmatpush1.bf16.msra.mxu0 %v2612
      %2638 = vmatprep.subr.bf16.mxu0 0
      %2639 = vmatpush1.bf16.msra.mxu0 %v2611
      %2640 = vmatprep.subr.bf16.mxu0 0
      %2641 = vmatpush1.bf16.msra.mxu0 %v2610
      %2642 = vmatprep.subr.bf16.mxu0 0
      %2643 = vmatpush2.bf16.msra.mxu0 0
      %2644 = vmatprep.subr.bf16.mxu0 0
      %2645 = vmatpush2.bf16.msra.mxu0 0
      %2646 = vmatprep.subr.bf16.mxu0 0
      %2647 = vmatpush2.bf16.msra.mxu0 0
      %2648 = vmatprep.subr.bf16.mxu0 0
      %2649 = vmatpush2.bf16.msra.mxu0 0
      %2650 = vmatprep.subr.bf16.mxu0 0
      %2651 = vmatpush2.bf16.msra.mxu0 0
      %2652 = vmatprep.subr.bf16.mxu0 0
      %2653 = vmatpush2.bf16.msra.mxu0 0
      %2654 = vmatprep.subr.bf16.mxu0 0
      %2655 = vmatpush2.bf16.msra.mxu0 0
      %2656 = vmatprep.subr.bf16.mxu0 0
      %2657 = vmatpush2.bf16.msra.mxu0 0
      %2658 = vmatprep.mubr.bf16.mxu0 0
      %2659 = vmatmul.mubr.bf16.gmra.mxu0 %v2575
      %v2660 = vpop.f32.mrf.mxu0
      %v2661 = vadd.f32 0.0, %v2660
      %v2662 = vpop.f32.mrf.mxu0
      %v2663 = vpop.f32.mrf.mxu0
      %v2664 = vadd.f32 0.0, %v2663
      %v2665 = vpop.f32.mrf.mxu0
      %2666 = vmatprep.mubr.bf16.mxu0 0
      %2667 = vmatmul.mubr.bf16.gmra.mxu0 %v2574
      %v2668 = vpop.f32.mrf.mxu0
      %v2669 = vadd.f32 0.0, %v2668
      %v2670 = vpop.f32.mrf.mxu0
      %v2671 = vpop.f32.mrf.mxu0
      %v2672 = vpop.f32.mrf.mxu0
      %2673 = vdwg.mxu0
      %v2674 = vadd.f32 %v2549, %v2661
      %v2675 = vadd.f32 %v2550, %v2664
      %v2676 = vadd.f32 %v2551, %v2669
      %s2677 = sadd.s32 %s21, 2
      %s2678 = smul.u32 %s2677, 6
      %s2679 = smul.addr %s2678, 4
      %s2680 = scalar_lea.vmem %s262, %s2679
      %v2681 = vld [vmem:[%s2680] sm:$0xf]
      %v2682 = vld [vmem:[%s2680 + $0x4] sm:$0xf]
      %v2683 = vld [vmem:[%s2680 + $0x8] sm:$0xf]
      %s2684 = scalar_lea.vmem %s1, 1152
      %v2685 = vld [vmem:[%s2684] sm:$0xf]
      %v2686 = vld [vmem:[%s2684 + $0x4] sm:$0xf]
      %v2687 = vld [vmem:[%s2684 + $0x8] sm:$0xf]
      %v2688 = vld [vmem:[%s2684 + $0xc] sm:$0xf]
      %v2689 = vld [vmem:[%s2684 + $0x10] sm:$0xf]
      %v2690 = vld [vmem:[%s2684 + $0x14] sm:$0xf]
      %v2691 = vld [vmem:[%s2684 + $0x18] sm:$0xf]
      %v2692 = vld [vmem:[%s2684 + $0x1c] sm:$0xf]
      %v2693 = vld [vmem:[%s2684 + $0x20] sm:$0xf]
      %v2694 = vld [vmem:[%s2684 + $0x24] sm:$0xf]
      %v2695 = vld [vmem:[%s2684 + $0x28] sm:$0xf]
      %v2696 = vld [vmem:[%s2684 + $0x2c] sm:$0xf]
      %v2697 = vld [vmem:[%s2684 + $0x30] sm:$0xf]
      %v2698 = vld [vmem:[%s2684 + $0x34] sm:$0xf]
      %v2699 = vld [vmem:[%s2684 + $0x38] sm:$0xf]
      %v2700 = vld [vmem:[%s2684 + $0x3c] sm:$0xf]
      %v2704 = vunpack.c.l.b16 %v2681
      %v2705 = vunpack.c.l.b16 %v2682
      %v2706 = vunpack.c.l.b16 %v2683
      %v2707 = vpack.c.b16 %v2705, %v2704
      %v2708 = vpack.c.b16 %v2706, %v2706
      %v2727 = vunpack.c.l.b16 %v2685
      %v2728 = vunpack.c.l.b16 %v2686
      %v2729 = vunpack.c.l.b16 %v2687
      %v2730 = vunpack.c.l.b16 %v2688
      %v2731 = vunpack.c.l.b16 %v2689
      %v2732 = vunpack.c.l.b16 %v2690
      %v2733 = vunpack.c.l.b16 %v2691
      %v2734 = vunpack.c.l.b16 %v2692
      %v2735 = vunpack.c.l.b16 %v2693
      %v2736 = vunpack.c.l.b16 %v2694
      %v2737 = vunpack.c.l.b16 %v2695
      %v2738 = vunpack.c.l.b16 %v2696
      %v2739 = vunpack.c.l.b16 %v2697
      %v2740 = vunpack.c.l.b16 %v2698
      %v2741 = vunpack.c.l.b16 %v2699
      %v2742 = vunpack.c.l.b16 %v2700
      %v2743 = vpack.c.b16 %v2728, %v2727
      %v2744 = vpack.c.b16 %v2730, %v2729
      %v2745 = vpack.c.b16 %v2732, %v2731
      %v2746 = vpack.c.b16 %v2734, %v2733
      %v2747 = vpack.c.b16 %v2736, %v2735
      %v2748 = vpack.c.b16 %v2738, %v2737
      %v2749 = vpack.c.b16 %v2740, %v2739
      %v2750 = vpack.c.b16 %v2742, %v2741
      %2759 = vmatprep.subr.bf16.mxu0 0
      %2760 = vmatpush1.bf16.msra.mxu0 %v2750
      %2761 = vmatprep.subr.bf16.mxu0 0
      %2762 = vmatpush1.bf16.msra.mxu0 %v2749
      %2763 = vmatprep.subr.bf16.mxu0 0
      %2764 = vmatpush1.bf16.msra.mxu0 %v2748
      %2765 = vmatprep.subr.bf16.mxu0 0
      %2766 = vmatpush1.bf16.msra.mxu0 %v2747
      %2767 = vmatprep.subr.bf16.mxu0 0
      %2768 = vmatpush1.bf16.msra.mxu0 %v2746
      %2769 = vmatprep.subr.bf16.mxu0 0
      %2770 = vmatpush1.bf16.msra.mxu0 %v2745
      %2771 = vmatprep.subr.bf16.mxu0 0
      %2772 = vmatpush1.bf16.msra.mxu0 %v2744
      %2773 = vmatprep.subr.bf16.mxu0 0
      %2774 = vmatpush1.bf16.msra.mxu0 %v2743
      %2775 = vmatprep.subr.bf16.mxu0 0
      %2776 = vmatpush2.bf16.msra.mxu0 0
      %2777 = vmatprep.subr.bf16.mxu0 0
      %2778 = vmatpush2.bf16.msra.mxu0 0
      %2779 = vmatprep.subr.bf16.mxu0 0
      %2780 = vmatpush2.bf16.msra.mxu0 0
      %2781 = vmatprep.subr.bf16.mxu0 0
      %2782 = vmatpush2.bf16.msra.mxu0 0
      %2783 = vmatprep.subr.bf16.mxu0 0
      %2784 = vmatpush2.bf16.msra.mxu0 0
      %2785 = vmatprep.subr.bf16.mxu0 0
      %2786 = vmatpush2.bf16.msra.mxu0 0
      %2787 = vmatprep.subr.bf16.mxu0 0
      %2788 = vmatpush2.bf16.msra.mxu0 0
      %2789 = vmatprep.subr.bf16.mxu0 0
      %2790 = vmatpush2.bf16.msra.mxu0 0
      %2791 = vmatprep.mubr.bf16.mxu0 0
      %2792 = vmatmul.mubr.bf16.gmra.mxu0 %v2707
      %v2793 = vpop.f32.mrf.mxu0
      %v2794 = vadd.f32 0.0, %v2793
      %v2795 = vpop.f32.mrf.mxu0
      %v2796 = vpop.f32.mrf.mxu0
      %v2797 = vadd.f32 0.0, %v2796
      %v2798 = vpop.f32.mrf.mxu0
      %2799 = vmatprep.mubr.bf16.mxu0 0
      %2800 = vmatmul.mubr.bf16.gmra.mxu0 %v2708
      %v2801 = vpop.f32.mrf.mxu0
      %v2802 = vadd.f32 0.0, %v2801
      %v2803 = vpop.f32.mrf.mxu0
      %v2804 = vpop.f32.mrf.mxu0
      %v2805 = vpop.f32.mrf.mxu0
      %2806 = vdwg.mxu0
      %v2807 = vadd.f32 %v2674, %v2794
      %v2808 = vadd.f32 %v2675, %v2797
      %v2809 = vadd.f32 %v2676, %v2802
      %v2810 = vld [vmem:[%s2680] sm:$0xf]
      %v2811 = vld [vmem:[%s2680 + $0x4] sm:$0xf]
      %v2812 = vld [vmem:[%s2680 + $0x8] sm:$0xf]
      %v2813 = vld [vmem:[%s2680 + $0xc] sm:$0x1]
      %s2814 = scalar_lea.vmem %s1, 1216
      %v2815 = vld [vmem:[%s2814] sm:$0xf]
      %v2816 = vld [vmem:[%s2814 + $0x4] sm:$0xf]
      %v2817 = vld [vmem:[%s2814 + $0x8] sm:$0xf]
      %v2818 = vld [vmem:[%s2814 + $0xc] sm:$0xf]
      %v2819 = vld [vmem:[%s2814 + $0x10] sm:$0xf]
      %v2820 = vld [vmem:[%s2814 + $0x14] sm:$0xf]
      %v2821 = vld [vmem:[%s2814 + $0x18] sm:$0xf]
      %v2822 = vld [vmem:[%s2814 + $0x1c] sm:$0xf]
      %v2823 = vld [vmem:[%s2814 + $0x20] sm:$0xf]
      %v2824 = vld [vmem:[%s2814 + $0x24] sm:$0xf]
      %v2825 = vld [vmem:[%s2814 + $0x28] sm:$0xf]
      %v2826 = vld [vmem:[%s2814 + $0x2c] sm:$0xf]
      %v2827 = vld [vmem:[%s2814 + $0x30] sm:$0xf]
      %v2828 = vld [vmem:[%s2814 + $0x34] sm:$0xf]
      %v2829 = vld [vmem:[%s2814 + $0x38] sm:$0xf]
      %v2830 = vld [vmem:[%s2814 + $0x3c] sm:$0xf]
      %v2835 = vunpack.c.l.b16 %v2810
      %v2836 = vunpack.c.l.b16 %v2811
      %v2837 = vunpack.c.l.b16 %v2812
      %v2838 = vunpack.c.l.b16 %v2813
      %v2839 = vpack.c.b16 %v2836, %v2835
      %v2840 = vpack.c.b16 %v2838, %v2837
      %v2842 = vshrl.u32 %v2839, 16
      %v2844 = vshll.u32 %v2839, 16
      %v2846 = vrot.slane %v2844, 1
      %v2847 = vor.u32 %v2842, %v2846
      %v2849 = vshll.u32 %v2840, 16
      %v2851 = vrot.slane %v2849, 1
      %v2852 = vsel %vm451, %v2847, %v2851
      %v2853 = vshrl.u32 %v2840, 16
      %v2855 = vor.u32 %v2853, %v2851
      %v2874 = vunpack.c.l.b16 %v2815
      %v2875 = vunpack.c.l.b16 %v2816
      %v2876 = vunpack.c.l.b16 %v2817
      %v2877 = vunpack.c.l.b16 %v2818
      %v2878 = vunpack.c.l.b16 %v2819
      %v2879 = vunpack.c.l.b16 %v2820
      %v2880 = vunpack.c.l.b16 %v2821
      %v2881 = vunpack.c.l.b16 %v2822
      %v2882 = vunpack.c.l.b16 %v2823
      %v2883 = vunpack.c.l.b16 %v2824
      %v2884 = vunpack.c.l.b16 %v2825
      %v2885 = vunpack.c.l.b16 %v2826
      %v2886 = vunpack.c.l.b16 %v2827
      %v2887 = vunpack.c.l.b16 %v2828
      %v2888 = vunpack.c.l.b16 %v2829
      %v2889 = vunpack.c.l.b16 %v2830
      %v2890 = vpack.c.b16 %v2875, %v2874
      %v2891 = vpack.c.b16 %v2877, %v2876
      %v2892 = vpack.c.b16 %v2879, %v2878
      %v2893 = vpack.c.b16 %v2881, %v2880
      %v2894 = vpack.c.b16 %v2883, %v2882
      %v2895 = vpack.c.b16 %v2885, %v2884
      %v2896 = vpack.c.b16 %v2887, %v2886
      %v2897 = vpack.c.b16 %v2889, %v2888
      %2906 = vmatprep.subr.bf16.mxu0 0
      %2907 = vmatpush1.bf16.msra.mxu0 %v2897
      %2908 = vmatprep.subr.bf16.mxu0 0
      %2909 = vmatpush1.bf16.msra.mxu0 %v2896
      %2910 = vmatprep.subr.bf16.mxu0 0
      %2911 = vmatpush1.bf16.msra.mxu0 %v2895
      %2912 = vmatprep.subr.bf16.mxu0 0
      %2913 = vmatpush1.bf16.msra.mxu0 %v2894
      %2914 = vmatprep.subr.bf16.mxu0 0
      %2915 = vmatpush1.bf16.msra.mxu0 %v2893
      %2916 = vmatprep.subr.bf16.mxu0 0
      %2917 = vmatpush1.bf16.msra.mxu0 %v2892
      %2918 = vmatprep.subr.bf16.mxu0 0
      %2919 = vmatpush1.bf16.msra.mxu0 %v2891
      %2920 = vmatprep.subr.bf16.mxu0 0
      %2921 = vmatpush1.bf16.msra.mxu0 %v2890
      %2922 = vmatprep.subr.bf16.mxu0 0
      %2923 = vmatpush2.bf16.msra.mxu0 0
      %2924 = vmatprep.subr.bf16.mxu0 0
      %2925 = vmatpush2.bf16.msra.mxu0 0
      %2926 = vmatprep.subr.bf16.mxu0 0
      %2927 = vmatpush2.bf16.msra.mxu0 0
      %2928 = vmatprep.subr.bf16.mxu0 0
      %2929 = vmatpush2.bf16.msra.mxu0 0
      %2930 = vmatprep.subr.bf16.mxu0 0
      %2931 = vmatpush2.bf16.msra.mxu0 0
      %2932 = vmatprep.subr.bf16.mxu0 0
      %2933 = vmatpush2.bf16.msra.mxu0 0
      %2934 = vmatprep.subr.bf16.mxu0 0
      %2935 = vmatpush2.bf16.msra.mxu0 0
      %2936 = vmatprep.subr.bf16.mxu0 0
      %2937 = vmatpush2.bf16.msra.mxu0 0
      %2938 = vmatprep.mubr.bf16.mxu0 0
      %2939 = vmatmul.mubr.bf16.gmra.mxu0 %v2852
      %v2940 = vpop.f32.mrf.mxu0
      %v2941 = vadd.f32 0.0, %v2940
      %v2942 = vpop.f32.mrf.mxu0
      %v2943 = vpop.f32.mrf.mxu0
      %v2944 = vadd.f32 0.0, %v2943
      %v2945 = vpop.f32.mrf.mxu0
      %2946 = vmatprep.mubr.bf16.mxu0 0
      %2947 = vmatmul.mubr.bf16.gmra.mxu0 %v2855
      %v2948 = vpop.f32.mrf.mxu0
      %v2949 = vadd.f32 0.0, %v2948
      %v2950 = vpop.f32.mrf.mxu0
      %v2951 = vpop.f32.mrf.mxu0
      %v2952 = vpop.f32.mrf.mxu0
      %2953 = vdwg.mxu0
      %v2954 = vadd.f32 %v2807, %v2941
      %v2955 = vadd.f32 %v2808, %v2944
      %v2956 = vadd.f32 %v2809, %v2949
      %v2957 = vld [vmem:[%s2680] sm:$0xe]
      %s2958 = scalar_lea.vmem %s1, 1280
      %v2959 = vld [vmem:[%s2958] sm:$0xf]
      %v2960 = vld [vmem:[%s2958 + $0x4] sm:$0xf]
      %v2961 = vld [vmem:[%s2958 + $0x8] sm:$0xf]
      %v2962 = vld [vmem:[%s2958 + $0xc] sm:$0xf]
      %v2963 = vld [vmem:[%s2958 + $0x10] sm:$0xf]
      %v2964 = vld [vmem:[%s2958 + $0x14] sm:$0xf]
      %v2965 = vld [vmem:[%s2958 + $0x18] sm:$0xf]
      %v2966 = vld [vmem:[%s2958 + $0x1c] sm:$0xf]
      %v2967 = vld [vmem:[%s2958 + $0x20] sm:$0xf]
      %v2968 = vld [vmem:[%s2958 + $0x24] sm:$0xf]
      %v2969 = vld [vmem:[%s2958 + $0x28] sm:$0xf]
      %v2970 = vld [vmem:[%s2958 + $0x2c] sm:$0xf]
      %v2971 = vld [vmem:[%s2958 + $0x30] sm:$0xf]
      %v2972 = vld [vmem:[%s2958 + $0x34] sm:$0xf]
      %v2973 = vld [vmem:[%s2958 + $0x38] sm:$0xf]
      %v2974 = vld [vmem:[%s2958 + $0x3c] sm:$0xf]
      %v2976 = vunpack.c.l.b16 %v2957
      %v2977 = vpack.c.b16 %v2836, %v2976
      %v2978 = vrot.slane %v2977, 1
      %v2979 = vrot.slane %v2840, 1
      %v2980 = vsel %vm589, %v2978, %v2979
      %v2999 = vunpack.c.l.b16 %v2959
      %v3000 = vunpack.c.l.b16 %v2960
      %v3001 = vunpack.c.l.b16 %v2961
      %v3002 = vunpack.c.l.b16 %v2962
      %v3003 = vunpack.c.l.b16 %v2963
      %v3004 = vunpack.c.l.b16 %v2964
      %v3005 = vunpack.c.l.b16 %v2965
      %v3006 = vunpack.c.l.b16 %v2966
      %v3007 = vunpack.c.l.b16 %v2967
      %v3008 = vunpack.c.l.b16 %v2968
      %v3009 = vunpack.c.l.b16 %v2969
      %v3010 = vunpack.c.l.b16 %v2970
      %v3011 = vunpack.c.l.b16 %v2971
      %v3012 = vunpack.c.l.b16 %v2972
      %v3013 = vunpack.c.l.b16 %v2973
      %v3014 = vunpack.c.l.b16 %v2974
      %v3015 = vpack.c.b16 %v3000, %v2999
      %v3016 = vpack.c.b16 %v3002, %v3001
      %v3017 = vpack.c.b16 %v3004, %v3003
      %v3018 = vpack.c.b16 %v3006, %v3005
      %v3019 = vpack.c.b16 %v3008, %v3007
      %v3020 = vpack.c.b16 %v3010, %v3009
      %v3021 = vpack.c.b16 %v3012, %v3011
      %v3022 = vpack.c.b16 %v3014, %v3013
      %3031 = vmatprep.subr.bf16.mxu0 0
      %3032 = vmatpush1.bf16.msra.mxu0 %v3022
      %3033 = vmatprep.subr.bf16.mxu0 0
      %3034 = vmatpush1.bf16.msra.mxu0 %v3021
      %3035 = vmatprep.subr.bf16.mxu0 0
      %3036 = vmatpush1.bf16.msra.mxu0 %v3020
      %3037 = vmatprep.subr.bf16.mxu0 0
      %3038 = vmatpush1.bf16.msra.mxu0 %v3019
      %3039 = vmatprep.subr.bf16.mxu0 0
      %3040 = vmatpush1.bf16.msra.mxu0 %v3018
      %3041 = vmatprep.subr.bf16.mxu0 0
      %3042 = vmatpush1.bf16.msra.mxu0 %v3017
      %3043 = vmatprep.subr.bf16.mxu0 0
      %3044 = vmatpush1.bf16.msra.mxu0 %v3016
      %3045 = vmatprep.subr.bf16.mxu0 0
      %3046 = vmatpush1.bf16.msra.mxu0 %v3015
      %3047 = vmatprep.subr.bf16.mxu0 0
      %3048 = vmatpush2.bf16.msra.mxu0 0
      %3049 = vmatprep.subr.bf16.mxu0 0
      %3050 = vmatpush2.bf16.msra.mxu0 0
      %3051 = vmatprep.subr.bf16.mxu0 0
      %3052 = vmatpush2.bf16.msra.mxu0 0
      %3053 = vmatprep.subr.bf16.mxu0 0
      %3054 = vmatpush2.bf16.msra.mxu0 0
      %3055 = vmatprep.subr.bf16.mxu0 0
      %3056 = vmatpush2.bf16.msra.mxu0 0
      %3057 = vmatprep.subr.bf16.mxu0 0
      %3058 = vmatpush2.bf16.msra.mxu0 0
      %3059 = vmatprep.subr.bf16.mxu0 0
      %3060 = vmatpush2.bf16.msra.mxu0 0
      %3061 = vmatprep.subr.bf16.mxu0 0
      %3062 = vmatpush2.bf16.msra.mxu0 0
      %3063 = vmatprep.mubr.bf16.mxu0 0
      %3064 = vmatmul.mubr.bf16.gmra.mxu0 %v2980
      %v3065 = vpop.f32.mrf.mxu0
      %v3066 = vadd.f32 0.0, %v3065
      %v3067 = vpop.f32.mrf.mxu0
      %v3068 = vpop.f32.mrf.mxu0
      %v3069 = vadd.f32 0.0, %v3068
      %v3070 = vpop.f32.mrf.mxu0
      %3071 = vmatprep.mubr.bf16.mxu0 0
      %3072 = vmatmul.mubr.bf16.gmra.mxu0 %v2979
      %v3073 = vpop.f32.mrf.mxu0
      %v3074 = vadd.f32 0.0, %v3073
      %v3075 = vpop.f32.mrf.mxu0
      %v3076 = vpop.f32.mrf.mxu0
      %v3077 = vpop.f32.mrf.mxu0
      %3078 = vdwg.mxu0
      %v3079 = vadd.f32 %v2954, %v3066
      %v3080 = vadd.f32 %v2955, %v3069
      %v3081 = vadd.f32 %v2956, %v3074
      %v3082 = vld [vmem:[%s2680] sm:$0x8]
      %v3083 = vld [vmem:[%s2680 + $0xc] sm:$0x7]
      %s3084 = scalar_lea.vmem %s1, 1344
      %v3085 = vld [vmem:[%s3084] sm:$0xf]
      %v3086 = vld [vmem:[%s3084 + $0x4] sm:$0xf]
      %v3087 = vld [vmem:[%s3084 + $0x8] sm:$0xf]
      %v3088 = vld [vmem:[%s3084 + $0xc] sm:$0xf]
      %v3089 = vld [vmem:[%s3084 + $0x10] sm:$0xf]
      %v3090 = vld [vmem:[%s3084 + $0x14] sm:$0xf]
      %v3091 = vld [vmem:[%s3084 + $0x18] sm:$0xf]
      %v3092 = vld [vmem:[%s3084 + $0x1c] sm:$0xf]
      %v3093 = vld [vmem:[%s3084 + $0x20] sm:$0xf]
      %v3094 = vld [vmem:[%s3084 + $0x24] sm:$0xf]
      %v3095 = vld [vmem:[%s3084 + $0x28] sm:$0xf]
      %v3096 = vld [vmem:[%s3084 + $0x2c] sm:$0xf]
      %v3097 = vld [vmem:[%s3084 + $0x30] sm:$0xf]
      %v3098 = vld [vmem:[%s3084 + $0x34] sm:$0xf]
      %v3099 = vld [vmem:[%s3084 + $0x38] sm:$0xf]
      %v3100 = vld [vmem:[%s3084 + $0x3c] sm:$0xf]
      %v3103 = vunpack.c.l.b16 %v3082
      %v3104 = vunpack.c.l.b16 %v3083
      %v3105 = vpack.c.b16 %v2836, %v3103
      %v3106 = vpack.c.b16 %v3104, %v2837
      %v3107 = vrot.slane %v3105, 3
      %v3108 = vrot.slane %v3106, 3
      %v3109 = vsel %vm719, %v3107, %v3108
      %v3128 = vunpack.c.l.b16 %v3085
      %v3129 = vunpack.c.l.b16 %v3086
      %v3130 = vunpack.c.l.b16 %v3087
      %v3131 = vunpack.c.l.b16 %v3088
      %v3132 = vunpack.c.l.b16 %v3089
      %v3133 = vunpack.c.l.b16 %v3090
      %v3134 = vunpack.c.l.b16 %v3091
      %v3135 = vunpack.c.l.b16 %v3092
      %v3136 = vunpack.c.l.b16 %v3093
      %v3137 = vunpack.c.l.b16 %v3094
      %v3138 = vunpack.c.l.b16 %v3095
      %v3139 = vunpack.c.l.b16 %v3096
      %v3140 = vunpack.c.l.b16 %v3097
      %v3141 = vunpack.c.l.b16 %v3098
      %v3142 = vunpack.c.l.b16 %v3099
      %v3143 = vunpack.c.l.b16 %v3100
      %v3144 = vpack.c.b16 %v3129, %v3128
      %v3145 = vpack.c.b16 %v3131, %v3130
      %v3146 = vpack.c.b16 %v3133, %v3132
      %v3147 = vpack.c.b16 %v3135, %v3134
      %v3148 = vpack.c.b16 %v3137, %v3136
      %v3149 = vpack.c.b16 %v3139, %v3138
      %v3150 = vpack.c.b16 %v3141, %v3140
      %v3151 = vpack.c.b16 %v3143, %v3142
      %3160 = vmatprep.subr.bf16.mxu0 0
      %3161 = vmatpush1.bf16.msra.mxu0 %v3151
      %3162 = vmatprep.subr.bf16.mxu0 0
      %3163 = vmatpush1.bf16.msra.mxu0 %v3150
      %3164 = vmatprep.subr.bf16.mxu0 0
      %3165 = vmatpush1.bf16.msra.mxu0 %v3149
      %3166 = vmatprep.subr.bf16.mxu0 0
      %3167 = vmatpush1.bf16.msra.mxu0 %v3148
      %3168 = vmatprep.subr.bf16.mxu0 0
      %3169 = vmatpush1.bf16.msra.mxu0 %v3147
      %3170 = vmatprep.subr.bf16.mxu0 0
      %3171 = vmatpush1.bf16.msra.mxu0 %v3146
      %3172 = vmatprep.subr.bf16.mxu0 0
      %3173 = vmatpush1.bf16.msra.mxu0 %v3145
      %3174 = vmatprep.subr.bf16.mxu0 0
      %3175 = vmatpush1.bf16.msra.mxu0 %v3144
      %3176 = vmatprep.subr.bf16.mxu0 0
      %3177 = vmatpush2.bf16.msra.mxu0 0
      %3178 = vmatprep.subr.bf16.mxu0 0
      %3179 = vmatpush2.bf16.msra.mxu0 0
      %3180 = vmatprep.subr.bf16.mxu0 0
      %3181 = vmatpush2.bf16.msra.mxu0 0
      %3182 = vmatprep.subr.bf16.mxu0 0
      %3183 = vmatpush2.bf16.msra.mxu0 0
      %3184 = vmatprep.subr.bf16.mxu0 0
      %3185 = vmatpush2.bf16.msra.mxu0 0
      %3186 = vmatprep.subr.bf16.mxu0 0
      %3187 = vmatpush2.bf16.msra.mxu0 0
      %3188 = vmatprep.subr.bf16.mxu0 0
      %3189 = vmatpush2.bf16.msra.mxu0 0
      %3190 = vmatprep.subr.bf16.mxu0 0
      %3191 = vmatpush2.bf16.msra.mxu0 0
      %3192 = vmatprep.mubr.bf16.mxu0 0
      %3193 = vmatmul.mubr.bf16.gmra.mxu0 %v3109
      %v3194 = vpop.f32.mrf.mxu0
      %v3195 = vadd.f32 0.0, %v3194
      %v3196 = vpop.f32.mrf.mxu0
      %v3197 = vpop.f32.mrf.mxu0
      %v3198 = vadd.f32 0.0, %v3197
      %v3199 = vpop.f32.mrf.mxu0
      %3200 = vmatprep.mubr.bf16.mxu0 0
      %3201 = vmatmul.mubr.bf16.gmra.mxu0 %v3108
      %v3202 = vpop.f32.mrf.mxu0
      %v3203 = vadd.f32 0.0, %v3202
      %v3204 = vpop.f32.mrf.mxu0
      %v3205 = vpop.f32.mrf.mxu0
      %v3206 = vpop.f32.mrf.mxu0
      %3207 = vdwg.mxu0
      %v3208 = vadd.f32 %v3079, %v3195
      %v3209 = vadd.f32 %v3080, %v3198
      %v3210 = vadd.f32 %v3081, %v3203
      %v3211 = vld [vmem:[%s2680 + $0xc] sm:$0xf]
      %s3212 = scalar_lea.vmem %s1, 1408
      %v3213 = vld [vmem:[%s3212] sm:$0xf]
      %v3214 = vld [vmem:[%s3212 + $0x4] sm:$0xf]
      %v3215 = vld [vmem:[%s3212 + $0x8] sm:$0xf]
      %v3216 = vld [vmem:[%s3212 + $0xc] sm:$0xf]
      %v3217 = vld [vmem:[%s3212 + $0x10] sm:$0xf]
      %v3218 = vld [vmem:[%s3212 + $0x14] sm:$0xf]
      %v3219 = vld [vmem:[%s3212 + $0x18] sm:$0xf]
      %v3220 = vld [vmem:[%s3212 + $0x1c] sm:$0xf]
      %v3221 = vld [vmem:[%s3212 + $0x20] sm:$0xf]
      %v3222 = vld [vmem:[%s3212 + $0x24] sm:$0xf]
      %v3223 = vld [vmem:[%s3212 + $0x28] sm:$0xf]
      %v3224 = vld [vmem:[%s3212 + $0x2c] sm:$0xf]
      %v3225 = vld [vmem:[%s3212 + $0x30] sm:$0xf]
      %v3226 = vld [vmem:[%s3212 + $0x34] sm:$0xf]
      %v3227 = vld [vmem:[%s3212 + $0x38] sm:$0xf]
      %v3228 = vld [vmem:[%s3212 + $0x3c] sm:$0xf]
      %v3230 = vunpack.c.l.b16 %v3211
      %v3231 = vpack.c.b16 %v3230, %v2837
      %v3233 = vshrl.u32 %v3105, 16
      %v3235 = vrot.slane %v3233, 3
      %v3236 = vshll.u32 %v3105, 16
      %v3238 = vrot.slane %v3236, 4
      %v3239 = vor.u32 %v3235, %v3238
      %v3241 = vshrl.u32 %v3231, 16
      %v3243 = vrot.slane %v3241, 3
      %v3244 = vshll.u32 %v3231, 16
      %v3246 = vrot.slane %v3244, 4
      %v3247 = vor.u32 %v3243, %v3246
      %v3248 = vsel %vm845, %v3239, %v3247
      %v3267 = vunpack.c.l.b16 %v3213
      %v3268 = vunpack.c.l.b16 %v3214
      %v3269 = vunpack.c.l.b16 %v3215
      %v3270 = vunpack.c.l.b16 %v3216
      %v3271 = vunpack.c.l.b16 %v3217
      %v3272 = vunpack.c.l.b16 %v3218
      %v3273 = vunpack.c.l.b16 %v3219
      %v3274 = vunpack.c.l.b16 %v3220
      %v3275 = vunpack.c.l.b16 %v3221
      %v3276 = vunpack.c.l.b16 %v3222
      %v3277 = vunpack.c.l.b16 %v3223
      %v3278 = vunpack.c.l.b16 %v3224
      %v3279 = vunpack.c.l.b16 %v3225
      %v3280 = vunpack.c.l.b16 %v3226
      %v3281 = vunpack.c.l.b16 %v3227
      %v3282 = vunpack.c.l.b16 %v3228
      %v3283 = vpack.c.b16 %v3268, %v3267
      %v3284 = vpack.c.b16 %v3270, %v3269
      %v3285 = vpack.c.b16 %v3272, %v3271
      %v3286 = vpack.c.b16 %v3274, %v3273
      %v3287 = vpack.c.b16 %v3276, %v3275
      %v3288 = vpack.c.b16 %v3278, %v3277
      %v3289 = vpack.c.b16 %v3280, %v3279
      %v3290 = vpack.c.b16 %v3282, %v3281
      %3299 = vmatprep.subr.bf16.mxu0 0
      %3300 = vmatpush1.bf16.msra.mxu0 %v3290
      %3301 = vmatprep.subr.bf16.mxu0 0
      %3302 = vmatpush1.bf16.msra.mxu0 %v3289
      %3303 = vmatprep.subr.bf16.mxu0 0
      %3304 = vmatpush1.bf16.msra.mxu0 %v3288
      %3305 = vmatprep.subr.bf16.mxu0 0
      %3306 = vmatpush1.bf16.msra.mxu0 %v3287
      %3307 = vmatprep.subr.bf16.mxu0 0
      %3308 = vmatpush1.bf16.msra.mxu0 %v3286
      %3309 = vmatprep.subr.bf16.mxu0 0
      %3310 = vmatpush1.bf16.msra.mxu0 %v3285
      %3311 = vmatprep.subr.bf16.mxu0 0
      %3312 = vmatpush1.bf16.msra.mxu0 %v3284
      %3313 = vmatprep.subr.bf16.mxu0 0
      %3314 = vmatpush1.bf16.msra.mxu0 %v3283
      %3315 = vmatprep.subr.bf16.mxu0 0
      %3316 = vmatpush2.bf16.msra.mxu0 0
      %3317 = vmatprep.subr.bf16.mxu0 0
      %3318 = vmatpush2.bf16.msra.mxu0 0
      %3319 = vmatprep.subr.bf16.mxu0 0
      %3320 = vmatpush2.bf16.msra.mxu0 0
      %3321 = vmatprep.subr.bf16.mxu0 0
      %3322 = vmatpush2.bf16.msra.mxu0 0
      %3323 = vmatprep.subr.bf16.mxu0 0
      %3324 = vmatpush2.bf16.msra.mxu0 0
      %3325 = vmatprep.subr.bf16.mxu0 0
      %3326 = vmatpush2.bf16.msra.mxu0 0
      %3327 = vmatprep.subr.bf16.mxu0 0
      %3328 = vmatpush2.bf16.msra.mxu0 0
      %3329 = vmatprep.subr.bf16.mxu0 0
      %3330 = vmatpush2.bf16.msra.mxu0 0
      %3331 = vmatprep.mubr.bf16.mxu0 0
      %3332 = vmatmul.mubr.bf16.gmra.mxu0 %v3248
      %v3333 = vpop.f32.mrf.mxu0
      %v3334 = vadd.f32 0.0, %v3333
      %v3335 = vpop.f32.mrf.mxu0
      %v3336 = vpop.f32.mrf.mxu0
      %v3337 = vadd.f32 0.0, %v3336
      %v3338 = vpop.f32.mrf.mxu0
      %3339 = vmatprep.mubr.bf16.mxu0 0
      %3340 = vmatmul.mubr.bf16.gmra.mxu0 %v3247
      %v3341 = vpop.f32.mrf.mxu0
      %v3342 = vadd.f32 0.0, %v3341
      %v3343 = vpop.f32.mrf.mxu0
      %v3344 = vpop.f32.mrf.mxu0
      %v3345 = vpop.f32.mrf.mxu0
      %3346 = vdwg.mxu0
      %v3347 = vadd.f32 %v3208, %v3334
      %v3348 = vadd.f32 %v3209, %v3337
      %v3349 = vadd.f32 %v3210, %v3342
      %s3350 = scalar_lea.vmem %s1, 1472
      %v3351 = vld [vmem:[%s3350] sm:$0xf]
      %v3352 = vld [vmem:[%s3350 + $0x4] sm:$0xf]
      %v3353 = vld [vmem:[%s3350 + $0x8] sm:$0xf]
      %v3354 = vld [vmem:[%s3350 + $0xc] sm:$0xf]
      %v3355 = vld [vmem:[%s3350 + $0x10] sm:$0xf]
      %v3356 = vld [vmem:[%s3350 + $0x14] sm:$0xf]
      %v3357 = vld [vmem:[%s3350 + $0x18] sm:$0xf]
      %v3358 = vld [vmem:[%s3350 + $0x1c] sm:$0xf]
      %v3359 = vld [vmem:[%s3350 + $0x20] sm:$0xf]
      %v3360 = vld [vmem:[%s3350 + $0x24] sm:$0xf]
      %v3361 = vld [vmem:[%s3350 + $0x28] sm:$0xf]
      %v3362 = vld [vmem:[%s3350 + $0x2c] sm:$0xf]
      %v3363 = vld [vmem:[%s3350 + $0x30] sm:$0xf]
      %v3364 = vld [vmem:[%s3350 + $0x34] sm:$0xf]
      %v3365 = vld [vmem:[%s3350 + $0x38] sm:$0xf]
      %v3366 = vld [vmem:[%s3350 + $0x3c] sm:$0xf]
      %v3367 = vpack.c.b16 %v2837, %v2836
      %v3368 = vpack.c.b16 %v3230, %v3230
      %v3387 = vunpack.c.l.b16 %v3351
      %v3388 = vunpack.c.l.b16 %v3352
      %v3389 = vunpack.c.l.b16 %v3353
      %v3390 = vunpack.c.l.b16 %v3354
      %v3391 = vunpack.c.l.b16 %v3355
      %v3392 = vunpack.c.l.b16 %v3356
      %v3393 = vunpack.c.l.b16 %v3357
      %v3394 = vunpack.c.l.b16 %v3358
      %v3395 = vunpack.c.l.b16 %v3359
      %v3396 = vunpack.c.l.b16 %v3360
      %v3397 = vunpack.c.l.b16 %v3361
      %v3398 = vunpack.c.l.b16 %v3362
      %v3399 = vunpack.c.l.b16 %v3363
      %v3400 = vunpack.c.l.b16 %v3364
      %v3401 = vunpack.c.l.b16 %v3365
      %v3402 = vunpack.c.l.b16 %v3366
      %v3403 = vpack.c.b16 %v3388, %v3387
      %v3404 = vpack.c.b16 %v3390, %v3389
      %v3405 = vpack.c.b16 %v3392, %v3391
      %v3406 = vpack.c.b16 %v3394, %v3393
      %v3407 = vpack.c.b16 %v3396, %v3395
      %v3408 = vpack.c.b16 %v3398, %v3397
      %v3409 = vpack.c.b16 %v3400, %v3399
      %v3410 = vpack.c.b16 %v3402, %v3401
      %3419 = vmatprep.subr.bf16.mxu0 0
      %3420 = vmatpush1.bf16.msra.mxu0 %v3410
      %3421 = vmatprep.subr.bf16.mxu0 0
      %3422 = vmatpush1.bf16.msra.mxu0 %v3409
      %3423 = vmatprep.subr.bf16.mxu0 0
      %3424 = vmatpush1.bf16.msra.mxu0 %v3408
      %3425 = vmatprep.subr.bf16.mxu0 0
      %3426 = vmatpush1.bf16.msra.mxu0 %v3407
      %3427 = vmatprep.subr.bf16.mxu0 0
      %3428 = vmatpush1.bf16.msra.mxu0 %v3406
      %3429 = vmatprep.subr.bf16.mxu0 0
      %3430 = vmatpush1.bf16.msra.mxu0 %v3405
      %3431 = vmatprep.subr.bf16.mxu0 0
      %3432 = vmatpush1.bf16.msra.mxu0 %v3404
      %3433 = vmatprep.subr.bf16.mxu0 0
      %3434 = vmatpush1.bf16.msra.mxu0 %v3403
      %3435 = vmatprep.subr.bf16.mxu0 0
      %3436 = vmatpush2.bf16.msra.mxu0 0
      %3437 = vmatprep.subr.bf16.mxu0 0
      %3438 = vmatpush2.bf16.msra.mxu0 0
      %3439 = vmatprep.subr.bf16.mxu0 0
      %3440 = vmatpush2.bf16.msra.mxu0 0
      %3441 = vmatprep.subr.bf16.mxu0 0
      %3442 = vmatpush2.bf16.msra.mxu0 0
      %3443 = vmatprep.subr.bf16.mxu0 0
      %3444 = vmatpush2.bf16.msra.mxu0 0
      %3445 = vmatprep.subr.bf16.mxu0 0
      %3446 = vmatpush2.bf16.msra.mxu0 0
      %3447 = vmatprep.subr.bf16.mxu0 0
      %3448 = vmatpush2.bf16.msra.mxu0 0
      %3449 = vmatprep.subr.bf16.mxu0 0
      %3450 = vmatpush2.bf16.msra.mxu0 0
      %3451 = vmatprep.mubr.bf16.mxu0 0
      %3452 = vmatmul.mubr.bf16.gmra.mxu0 %v3367
      %v3453 = vpop.f32.mrf.mxu0
      %v3454 = vadd.f32 0.0, %v3453
      %v3455 = vpop.f32.mrf.mxu0
      %v3456 = vpop.f32.mrf.mxu0
      %v3457 = vadd.f32 0.0, %v3456
      %v3458 = vpop.f32.mrf.mxu0
      %3459 = vmatprep.mubr.bf16.mxu0 0
      %3460 = vmatmul.mubr.bf16.gmra.mxu0 %v3368
      %v3461 = vpop.f32.mrf.mxu0
      %v3462 = vadd.f32 0.0, %v3461
      %v3463 = vpop.f32.mrf.mxu0
      %v3464 = vpop.f32.mrf.mxu0
      %v3465 = vpop.f32.mrf.mxu0
      %3466 = vdwg.mxu0
      %v3467 = vadd.f32 %v3347, %v3454
      %v3468 = vadd.f32 %v3348, %v3457
      %v3469 = vadd.f32 %v3349, %v3462
      %v3470 = vld [vmem:[%s2680 + $0x4] sm:$0xc]
      %v3471 = vld [vmem:[%s2680 + $0x8] sm:$0xf]
      %v3472 = vld [vmem:[%s2680 + $0xc] sm:$0xf]
      %v3473 = vld [vmem:[%s2680 + $0x10] sm:$0x3]
      %s3474 = scalar_lea.vmem %s1, 1536
      %v3475 = vld [vmem:[%s3474] sm:$0xf]
      %v3476 = vld [vmem:[%s3474 + $0x4] sm:$0xf]
      %v3477 = vld [vmem:[%s3474 + $0x8] sm:$0xf]
      %v3478 = vld [vmem:[%s3474 + $0xc] sm:$0xf]
      %v3479 = vld [vmem:[%s3474 + $0x10] sm:$0xf]
      %v3480 = vld [vmem:[%s3474 + $0x14] sm:$0xf]
      %v3481 = vld [vmem:[%s3474 + $0x18] sm:$0xf]
      %v3482 = vld [vmem:[%s3474 + $0x1c] sm:$0xf]
      %v3483 = vld [vmem:[%s3474 + $0x20] sm:$0xf]
      %v3484 = vld [vmem:[%s3474 + $0x24] sm:$0xf]
      %v3485 = vld [vmem:[%s3474 + $0x28] sm:$0xf]
      %v3486 = vld [vmem:[%s3474 + $0x2c] sm:$0xf]
      %v3487 = vld [vmem:[%s3474 + $0x30] sm:$0xf]
      %v3488 = vld [vmem:[%s3474 + $0x34] sm:$0xf]
      %v3489 = vld [vmem:[%s3474 + $0x38] sm:$0xf]
      %v3490 = vld [vmem:[%s3474 + $0x3c] sm:$0xf]
      %v3495 = vunpack.c.l.b16 %v3470
      %v3496 = vunpack.c.l.b16 %v3471
      %v3497 = vunpack.c.l.b16 %v3472
      %v3498 = vunpack.c.l.b16 %v3473
      %v3499 = vpack.c.b16 %v3496, %v3495
      %v3500 = vpack.c.b16 %v3498, %v3497
      %v3501 = vrot.slane %v3499, 2
      %v3502 = vrot.slane %v3500, 2
      %v3503 = vsel %vm1115, %v3501, %v3502
      %v3522 = vunpack.c.l.b16 %v3475
      %v3523 = vunpack.c.l.b16 %v3476
      %v3524 = vunpack.c.l.b16 %v3477
      %v3525 = vunpack.c.l.b16 %v3478
      %v3526 = vunpack.c.l.b16 %v3479
      %v3527 = vunpack.c.l.b16 %v3480
      %v3528 = vunpack.c.l.b16 %v3481
      %v3529 = vunpack.c.l.b16 %v3482
      %v3530 = vunpack.c.l.b16 %v3483
      %v3531 = vunpack.c.l.b16 %v3484
      %v3532 = vunpack.c.l.b16 %v3485
      %v3533 = vunpack.c.l.b16 %v3486
      %v3534 = vunpack.c.l.b16 %v3487
      %v3535 = vunpack.c.l.b16 %v3488
      %v3536 = vunpack.c.l.b16 %v3489
      %v3537 = vunpack.c.l.b16 %v3490
      %v3538 = vpack.c.b16 %v3523, %v3522
      %v3539 = vpack.c.b16 %v3525, %v3524
      %v3540 = vpack.c.b16 %v3527, %v3526
      %v3541 = vpack.c.b16 %v3529, %v3528
      %v3542 = vpack.c.b16 %v3531, %v3530
      %v3543 = vpack.c.b16 %v3533, %v3532
      %v3544 = vpack.c.b16 %v3535, %v3534
      %v3545 = vpack.c.b16 %v3537, %v3536
      %3554 = vmatprep.subr.bf16.mxu0 0
      %3555 = vmatpush1.bf16.msra.mxu0 %v3545
      %3556 = vmatprep.subr.bf16.mxu0 0
      %3557 = vmatpush1.bf16.msra.mxu0 %v3544
      %3558 = vmatprep.subr.bf16.mxu0 0
      %3559 = vmatpush1.bf16.msra.mxu0 %v3543
      %3560 = vmatprep.subr.bf16.mxu0 0
      %3561 = vmatpush1.bf16.msra.mxu0 %v3542
      %3562 = vmatprep.subr.bf16.mxu0 0
      %3563 = vmatpush1.bf16.msra.mxu0 %v3541
      %3564 = vmatprep.subr.bf16.mxu0 0
      %3565 = vmatpush1.bf16.msra.mxu0 %v3540
      %3566 = vmatprep.subr.bf16.mxu0 0
      %3567 = vmatpush1.bf16.msra.mxu0 %v3539
      %3568 = vmatprep.subr.bf16.mxu0 0
      %3569 = vmatpush1.bf16.msra.mxu0 %v3538
      %3570 = vmatprep.subr.bf16.mxu0 0
      %3571 = vmatpush2.bf16.msra.mxu0 0
      %3572 = vmatprep.subr.bf16.mxu0 0
      %3573 = vmatpush2.bf16.msra.mxu0 0
      %3574 = vmatprep.subr.bf16.mxu0 0
      %3575 = vmatpush2.bf16.msra.mxu0 0
      %3576 = vmatprep.subr.bf16.mxu0 0
      %3577 = vmatpush2.bf16.msra.mxu0 0
      %3578 = vmatprep.subr.bf16.mxu0 0
      %3579 = vmatpush2.bf16.msra.mxu0 0
      %3580 = vmatprep.subr.bf16.mxu0 0
      %3581 = vmatpush2.bf16.msra.mxu0 0
      %3582 = vmatprep.subr.bf16.mxu0 0
      %3583 = vmatpush2.bf16.msra.mxu0 0
      %3584 = vmatprep.subr.bf16.mxu0 0
      %3585 = vmatpush2.bf16.msra.mxu0 0
      %3586 = vmatprep.mubr.bf16.mxu0 0
      %3587 = vmatmul.mubr.bf16.gmra.mxu0 %v3503
      %v3588 = vpop.f32.mrf.mxu0
      %v3589 = vadd.f32 0.0, %v3588
      %v3590 = vpop.f32.mrf.mxu0
      %v3591 = vpop.f32.mrf.mxu0
      %v3592 = vadd.f32 0.0, %v3591
      %v3593 = vpop.f32.mrf.mxu0
      %3594 = vmatprep.mubr.bf16.mxu0 0
      %3595 = vmatmul.mubr.bf16.gmra.mxu0 %v3502
      %v3596 = vpop.f32.mrf.mxu0
      %v3597 = vadd.f32 0.0, %v3596
      %v3598 = vpop.f32.mrf.mxu0
      %v3599 = vpop.f32.mrf.mxu0
      %v3600 = vpop.f32.mrf.mxu0
      %3601 = vdwg.mxu0
      %v3602 = vadd.f32 %v3467, %v3589
      %v3603 = vadd.f32 %v3468, %v3592
      %v3604 = vadd.f32 %v3469, %v3597
      %v3605 = vld [vmem:[%s2680 + $0x10] sm:$0x7]
      %s3606 = scalar_lea.vmem %s1, 1600
      %v3607 = vld [vmem:[%s3606] sm:$0xf]
      %v3608 = vld [vmem:[%s3606 + $0x4] sm:$0xf]
      %v3609 = vld [vmem:[%s3606 + $0x8] sm:$0xf]
      %v3610 = vld [vmem:[%s3606 + $0xc] sm:$0xf]
      %v3611 = vld [vmem:[%s3606 + $0x10] sm:$0xf]
      %v3612 = vld [vmem:[%s3606 + $0x14] sm:$0xf]
      %v3613 = vld [vmem:[%s3606 + $0x18] sm:$0xf]
      %v3614 = vld [vmem:[%s3606 + $0x1c] sm:$0xf]
      %v3615 = vld [vmem:[%s3606 + $0x20] sm:$0xf]
      %v3616 = vld [vmem:[%s3606 + $0x24] sm:$0xf]
      %v3617 = vld [vmem:[%s3606 + $0x28] sm:$0xf]
      %v3618 = vld [vmem:[%s3606 + $0x2c] sm:$0xf]
      %v3619 = vld [vmem:[%s3606 + $0x30] sm:$0xf]
      %v3620 = vld [vmem:[%s3606 + $0x34] sm:$0xf]
      %v3621 = vld [vmem:[%s3606 + $0x38] sm:$0xf]
      %v3622 = vld [vmem:[%s3606 + $0x3c] sm:$0xf]
      %v3624 = vunpack.c.l.b16 %v3605
      %v3625 = vpack.c.b16 %v3624, %v3497
      %v3627 = vshrl.u32 %v3499, 16
      %v3629 = vrot.slane %v3627, 2
      %v3630 = vshll.u32 %v3499, 16
      %v3632 = vrot.slane %v3630, 3
      %v3633 = vor.u32 %v3629, %v3632
      %v3635 = vshrl.u32 %v3625, 16
      %v3637 = vrot.slane %v3635, 2
      %v3638 = vshll.u32 %v3625, 16
      %v3640 = vrot.slane %v3638, 3
      %v3641 = vor.u32 %v3637, %v3640
      %v3642 = vsel %vm1241, %v3633, %v3641
      %v3661 = vunpack.c.l.b16 %v3607
      %v3662 = vunpack.c.l.b16 %v3608
      %v3663 = vunpack.c.l.b16 %v3609
      %v3664 = vunpack.c.l.b16 %v3610
      %v3665 = vunpack.c.l.b16 %v3611
      %v3666 = vunpack.c.l.b16 %v3612
      %v3667 = vunpack.c.l.b16 %v3613
      %v3668 = vunpack.c.l.b16 %v3614
      %v3669 = vunpack.c.l.b16 %v3615
      %v3670 = vunpack.c.l.b16 %v3616
      %v3671 = vunpack.c.l.b16 %v3617
      %v3672 = vunpack.c.l.b16 %v3618
      %v3673 = vunpack.c.l.b16 %v3619
      %v3674 = vunpack.c.l.b16 %v3620
      %v3675 = vunpack.c.l.b16 %v3621
      %v3676 = vunpack.c.l.b16 %v3622
      %v3677 = vpack.c.b16 %v3662, %v3661
      %v3678 = vpack.c.b16 %v3664, %v3663
      %v3679 = vpack.c.b16 %v3666, %v3665
      %v3680 = vpack.c.b16 %v3668, %v3667
      %v3681 = vpack.c.b16 %v3670, %v3669
      %v3682 = vpack.c.b16 %v3672, %v3671
      %v3683 = vpack.c.b16 %v3674, %v3673
      %v3684 = vpack.c.b16 %v3676, %v3675
      %3693 = vmatprep.subr.bf16.mxu0 0
      %3694 = vmatpush1.bf16.msra.mxu0 %v3684
      %3695 = vmatprep.subr.bf16.mxu0 0
      %3696 = vmatpush1.bf16.msra.mxu0 %v3683
      %3697 = vmatprep.subr.bf16.mxu0 0
      %3698 = vmatpush1.bf16.msra.mxu0 %v3682
      %3699 = vmatprep.subr.bf16.mxu0 0
      %3700 = vmatpush1.bf16.msra.mxu0 %v3681
      %3701 = vmatprep.subr.bf16.mxu0 0
      %3702 = vmatpush1.bf16.msra.mxu0 %v3680
      %3703 = vmatprep.subr.bf16.mxu0 0
      %3704 = vmatpush1.bf16.msra.mxu0 %v3679
      %3705 = vmatprep.subr.bf16.mxu0 0
      %3706 = vmatpush1.bf16.msra.mxu0 %v3678
      %3707 = vmatprep.subr.bf16.mxu0 0
      %3708 = vmatpush1.bf16.msra.mxu0 %v3677
      %3709 = vmatprep.subr.bf16.mxu0 0
      %3710 = vmatpush2.bf16.msra.mxu0 0
      %3711 = vmatprep.subr.bf16.mxu0 0
      %3712 = vmatpush2.bf16.msra.mxu0 0
      %3713 = vmatprep.subr.bf16.mxu0 0
      %3714 = vmatpush2.bf16.msra.mxu0 0
      %3715 = vmatprep.subr.bf16.mxu0 0
      %3716 = vmatpush2.bf16.msra.mxu0 0
      %3717 = vmatprep.subr.bf16.mxu0 0
      %3718 = vmatpush2.bf16.msra.mxu0 0
      %3719 = vmatprep.subr.bf16.mxu0 0
      %3720 = vmatpush2.bf16.msra.mxu0 0
      %3721 = vmatprep.subr.bf16.mxu0 0
      %3722 = vmatpush2.bf16.msra.mxu0 0
      %3723 = vmatprep.subr.bf16.mxu0 0
      %3724 = vmatpush2.bf16.msra.mxu0 0
      %3725 = vmatprep.mubr.bf16.mxu0 0
      %3726 = vmatmul.mubr.bf16.gmra.mxu0 %v3642
      %v3727 = vpop.f32.mrf.mxu0
      %v3728 = vadd.f32 0.0, %v3727
      %v3729 = vpop.f32.mrf.mxu0
      %v3730 = vpop.f32.mrf.mxu0
      %v3731 = vadd.f32 0.0, %v3730
      %v3732 = vpop.f32.mrf.mxu0
      %3733 = vmatprep.mubr.bf16.mxu0 0
      %3734 = vmatmul.mubr.bf16.gmra.mxu0 %v3641
      %v3735 = vpop.f32.mrf.mxu0
      %v3736 = vadd.f32 0.0, %v3735
      %v3737 = vpop.f32.mrf.mxu0
      %v3738 = vpop.f32.mrf.mxu0
      %v3739 = vpop.f32.mrf.mxu0
      %3740 = vdwg.mxu0
      %v3741 = vadd.f32 %v3602, %v3728
      %v3742 = vadd.f32 %v3603, %v3731
      %v3743 = vadd.f32 %v3604, %v3736
      %v3744 = vld [vmem:[%s2680 + $0x4] sm:$0x8]
      %s3745 = scalar_lea.vmem %s1, 1664
      %v3746 = vld [vmem:[%s3745] sm:$0xf]
      %v3747 = vld [vmem:[%s3745 + $0x4] sm:$0xf]
      %v3748 = vld [vmem:[%s3745 + $0x8] sm:$0xf]
      %v3749 = vld [vmem:[%s3745 + $0xc] sm:$0xf]
      %v3750 = vld [vmem:[%s3745 + $0x10] sm:$0xf]
      %v3751 = vld [vmem:[%s3745 + $0x14] sm:$0xf]
      %v3752 = vld [vmem:[%s3745 + $0x18] sm:$0xf]
      %v3753 = vld [vmem:[%s3745 + $0x1c] sm:$0xf]
      %v3754 = vld [vmem:[%s3745 + $0x20] sm:$0xf]
      %v3755 = vld [vmem:[%s3745 + $0x24] sm:$0xf]
      %v3756 = vld [vmem:[%s3745 + $0x28] sm:$0xf]
      %v3757 = vld [vmem:[%s3745 + $0x2c] sm:$0xf]
      %v3758 = vld [vmem:[%s3745 + $0x30] sm:$0xf]
      %v3759 = vld [vmem:[%s3745 + $0x34] sm:$0xf]
      %v3760 = vld [vmem:[%s3745 + $0x38] sm:$0xf]
      %v3761 = vld [vmem:[%s3745 + $0x3c] sm:$0xf]
      %v3763 = vunpack.c.l.b16 %v3744
      %v3764 = vpack.c.b16 %v3496, %v3763
      %v3765 = vrot.slane %v3764, 3
      %v3766 = vrot.slane %v3625, 3
      %v3767 = vsel %vm719, %v3765, %v3766
      %v3786 = vunpack.c.l.b16 %v3746
      %v3787 = vunpack.c.l.b16 %v3747
      %v3788 = vunpack.c.l.b16 %v3748
      %v3789 = vunpack.c.l.b16 %v3749
      %v3790 = vunpack.c.l.b16 %v3750
      %v3791 = vunpack.c.l.b16 %v3751
      %v3792 = vunpack.c.l.b16 %v3752
      %v3793 = vunpack.c.l.b16 %v3753
      %v3794 = vunpack.c.l.b16 %v3754
      %v3795 = vunpack.c.l.b16 %v3755
      %v3796 = vunpack.c.l.b16 %v3756
      %v3797 = vunpack.c.l.b16 %v3757
      %v3798 = vunpack.c.l.b16 %v3758
      %v3799 = vunpack.c.l.b16 %v3759
      %v3800 = vunpack.c.l.b16 %v3760
      %v3801 = vunpack.c.l.b16 %v3761
      %v3802 = vpack.c.b16 %v3787, %v3786
      %v3803 = vpack.c.b16 %v3789, %v3788
      %v3804 = vpack.c.b16 %v3791, %v3790
      %v3805 = vpack.c.b16 %v3793, %v3792
      %v3806 = vpack.c.b16 %v3795, %v3794
      %v3807 = vpack.c.b16 %v3797, %v3796
      %v3808 = vpack.c.b16 %v3799, %v3798
      %v3809 = vpack.c.b16 %v3801, %v3800
      %3818 = vmatprep.subr.bf16.mxu0 0
      %3819 = vmatpush1.bf16.msra.mxu0 %v3809
      %3820 = vmatprep.subr.bf16.mxu0 0
      %3821 = vmatpush1.bf16.msra.mxu0 %v3808
      %3822 = vmatprep.subr.bf16.mxu0 0
      %3823 = vmatpush1.bf16.msra.mxu0 %v3807
      %3824 = vmatprep.subr.bf16.mxu0 0
      %3825 = vmatpush1.bf16.msra.mxu0 %v3806
      %3826 = vmatprep.subr.bf16.mxu0 0
      %3827 = vmatpush1.bf16.msra.mxu0 %v3805
      %3828 = vmatprep.subr.bf16.mxu0 0
      %3829 = vmatpush1.bf16.msra.mxu0 %v3804
      %3830 = vmatprep.subr.bf16.mxu0 0
      %3831 = vmatpush1.bf16.msra.mxu0 %v3803
      %3832 = vmatprep.subr.bf16.mxu0 0
      %3833 = vmatpush1.bf16.msra.mxu0 %v3802
      %3834 = vmatprep.subr.bf16.mxu0 0
      %3835 = vmatpush2.bf16.msra.mxu0 0
      %3836 = vmatprep.subr.bf16.mxu0 0
      %3837 = vmatpush2.bf16.msra.mxu0 0
      %3838 = vmatprep.subr.bf16.mxu0 0
      %3839 = vmatpush2.bf16.msra.mxu0 0
      %3840 = vmatprep.subr.bf16.mxu0 0
      %3841 = vmatpush2.bf16.msra.mxu0 0
      %3842 = vmatprep.subr.bf16.mxu0 0
      %3843 = vmatpush2.bf16.msra.mxu0 0
      %3844 = vmatprep.subr.bf16.mxu0 0
      %3845 = vmatpush2.bf16.msra.mxu0 0
      %3846 = vmatprep.subr.bf16.mxu0 0
      %3847 = vmatpush2.bf16.msra.mxu0 0
      %3848 = vmatprep.subr.bf16.mxu0 0
      %3849 = vmatpush2.bf16.msra.mxu0 0
      %3850 = vmatprep.mubr.bf16.mxu0 0
      %3851 = vmatmul.mubr.bf16.gmra.mxu0 %v3767
      %v3852 = vpop.f32.mrf.mxu0
      %v3853 = vadd.f32 0.0, %v3852
      %v3854 = vpop.f32.mrf.mxu0
      %v3855 = vpop.f32.mrf.mxu0
      %v3856 = vadd.f32 0.0, %v3855
      %v3857 = vpop.f32.mrf.mxu0
      %3858 = vmatprep.mubr.bf16.mxu0 0
      %3859 = vmatmul.mubr.bf16.gmra.mxu0 %v3766
      %v3860 = vpop.f32.mrf.mxu0
      %v3861 = vadd.f32 0.0, %v3860
      %v3862 = vpop.f32.mrf.mxu0
      %v3863 = vpop.f32.mrf.mxu0
      %v3864 = vpop.f32.mrf.mxu0
      %3865 = vdwg.mxu0
      %v3866 = vadd.f32 %v3741, %v3853
      %v3867 = vadd.f32 %v3742, %v3856
      %v3868 = vadd.f32 %v3743, %v3861
      %v3869 = vld [vmem:[%s271] sm:$0xf]
      %v3870 = vld [vmem:[%s271 + $0x4] sm:$0xf]
      %v3871 = vld [vmem:[%s271 + $0x8] sm:$0xf]
      %v3872 = vld [vmem:[%s4] sm:$0x3]
      %v3876 = vunpack.c.l.b16 %v3869
      %v3877 = vunpack.c.l.b16 %v3870
      %v3878 = vunpack.c.l.b16 %v3871
      %v3879 = vpack.c.b16 %v3877, %v3876
      %v3880 = vpack.c.b16 %v3878, %v3878
      %vm3881 = vcmask 31744
      %v3883 = vsel %vm3881, %v3879, 0
      %v3886 = vsel %vm3881, %v3880, 0
      %vm3888 = vcmask 1041408
      %v3890 = vsel %vm3888, %v3872, 0
      %3892 = vmatprep.subr.bf16.mxu0 0
      %3893 = vmatpush1.bf16.msra.mxu0 0
      %3894 = vmatprep.subr.bf16.mxu0 0
      %3895 = vmatpush1.bf16.msra.mxu0 0
      %3896 = vmatprep.subr.bf16.mxu0 0
      %3897 = vmatpush1.bf16.msra.mxu0 0
      %3898 = vmatprep.subr.bf16.mxu0 0
      %3899 = vmatpush1.bf16.msra.mxu0 0
      %3900 = vmatprep.subr.bf16.mxu0 0
      %3901 = vmatpush1.bf16.msra.mxu0 0
      %3902 = vmatprep.subr.bf16.mxu0 0
      %3903 = vmatpush1.bf16.msra.mxu0 0
      %3904 = vmatprep.subr.bf16.mxu0 0
      %3905 = vmatpush1.bf16.msra.mxu0 0
      %3906 = vmatprep.subr.bf16.mxu0 0
      %3907 = vmatpush1.bf16.msra.mxu0 %v3890
      %3908 = vmatprep.subr.bf16.mxu0 0
      %3909 = vmatpush2.bf16.msra.mxu0 0
      %3910 = vmatprep.subr.bf16.mxu0 0
      %3911 = vmatpush2.bf16.msra.mxu0 0
      %3912 = vmatprep.subr.bf16.mxu0 0
      %3913 = vmatpush2.bf16.msra.mxu0 0
      %3914 = vmatprep.subr.bf16.mxu0 0
      %3915 = vmatpush2.bf16.msra.mxu0 0
      %3916 = vmatprep.subr.bf16.mxu0 0
      %3917 = vmatpush2.bf16.msra.mxu0 0
      %3918 = vmatprep.subr.bf16.mxu0 0
      %3919 = vmatpush2.bf16.msra.mxu0 0
      %3920 = vmatprep.subr.bf16.mxu0 0
      %3921 = vmatpush2.bf16.msra.mxu0 0
      %3922 = vmatprep.subr.bf16.mxu0 0
      %3923 = vmatpush2.bf16.msra.mxu0 0
      %3924 = vmatprep.mubr.bf16.mxu0 0
      %3925 = vmatmul.mubr.bf16.gmra.mxu0 %v3883
      %v3926 = vpop.f32.mrf.mxu0
      %v3927 = vadd.f32 0.0, %v3926
      %v3928 = vpop.f32.mrf.mxu0
      %v3929 = vpop.f32.mrf.mxu0
      %v3930 = vadd.f32 0.0, %v3929
      %v3931 = vpop.f32.mrf.mxu0
      %3932 = vmatprep.mubr.bf16.mxu0 0
      %3933 = vmatmul.mubr.bf16.gmra.mxu0 %v3886
      %v3934 = vpop.f32.mrf.mxu0
      %v3935 = vadd.f32 0.0, %v3934
      %v3936 = vpop.f32.mrf.mxu0
      %v3937 = vpop.f32.mrf.mxu0
      %v3938 = vpop.f32.mrf.mxu0
      %3939 = vdwg.mxu0
      %v3940 = vadd.f32 %v3866, %v3927
      %v3941 = vadd.f32 %v3867, %v3930
      %v3942 = vadd.f32 %v3868, %v3935
      %v3943 = vmax.f32 %v3940, 0.0
      %v3944 = vmax.f32 %v3941, 0.0
      %v3945 = vmax.f32 %v3942, 0.0
      %3946 = vst [vmem:[%s280] sm:$0xff] %v3943
      %3947 = vst [vmem:[%s280 + $0x8] sm:$0xff] %v3944
      %3948 = vst [vmem:[%s280 + $0x10] sm:$0xff] %v3945
      %p3949 = scmp.lt.s32.totalorder %s20, 1
      %s3950 = scalar_select %p3949, %s20, 1
      %p3951 = scmp.lt.s32.totalorder %s21, 3
      %s3952 = scalar_select %p3951, %s21, 3
      %s3953 = smul.addr %s3952, 3
      %s3954 = smul.addr %s3950, 12
      %s3955 = sadd.s32 %s3953, %s3954
      %s3956 = smul.addr %s3955, 8
      %s3957 = scalar_lea.vmem %s5, %s3956
      // Predicated region
      $region41: #{basic3d_block_forward.3} parent=39 // pred_check
        %p3958 = pneg %p165
      $region42: #{basic3d_block_forward.3} parent=39 // pred_check_branch
        %3960 = sbr.rel (%p3958) target = $region44
      $region43: #{basic3d_block_forward.3} parent=39 // pred_region
        _
      $region44: #{basic3d_block_forward.3} parent=39 // pred_fallthru
        _
    $region40: #{basic3d_block_forward.3} parent=5 // pred_fallthru
      _
    %p3961 = scmp.le.s32.totalorder 2, %s11
    // Predicated region
    $region45: #{basic3d_block_forward.3} parent=5 // pred_check
      %p3962 = pneg %p3961
    $region46: #{basic3d_block_forward.3} parent=5 // pred_check_branch
      %3964 = sbr.rel (%p3962) target = $region48
    $region47: #{basic3d_block_forward.3} parent=5 // pred_region
      %s3965 = ssub.s32 %s11, 2
      // Predicated region
      $region49: #{basic3d_block_forward.3} parent=47 // pred_check
        %p3966 = pneg %p171
      $region50: #{basic3d_block_forward.3} parent=47 // pred_check_branch
        %3968 = sbr.rel (%p3966) target = $region52
      $region51: #{basic3d_block_forward.3} parent=47 // pred_region
        %p3969 = scmp.lt.s32.totalorder %s22, 1
        %s3970 = scalar_select %p3969, %s22, 1
        %p3971 = scmp.lt.s32.totalorder %s23, 3
        %s3972 = scalar_select %p3971, %s23, 3
        %s3973 = smul.addr %s3972, 3
        %s3974 = smul.addr %s3970, 12
        %s3975 = sadd.s32 %s3973, %s3974
        %s3976 = smul.addr %s3975, 8
        %s3977 = scalar_lea.vmem %s5, %s3976
      $region52: #{basic3d_block_forward.3} parent=47 // pred_fallthru
        _
    $region48: #{basic3d_block_forward.3} parent=5 // pred_fallthru
      _
  $region6: #{basic3d_block_forward.3} parent=0 // loop_footer
    %s15 = sadd.s32 1, %s11
  $region7: #{basic3d_block_forward.3} parent=0 // loop_footer_branch
    %10 = sbr.rel target = $region3
  $region8: #{basic3d_block_forward.3} parent=0 // loop_exit
    _

</llo_original>
